<compile_context>
chip_gen: v5e
topology: v5e:2x2
jax: 0.10.0
libtpu: 0.0.40
codegen_flags: <defaults>
</compile_context>

<pallas_src>
import functools

import jax
import jax.numpy as jnp
from jax.experimental import pallas as pl
from jax.experimental.pallas import tpu as pltpu


def _round_up(x, m):
    return (x + m - 1) // m * m


# ---------------------------------------------------------------------------
# Conv kernel: 3x3 conv (padding=1, stride s) + bias + ReLU for TB samples.
# One MXU GEMM per sample:  acc[Cout, L] = Wp[Cout, 9*Ci] @ Xcat[9*Ci, L]
# ---------------------------------------------------------------------------
def _conv3x3_kernel(x_ref, w_ref, b_ref, o_ref, *, stride, ws, ls_pad, tb):
    # x_ref: (TB, npar, Ci, lin)     parity-split, flattened spatial (+ zero margin)
    # w_ref: (Cout, 9*Ci)            per-offset weights packed along K (kh-major, kw-minor)
    # b_ref: (Cout, 1)               bias (f32)
    # o_ref: (TB, Cout, ls_pad)      lane-dense output in the parity-(0,0) flat geometry
    wmat = w_ref[...]                # hoisted out of the TB loop
    bias = b_ref[...]
    for t in range(tb):              # static unroll over the batch tile
        taps = []
        for kh in range(3):
            for kw in range(3):
                par = (kh % stride) * stride + (kw % stride)
                shift = (kh // stride) * ws + (kw // stride)
                # Static, contiguous lane-slice of the VMEM block -> (Ci, ls_pad).
                taps.append(x_ref[t, par, :, shift:shift + ls_pad])
        xin = jnp.concatenate(taps, axis=0)                      # (9*Ci, ls_pad)
        acc = jnp.dot(wmat, xin, preferred_element_type=jnp.float32)
        o_ref[t] = jnp.maximum(acc + bias, 0.0).astype(o_ref.dtype)


def _pick_tb(n, per_sample_bytes):
    """Batch-tile size: fill a modest VMEM budget, keep >=2 grid steps (megacore)."""
    budget = 3 << 20                                   # ~3 MiB per in+out block set
    tb = max(1, budget // max(per_sample_bytes, 1))
    tb = min(tb, 16)
    if n >= 2:
        tb = min(tb, max(1, n // 2))                   # grid length >= 2
    return max(1, min(tb, n))


def conv3x3_pallas(x, w, b, stride, compute_dtype=jnp.float32):
    """PyTorch-equivalent Conv2d(Ci->Cout, k=3, stride, padding=1) + ReLU.

    x: (N, Ci, H, W)   w: (Cout, Ci, 3, 3)   b: (Cout,)   -> (N, Cout, Ho, Wo)
    """
    N, Ci, H, W = x.shape
    Cout = w.shape[0]
    assert stride in (1, 2), "only strides 1 and 2 are supported"
    if stride == 2:
        assert H % 2 == 0 and W % 2 == 0, "stride-2 parity split needs even H, W"
    Ho = (H - 1) // stride + 1
    Wo = (W - 1) // stride + 1

    # Zero-pad spatial by 1 (conv padding) and, for stride 2, split into the
    # four even/odd parity sub-grids so every (kh,kw) offset becomes a
    # contiguous flat shift inside the kernel.  ~1x data volume in XLA.
    xp = jnp.pad(x.astype(compute_dtype), ((0, 0), (0, 0), (1, 1), (1, 1)))
    if stride == 1:
        subs = [xp]
        hs, ws = H + 2, W + 2
    else:  # stride == 2
        subs = [xp[:, :, p::2, q::2] for p in range(2) for q in range(2)]
        hs, ws = Ho + 1, Wo + 1
    npar = len(subs)
    ls = hs * ws
    margin = (2 // stride) * (ws + 1)                  # max flat shift used in-kernel
    ls_pad = _round_up(ls, 128)                        # lane-dense output width
    lin = _round_up(ls_pad + margin, 128)              # lane-dense input width

    xs = jnp.stack(subs, axis=1).reshape(N, npar, Ci, ls)
    xs = jnp.pad(xs, ((0, 0), (0, 0), (0, 0), (0, lin - ls)))     # zero margin + lane pad

    itemsize = jnp.dtype(compute_dtype).itemsize
    per_sample_bytes = (npar * Ci * lin + Cout * ls_pad) * itemsize
    tb = _pick_tb(N, per_sample_bytes)
    Np = _round_up(N, tb)
    if Np != N:
        xs = jnp.pad(xs, ((0, Np - N), (0, 0), (0, 0), (0, 0)))

    # (Cout, Ci, 3, 3) -> (Cout, 9*Ci), K index = (kh*3 + kw)*Ci + ci (matches concat order).
    wk = jnp.transpose(w, (0, 2, 3, 1)).reshape(Cout, 9 * Ci).astype(compute_dtype)
    bk = b.reshape(Cout, 1).astype(jnp.float32)

    kernel = functools.partial(_conv3x3_kernel, stride=stride, ws=ws, ls_pad=ls_pad, tb=tb)
    cost = pl.CostEstimate(
        flops=2 * N * Cout * 9 * Ci * ls,
        transcendentals=0,
        bytes_accessed=(xs.size + wk.size + Np * Cout * ls_pad) * itemsize,
    )

    out = pl.pallas_call(
        kernel,
        out_shape=jax.ShapeDtypeStruct((Np, Cout, ls_pad), compute_dtype),
        grid=(Np // tb,),
        in_specs=[
            pl.BlockSpec((tb, npar, Ci, lin), lambda n: (n, 0, 0, 0)),
            pl.BlockSpec((Cout, 9 * Ci), lambda n: (0, 0)),      # weights: constant block
            pl.BlockSpec((Cout, 1), lambda n: (0, 0)),           # bias: constant block
        ],
        out_specs=pl.BlockSpec((tb, Cout, ls_pad), lambda n: (n, 0, 0)),
        compiler_params=pltpu.CompilerParams(dimension_semantics=("parallel",)),
        cost_estimate=cost,
    )(xs, wk, bk)

    # Drop batch padding, dead lanes and halo rows/cols (cheap XLA slice + reshape).
    out = out[:N, :, :ls].reshape(N, Cout, hs, ws)[:, :, :Ho, :Wo]
    return out


# ---------------------------------------------------------------------------
# Final Linear layer: y = x @ w + b  (f32 output), feature dim padded to 128
# so the output store is unmasked; rows tiled if the batch is large.
# ---------------------------------------------------------------------------
def _linear_kernel(x_ref, w_ref, b_ref, o_ref):
    acc = jnp.dot(x_ref[...], w_ref[...], preferred_element_type=jnp.float32)
    o_ref[...] = (acc + b_ref[...]).astype(o_ref.dtype)


def pallas_linear(x, w, b, compute_dtype=jnp.float32):
    """x: (M, K), w: (K, F), b: (F,)  ->  f32 (M, F)."""
    M, K = x.shape
    F = w.shape[1]
    Fp = _round_up(F, 128)                          # lane-dense output store
    tm = M if M <= 128 else 128
    Mp = _round_up(M, tm)

    x = x.astype(compute_dtype)
    if Mp != M:
        x = jnp.pad(x, ((0, Mp - M), (0, 0)))
    wp = jnp.pad(w.astype(compute_dtype), ((0, 0), (0, Fp - F)))
    bp = jnp.pad(b.astype(jnp.float32), (0, Fp - F)).reshape(1, Fp)

    out = pl.pallas_call(
        _linear_kernel,
        out_shape=jax.ShapeDtypeStruct((Mp, Fp), jnp.float32),
        grid=(Mp // tm,),
        in_specs=[
            pl.BlockSpec((tm, K), lambda i: (i, 0)),
            pl.BlockSpec((K, Fp), lambda i: (0, 0)),
            pl.BlockSpec((1, Fp), lambda i: (0, 0)),
        ],
        out_specs=pl.BlockSpec((tm, Fp), lambda i: (i, 0)),
        compiler_params=pltpu.CompilerParams(dimension_semantics=("parallel",)),
    )(x, wp, bp)
    return out[:M, :F]


# ---------------------------------------------------------------------------
# Parameter init (deterministic; shapes match ST_DIM_CNN.__init__)
# ---------------------------------------------------------------------------
def init_params(key, input_shape, feature_dim):
    C, H, W = input_shape
    final_conv_size = 64 * (W // 8) * (H // 8)
    keys = jax.random.split(key, 10)
    p = {}
    shapes = [(32, C, 3, 3), (64, 32, 3, 3), (64, 64, 3, 3), (64, 64, 3, 3)]
    for i, s in enumerate(shapes):
        p[f"w{i}"] = 0.1 * jax.random.normal(keys[2 * i], s, dtype=jnp.float32)
        p[f"b{i}"] = 0.01 * jax.random.normal(keys[2 * i + 1], (s[0],), dtype=jnp.float32)
    # Linear: PyTorch weight is (feature_dim, final_conv_size); we store its transpose.
    p["wl"] = 0.1 * jax.random.normal(keys[8], (final_conv_size, feature_dim), dtype=jnp.float32)
    p["bl"] = 0.01 * jax.random.normal(keys[9], (feature_dim,), dtype=jnp.float32)
    return p


# ---------------------------------------------------------------------------
# Forward pass: BarlowTwinsEncoderProcgen.forward(state) == ST_DIM_CNN(state)
# ---------------------------------------------------------------------------
def barlow_twins_encoder_forward(params, x_nchw, compute_dtype=jnp.float32):
    # Keep layer 0 in f32 even on the bf16 throughput path (negligible FLOPs,
    # largest numerical leverage on the final error).
    dt0 = (jnp.float32 if jnp.dtype(compute_dtype) == jnp.dtype(jnp.bfloat16)
           else compute_dtype)
    h = conv3x3_pallas(x_nchw, params["w0"], params["b0"], stride=2, compute_dtype=dt0)
    h = conv3x3_pallas(h,      params["w1"], params["b1"], stride=2, compute_dtype=compute_dtype)
    h = conv3x3_pallas(h,      params["w2"], params["b2"], stride=2, compute_dtype=compute_dtype)
    h = conv3x3_pallas(h,      params["w3"], params["b3"], stride=1, compute_dtype=compute_dtype)
    # nn.Flatten(): channel-major (C,H,W) per sample — matches PyTorch exactly,
    # since the internal layout is already channel-major (no transpose needed).
    N = h.shape[0]
    flat = h.reshape(N, -1)
    return pallas_linear(flat, params["wl"], params["bl"], compute_dtype=compute_dtype)


# ---------------------------------------------------------------------------
# Pure-JAX reference (lax conv) for correctness verification
# ---------------------------------------------------------------------------
def reference_forward(params, x_nchw):
    def conv(x, w, b, stride):
        y = jax.lax.conv_general_dilated(
            x, w, window_strides=(stride, stride), padding=((1, 1), (1, 1)),
            dimension_numbers=("NCHW", "OIHW", "NCHW"))
        return jax.nn.relu(y + b[None, :, None, None])

    h = conv(x_nchw, params["w0"], params["b0"], 2)
    h = conv(h,      params["w1"], params["b1"], 2)
    h = conv(h,      params["w2"], params["b2"], 2)
    h = conv(h,      params["w3"], params["b3"], 1)
    flat = h.reshape(h.shape[0], -1)
    return flat @ params["wl"] + params["bl"]


if __name__ == "__main__":
    # Small shapes consistent with the module: input_shape=(C,H,W)=(4,16,16),
    # batch=2, feature_dim=32  ->  final_conv_size = 64*2*2 = 256.
    input_shape = (4, 16, 16)
    feature_dim = 32
    batch = 2

    key = jax.random.PRNGKey(0)
    k_params, k_x = jax.random.split(key)
    params = init_params(k_params, input_shape, feature_dim)
    x = jax.random.normal(k_x, (batch,) + input_shape, dtype=jnp.float32)

    ref = jax.block_until_ready(reference_forward(params, x))

    # f32 path: tight tolerance against the lax.conv reference.
    fwd_f32 = jax.jit(functools.partial(barlow_twins_encoder_forward,
                                        compute_dtype=jnp.float32))
    out = jax.block_until_ready(fwd_f32(params, x))
    assert out.shape == (batch, feature_dim), out.shape
    assert jnp.allclose(out, ref, atol=1e-4, rtol=1e-4), float(jnp.max(jnp.abs(out - ref)))

    # bf16 MXU path (v6e/v7x throughput mode; layer 0 stays f32): loose tolerance.
    fwd_bf16 = jax.jit(functools.partial(barlow_twins_encoder_forward,
                                         compute_dtype=jnp.bfloat16))
    out_bf = jax.block_until_ready(fwd_bf16(params, x))
    rel = float(jnp.linalg.norm(out_bf - ref) / jnp.linalg.norm(ref))
    assert out_bf.shape == (batch, feature_dim), out_bf.shape
    assert rel < 0.08, rel

    print("KERNEL_OK")
</pallas_src>

<mosaic_0001>
module attributes {stable_mosaic.version = 11 : i64} {
  func.func @_conv3x3_kernel(%arg0: i32, %arg1: memref<1x4x4x256xf32, #tpu.memory_space<vmem>>, %arg2: memref<32x36xf32, #tpu.memory_space<vmem>>, %arg3: memref<32x1xf32, #tpu.memory_space<vmem>>, %arg4: memref<1x32x128xf32, #tpu.memory_space<vmem>>) attributes {dimension_semantics = [#tpu.dimension_semantics<parallel>], iteration_bounds = array<i64: 2>, scalar_prefetch = 0 : i64, scratch_operands = 0 : i64, tpu.core_type = #tpu.core_type<tc>, window_params = [{transform_indices = @transform_0, window_bounds = array<i64: 1, 4, 4, 256>}, {pipeline_mode = #tpu.pipeline_mode<synchronous>, transform_indices = @transform_1, window_bounds = array<i64: 32, 36>}, {pipeline_mode = #tpu.pipeline_mode<synchronous>, transform_indices = @transform_2, window_bounds = array<i64: 32, 1>}, {transform_indices = @transform_3, window_bounds = array<i64: 1, 32, 128>}]} {
    %c0 = arith.constant 0 : index
    %c0_0 = arith.constant 0 : index
    %0 = vector.load %arg2[%c0, %c0_0] : memref<32x36xf32, #tpu.memory_space<vmem>>, vector<32x36xf32>
    %c0_1 = arith.constant 0 : index
    %c0_2 = arith.constant 0 : index
    %1 = vector.load %arg3[%c0_1, %c0_2] : memref<32x1xf32, #tpu.memory_space<vmem>>, vector<32x1xf32>
    %c0_3 = arith.constant 0 : index
    %c0_4 = arith.constant 0 : index
    %c0_5 = arith.constant 0 : index
    %c0_6 = arith.constant 0 : index
    %2 = vector.load %arg1[%c0_3, %c0_4, %c0_5, %c0_6] : memref<1x4x4x256xf32, #tpu.memory_space<vmem>>, vector<1x1x4x128xf32>
    %3 = vector.shape_cast %2 : vector<1x1x4x128xf32> to vector<4x128xf32>
    %c0_7 = arith.constant 0 : index
    %c1 = arith.constant 1 : index
    %c0_8 = arith.constant 0 : index
    %c0_9 = arith.constant 0 : index
    %4 = vector.load %arg1[%c0_7, %c1, %c0_8, %c0_9] : memref<1x4x4x256xf32, #tpu.memory_space<vmem>>, vector<1x1x4x128xf32>
    %5 = vector.shape_cast %4 : vector<1x1x4x128xf32> to vector<4x128xf32>
    %c0_10 = arith.constant 0 : index
    %c0_11 = arith.constant 0 : index
    %c0_12 = arith.constant 0 : index
    %c1_13 = arith.constant 1 : index
    %6 = vector.load %arg1[%c0_10, %c0_11, %c0_12, %c1_13] : memref<1x4x4x256xf32, #tpu.memory_space<vmem>>, vector<1x1x4x128xf32>
    %7 = vector.shape_cast %6 : vector<1x1x4x128xf32> to vector<4x128xf32>
    %c0_14 = arith.constant 0 : index
    %c2 = arith.constant 2 : index
    %c0_15 = arith.constant 0 : index
    %c0_16 = arith.constant 0 : index
    %8 = vector.load %arg1[%c0_14, %c2, %c0_15, %c0_16] : memref<1x4x4x256xf32, #tpu.memory_space<vmem>>, vector<1x1x4x128xf32>
    %9 = vector.shape_cast %8 : vector<1x1x4x128xf32> to vector<4x128xf32>
    %c0_17 = arith.constant 0 : index
    %c3 = arith.constant 3 : index
    %c0_18 = arith.constant 0 : index
    %c0_19 = arith.constant 0 : index
    %10 = vector.load %arg1[%c0_17, %c3, %c0_18, %c0_19] : memref<1x4x4x256xf32, #tpu.memory_space<vmem>>, vector<1x1x4x128xf32>
    %11 = vector.shape_cast %10 : vector<1x1x4x128xf32> to vector<4x128xf32>
    %c0_20 = arith.constant 0 : index
    %c2_21 = arith.constant 2 : index
    %c0_22 = arith.constant 0 : index
    %c1_23 = arith.constant 1 : index
    %12 = vector.load %arg1[%c0_20, %c2_21, %c0_22, %c1_23] : memref<1x4x4x256xf32, #tpu.memory_space<vmem>>, vector<1x1x4x128xf32>
    %13 = vector.shape_cast %12 : vector<1x1x4x128xf32> to vector<4x128xf32>
    %c0_24 = arith.constant 0 : index
    %c0_25 = arith.constant 0 : index
    %c0_26 = arith.constant 0 : index
    %c9 = arith.constant 9 : index
    %14 = vector.load %arg1[%c0_24, %c0_25, %c0_26, %c9] : memref<1x4x4x256xf32, #tpu.memory_space<vmem>>, vector<1x1x4x128xf32>
    %15 = vector.shape_cast %14 : vector<1x1x4x128xf32> to vector<4x128xf32>
    %c0_27 = arith.constant 0 : index
    %c1_28 = arith.constant 1 : index
    %c0_29 = arith.constant 0 : index
    %c9_30 = arith.constant 9 : index
    %16 = vector.load %arg1[%c0_27, %c1_28, %c0_29, %c9_30] : memref<1x4x4x256xf32, #tpu.memory_space<vmem>>, vector<1x1x4x128xf32>
    %17 = vector.shape_cast %16 : vector<1x1x4x128xf32> to vector<4x128xf32>
    %c0_31 = arith.constant 0 : index
    %c0_32 = arith.constant 0 : index
    %c0_33 = arith.constant 0 : index
    %c10 = arith.constant 10 : index
    %18 = vector.load %arg1[%c0_31, %c0_32, %c0_33, %c10] : memref<1x4x4x256xf32, #tpu.memory_space<vmem>>, vector<1x1x4x128xf32>
    %19 = vector.shape_cast %18 : vector<1x1x4x128xf32> to vector<4x128xf32>
    %20 = tpu.concatenate %3, %5, %7, %9, %11, %13, %15, %17, %19 in 0 : vector<4x128xf32>, vector<4x128xf32>, vector<4x128xf32>, vector<4x128xf32>, vector<4x128xf32>, vector<4x128xf32>, vector<4x128xf32>, vector<4x128xf32>, vector<4x128xf32> -> vector<36x128xf32>
    %cst = arith.constant dense<0.000000e+00> : vector<32x128xf32>
    %21 = tpu.matmul %0, %20, %cst {dimension_numbers = #tpu.dot_dimension_numbers<[1], [0], [0], [1], [0, 0, 1, 1], [], []>} : vector<32x36xf32>, vector<36x128xf32>, vector<32x128xf32> -> vector<32x128xf32>
    %22 = vector.broadcast %1 : vector<32x1xf32> to vector<32x128xf32>
    %23 = arith.addf %21, %22 : vector<32x128xf32>
    %cst_34 = arith.constant 0.000000e+00 : f32
    %24 = vector.broadcast %cst_34 : f32 to vector<32x128xf32>
    %25 = arith.maximumf %23, %24 : vector<32x128xf32>
    %c0_35 = arith.constant 0 : index
    %c0_36 = arith.constant 0 : index
    %c0_37 = arith.constant 0 : index
    %26 = vector.load %arg4[%c0_35, %c0_36, %c0_37] : memref<1x32x128xf32, #tpu.memory_space<vmem>>, vector<1x32x128xf32>
    %27 = vector.shape_cast %26 : vector<1x32x128xf32> to vector<32x128xf32>
    %28 = vector.shape_cast %25 : vector<32x128xf32> to vector<1x32x128xf32>
    tpu.vector_store %arg4[%c0_35, %c0_36, %c0_37], %28 {strides = array<i32>} : memref<1x32x128xf32, #tpu.memory_space<vmem>>, vector<1x32x128xf32>,
    return
  }
  func.func @transform_0(%arg0: i32) -> (i32, i32, i32, i32) {
    %c0_i32 = arith.constant 0 : i32
    %c0_i32_0 = arith.constant 0 : i32
    %c0_i32_1 = arith.constant 0 : i32
    %c0_i32_2 = arith.constant 0 : i32
    return %arg0, %c0_i32, %c0_i32_0, %c0_i32_1 : i32, i32, i32, i32
  }
  func.func @transform_1(%arg0: i32) -> (i32, i32) {
    %c0_i32 = arith.constant 0 : i32
    %c0_i32_0 = arith.constant 0 : i32
    %c0_i32_1 = arith.constant 0 : i32
    return %c0_i32, %c0_i32_0 : i32, i32
  }
  func.func @transform_2(%arg0: i32) -> (i32, i32) {
    %c0_i32 = arith.constant 0 : i32
    %c0_i32_0 = arith.constant 0 : i32
    %c0_i32_1 = arith.constant 0 : i32
    return %c0_i32, %c0_i32_0 : i32, i32
  }
  func.func @transform_3(%arg0: i32) -> (i32, i32, i32) {
    %c0_i32 = arith.constant 0 : i32
    %c0_i32_0 = arith.constant 0 : i32
    %c0_i32_1 = arith.constant 0 : i32
    return %arg0, %c0_i32, %c0_i32_0 : i32, i32, i32
  }
}

module attributes {stable_mosaic.version = 11 : i64} {
  func.func @_conv3x3_kernel(%arg0: i32, %arg1: memref<1x4x32x256xf32, #tpu.memory_space<vmem>>, %arg2: memref<64x288xf32, #tpu.memory_space<vmem>>, %arg3: memref<64x1xf32, #tpu.memory_space<vmem>>, %arg4: memref<1x64x128xf32, #tpu.memory_space<vmem>>) attributes {dimension_semantics = [#tpu.dimension_semantics<parallel>], iteration_bounds = array<i64: 2>, scalar_prefetch = 0 : i64, scratch_operands = 0 : i64, tpu.core_type = #tpu.core_type<tc>, window_params = [{transform_indices = @transform_0, window_bounds = array<i64: 1, 4, 32, 256>}, {pipeline_mode = #tpu.pipeline_mode<synchronous>, transform_indices = @transform_1, window_bounds = array<i64: 64, 288>}, {pipeline_mode = #tpu.pipeline_mode<synchronous>, transform_indices = @transform_2, window_bounds = array<i64: 64, 1>}, {transform_indices = @transform_3, window_bounds = array<i64: 1, 64, 128>}]} {
    %c0 = arith.constant 0 : index
    %c0_0 = arith.constant 0 : index
    %0 = vector.load %arg2[%c0, %c0_0] : memref<64x288xf32, #tpu.memory_space<vmem>>, vector<64x288xf32>
    %c0_1 = arith.constant 0 : index
    %c0_2 = arith.constant 0 : index
    %1 = vector.load %arg3[%c0_1, %c0_2] : memref<64x1xf32, #tpu.memory_space<vmem>>, vector<64x1xf32>
    %c0_3 = arith.constant 0 : index
    %c0_4 = arith.constant 0 : index
    %c0_5 = arith.constant 0 : index
    %c0_6 = arith.constant 0 : index
    %2 = vector.load %arg1[%c0_3, %c0_4, %c0_5, %c0_6] : memref<1x4x32x256xf32, #tpu.memory_space<vmem>>, vector<1x1x32x128xf32>
    %3 = vector.shape_cast %2 : vector<1x1x32x128xf32> to vector<32x128xf32>
    %c0_7 = arith.constant 0 : index
    %c1 = arith.constant 1 : index
    %c0_8 = arith.constant 0 : index
    %c0_9 = arith.constant 0 : index
    %4 = vector.load %arg1[%c0_7, %c1, %c0_8, %c0_9] : memref<1x4x32x256xf32, #tpu.memory_space<vmem>>, vector<1x1x32x128xf32>
    %5 = vector.shape_cast %4 : vector<1x1x32x128xf32> to vector<32x128xf32>
    %c0_10 = arith.constant 0 : index
    %c0_11 = arith.constant 0 : index
    %c0_12 = arith.constant 0 : index
    %c1_13 = arith.constant 1 : index
    %6 = vector.load %arg1[%c0_10, %c0_11, %c0_12, %c1_13] : memref<1x4x32x256xf32, #tpu.memory_space<vmem>>, vector<1x1x32x128xf32>
    %7 = vector.shape_cast %6 : vector<1x1x32x128xf32> to vector<32x128xf32>
    %c0_14 = arith.constant 0 : index
    %c2 = arith.constant 2 : index
    %c0_15 = arith.constant 0 : index
    %c0_16 = arith.constant 0 : index
    %8 = vector.load %arg1[%c0_14, %c2, %c0_15, %c0_16] : memref<1x4x32x256xf32, #tpu.memory_space<vmem>>, vector<1x1x32x128xf32>
    %9 = vector.shape_cast %8 : vector<1x1x32x128xf32> to vector<32x128xf32>
    %c0_17 = arith.constant 0 : index
    %c3 = arith.constant 3 : index
    %c0_18 = arith.constant 0 : index
    %c0_19 = arith.constant 0 : index
    %10 = vector.load %arg1[%c0_17, %c3, %c0_18, %c0_19] : memref<1x4x32x256xf32, #tpu.memory_space<vmem>>, vector<1x1x32x128xf32>
    %11 = vector.shape_cast %10 : vector<1x1x32x128xf32> to vector<32x128xf32>
    %c0_20 = arith.constant 0 : index
    %c2_21 = arith.constant 2 : index
    %c0_22 = arith.constant 0 : index
    %c1_23 = arith.constant 1 : index
    %12 = vector.load %arg1[%c0_20, %c2_21, %c0_22, %c1_23] : memref<1x4x32x256xf32, #tpu.memory_space<vmem>>, vector<1x1x32x128xf32>
    %13 = vector.shape_cast %12 : vector<1x1x32x128xf32> to vector<32x128xf32>
    %c0_24 = arith.constant 0 : index
    %c0_25 = arith.constant 0 : index
    %c0_26 = arith.constant 0 : index
    %c5 = arith.constant 5 : index
    %14 = vector.load %arg1[%c0_24, %c0_25, %c0_26, %c5] : memref<1x4x32x256xf32, #tpu.memory_space<vmem>>, vector<1x1x32x128xf32>
    %15 = vector.shape_cast %14 : vector<1x1x32x128xf32> to vector<32x128xf32>
    %c0_27 = arith.constant 0 : index
    %c1_28 = arith.constant 1 : index
    %c0_29 = arith.constant 0 : index
    %c5_30 = arith.constant 5 : index
    %16 = vector.load %arg1[%c0_27, %c1_28, %c0_29, %c5_30] : memref<1x4x32x256xf32, #tpu.memory_space<vmem>>, vector<1x1x32x128xf32>
    %17 = vector.shape_cast %16 : vector<1x1x32x128xf32> to vector<32x128xf32>
    %c0_31 = arith.constant 0 : index
    %c0_32 = arith.constant 0 : index
    %c0_33 = arith.constant 0 : index
    %c6 = arith.constant 6 : index
    %18 = vector.load %arg1[%c0_31, %c0_32, %c0_33, %c6] : memref<1x4x32x256xf32, #tpu.memory_space<vmem>>, vector<1x1x32x128xf32>
    %19 = vector.shape_cast %18 : vector<1x1x32x128xf32> to vector<32x128xf32>
    %20 = tpu.concatenate %3, %5, %7, %9, %11, %13, %15, %17, %19 in 0 : vector<32x128xf32>, vector<32x128xf32>, vector<32x128xf32>, vector<32x128xf32>, vector<32x128xf32>, vector<32x128xf32>, vector<32x128xf32>, vector<32x128xf32>, vector<32x128xf32> -> vector<288x128xf32>
    %cst = arith.constant dense<0.000000e+00> : vector<64x128xf32>
    %21 = tpu.matmul %0, %20, %cst {dimension_numbers = #tpu.dot_dimension_numbers<[1], [0], [0], [1], [0, 0, 1, 1], [], []>} : vector<64x288xf32>, vector<288x128xf32>, vector<64x128xf32> -> vector<64x128xf32>
    %22 = vector.broadcast %1 : vector<64x1xf32> to vector<64x128xf32>
    %23 = arith.addf %21, %22 : vector<64x128xf32>
    %cst_34 = arith.constant 0.000000e+00 : f32
    %24 = vector.broadcast %cst_34 : f32 to vector<64x128xf32>
    %25 = arith.maximumf %23, %24 : vector<64x128xf32>
    %c0_35 = arith.constant 0 : index
    %c0_36 = arith.constant 0 : index
    %c0_37 = arith.constant 0 : index
    %26 = vector.load %arg4[%c0_35, %c0_36, %c0_37] : memref<1x64x128xf32, #tpu.memory_space<vmem>>, vector<1x64x128xf32>
    %27 = vector.shape_cast %26 : vector<1x64x128xf32> to vector<64x128xf32>
    %28 = vector.shape_cast %25 : vector<64x128xf32> to vector<1x64x128xf32>
    tpu.vector_store %arg4[%c0_35, %c0_36, %c0_37], %28 {strides = array<i32>} : memref<1x64x128xf32, #tpu.memory_space<vmem>>, vector<1x64x128xf32>,
    return
  }
  func.func @transform_0(%arg0: i32) -> (i32, i32, i32, i32) {
    %c0_i32 = arith.constant 0 : i32
    %c0_i32_0 = arith.constant 0 : i32
    %c0_i32_1 = arith.constant 0 : i32
    %c0_i32_2 = arith.constant 0 : i32
    return %arg0, %c0_i32, %c0_i32_0, %c0_i32_1 : i32, i32, i32, i32
  }
  func.func @transform_1(%arg0: i32) -> (i32, i32) {
    %c0_i32 = arith.constant 0 : i32
    %c0_i32_0 = arith.constant 0 : i32
    %c0_i32_1 = arith.constant 0 : i32
    return %c0_i32, %c0_i32_0 : i32, i32
  }
  func.func @transform_2(%arg0: i32) -> (i32, i32) {
    %c0_i32 = arith.constant 0 : i32
    %c0_i32_0 = arith.constant 0 : i32
    %c0_i32_1 = arith.constant 0 : i32
    return %c0_i32, %c0_i32_0 : i32, i32
  }
  func.func @transform_3(%arg0: i32) -> (i32, i32, i32) {
    %c0_i32 = arith.constant 0 : i32
    %c0_i32_0 = arith.constant 0 : i32
    %c0_i32_1 = arith.constant 0 : i32
    return %arg0, %c0_i32, %c0_i32_0 : i32, i32, i32
  }
}

module attributes {stable_mosaic.version = 11 : i64} {
  func.func @_conv3x3_kernel(%arg0: i32, %arg1: memref<1x4x64x256xf32, #tpu.memory_space<vmem>>, %arg2: memref<64x576xf32, #tpu.memory_space<vmem>>, %arg3: memref<64x1xf32, #tpu.memory_space<vmem>>, %arg4: memref<1x64x128xf32, #tpu.memory_space<vmem>>) attributes {dimension_semantics = [#tpu.dimension_semantics<parallel>], iteration_bounds = array<i64: 2>, scalar_prefetch = 0 : i64, scratch_operands = 0 : i64, tpu.core_type = #tpu.core_type<tc>, window_params = [{transform_indices = @transform_0, window_bounds = array<i64: 1, 4, 64, 256>}, {pipeline_mode = #tpu.pipeline_mode<synchronous>, transform_indices = @transform_1, window_bounds = array<i64: 64, 576>}, {pipeline_mode = #tpu.pipeline_mode<synchronous>, transform_indices = @transform_2, window_bounds = array<i64: 64, 1>}, {transform_indices = @transform_3, window_bounds = array<i64: 1, 64, 128>}]} {
    %c0 = arith.constant 0 : index
    %c0_0 = arith.constant 0 : index
    %0 = vector.load %arg2[%c0, %c0_0] : memref<64x576xf32, #tpu.memory_space<vmem>>, vector<64x576xf32>
    %c0_1 = arith.constant 0 : index
    %c0_2 = arith.constant 0 : index
    %1 = vector.load %arg3[%c0_1, %c0_2] : memref<64x1xf32, #tpu.memory_space<vmem>>, vector<64x1xf32>
    %c0_3 = arith.constant 0 : index
    %c0_4 = arith.constant 0 : index
    %c0_5 = arith.constant 0 : index
    %c0_6 = arith.constant 0 : index
    %2 = vector.load %arg1[%c0_3, %c0_4, %c0_5, %c0_6] : memref<1x4x64x256xf32, #tpu.memory_space<vmem>>, vector<1x1x64x128xf32>
    %3 = vector.shape_cast %2 : vector<1x1x64x128xf32> to vector<64x128xf32>
    %c0_7 = arith.constant 0 : index
    %c1 = arith.constant 1 : index
    %c0_8 = arith.constant 0 : index
    %c0_9 = arith.constant 0 : index
    %4 = vector.load %arg1[%c0_7, %c1, %c0_8, %c0_9] : memref<1x4x64x256xf32, #tpu.memory_space<vmem>>, vector<1x1x64x128xf32>
    %5 = vector.shape_cast %4 : vector<1x1x64x128xf32> to vector<64x128xf32>
    %c0_10 = arith.constant 0 : index
    %c0_11 = arith.constant 0 : index
    %c0_12 = arith.constant 0 : index
    %c1_13 = arith.constant 1 : index
    %6 = vector.load %arg1[%c0_10, %c0_11, %c0_12, %c1_13] : memref<1x4x64x256xf32, #tpu.memory_space<vmem>>, vector<1x1x64x128xf32>
    %7 = vector.shape_cast %6 : vector<1x1x64x128xf32> to vector<64x128xf32>
    %c0_14 = arith.constant 0 : index
    %c2 = arith.constant 2 : index
    %c0_15 = arith.constant 0 : index
    %c0_16 = arith.constant 0 : index
    %8 = vector.load %arg1[%c0_14, %c2, %c0_15, %c0_16] : memref<1x4x64x256xf32, #tpu.memory_space<vmem>>, vector<1x1x64x128xf32>
    %9 = vector.shape_cast %8 : vector<1x1x64x128xf32> to vector<64x128xf32>
    %c0_17 = arith.constant 0 : index
    %c3 = arith.constant 3 : index
    %c0_18 = arith.constant 0 : index
    %c0_19 = arith.constant 0 : index
    %10 = vector.load %arg1[%c0_17, %c3, %c0_18, %c0_19] : memref<1x4x64x256xf32, #tpu.memory_space<vmem>>, vector<1x1x64x128xf32>
    %11 = vector.shape_cast %10 : vector<1x1x64x128xf32> to vector<64x128xf32>
    %c0_20 = arith.constant 0 : index
    %c2_21 = arith.constant 2 : index
    %c0_22 = arith.constant 0 : index
    %c1_23 = arith.constant 1 : index
    %12 = vector.load %arg1[%c0_20, %c2_21, %c0_22, %c1_23] : memref<1x4x64x256xf32, #tpu.memory_space<vmem>>, vector<1x1x64x128xf32>
    %13 = vector.shape_cast %12 : vector<1x1x64x128xf32> to vector<64x128xf32>
    %c0_24 = arith.constant 0 : index
    %c0_25 = arith.constant 0 : index
    %c0_26 = arith.constant 0 : index
    %c3_27 = arith.constant 3 : index
    %14 = vector.load %arg1[%c0_24, %c0_25, %c0_26, %c3_27] : memref<1x4x64x256xf32, #tpu.memory_space<vmem>>, vector<1x1x64x128xf32>
    %15 = vector.shape_cast %14 : vector<1x1x64x128xf32> to vector<64x128xf32>
    %c0_28 = arith.constant 0 : index
    %c1_29 = arith.constant 1 : index
    %c0_30 = arith.constant 0 : index
    %c3_31 = arith.constant 3 : index
    %16 = vector.load %arg1[%c0_28, %c1_29, %c0_30, %c3_31] : memref<1x4x64x256xf32, #tpu.memory_space<vmem>>, vector<1x1x64x128xf32>
    %17 = vector.shape_cast %16 : vector<1x1x64x128xf32> to vector<64x128xf32>
    %c0_32 = arith.constant 0 : index
    %c0_33 = arith.constant 0 : index
    %c0_34 = arith.constant 0 : index
    %c4 = arith.constant 4 : index
    %18 = vector.load %arg1[%c0_32, %c0_33, %c0_34, %c4] : memref<1x4x64x256xf32, #tpu.memory_space<vmem>>, vector<1x1x64x128xf32>
    %19 = vector.shape_cast %18 : vector<1x1x64x128xf32> to vector<64x128xf32>
    %20 = tpu.concatenate %3, %5, %7, %9, %11, %13, %15, %17, %19 in 0 : vector<64x128xf32>, vector<64x128xf32>, vector<64x128xf32>, vector<64x128xf32>, vector<64x128xf32>, vector<64x128xf32>, vector<64x128xf32>, vector<64x128xf32>, vector<64x128xf32> -> vector<576x128xf32>
    %cst = arith.constant dense<0.000000e+00> : vector<64x128xf32>
    %21 = tpu.matmul %0, %20, %cst {dimension_numbers = #tpu.dot_dimension_numbers<[1], [0], [0], [1], [0, 0, 1, 1], [], []>} : vector<64x576xf32>, vector<576x128xf32>, vector<64x128xf32> -> vector<64x128xf32>
    %22 = vector.broadcast %1 : vector<64x1xf32> to vector<64x128xf32>
    %23 = arith.addf %21, %22 : vector<64x128xf32>
    %cst_35 = arith.constant 0.000000e+00 : f32
    %24 = vector.broadcast %cst_35 : f32 to vector<64x128xf32>
    %25 = arith.maximumf %23, %24 : vector<64x128xf32>
    %c0_36 = arith.constant 0 : index
    %c0_37 = arith.constant 0 : index
    %c0_38 = arith.constant 0 : index
    %26 = vector.load %arg4[%c0_36, %c0_37, %c0_38] : memref<1x64x128xf32, #tpu.memory_space<vmem>>, vector<1x64x128xf32>
    %27 = vector.shape_cast %26 : vector<1x64x128xf32> to vector<64x128xf32>
    %28 = vector.shape_cast %25 : vector<64x128xf32> to vector<1x64x128xf32>
    tpu.vector_store %arg4[%c0_36, %c0_37, %c0_38], %28 {strides = array<i32>} : memref<1x64x128xf32, #tpu.memory_space<vmem>>, vector<1x64x128xf32>,
    return
  }
  func.func @transform_0(%arg0: i32) -> (i32, i32, i32, i32) {
    %c0_i32 = arith.constant 0 : i32
    %c0_i32_0 = arith.constant 0 : i32
    %c0_i32_1 = arith.constant 0 : i32
    %c0_i32_2 = arith.constant 0 : i32
    return %arg0, %c0_i32, %c0_i32_0, %c0_i32_1 : i32, i32, i32, i32
  }
  func.func @transform_1(%arg0: i32) -> (i32, i32) {
    %c0_i32 = arith.constant 0 : i32
    %c0_i32_0 = arith.constant 0 : i32
    %c0_i32_1 = arith.constant 0 : i32
    return %c0_i32, %c0_i32_0 : i32, i32
  }
  func.func @transform_2(%arg0: i32) -> (i32, i32) {
    %c0_i32 = arith.constant 0 : i32
    %c0_i32_0 = arith.constant 0 : i32
    %c0_i32_1 = arith.constant 0 : i32
    return %c0_i32, %c0_i32_0 : i32, i32
  }
  func.func @transform_3(%arg0: i32) -> (i32, i32, i32) {
    %c0_i32 = arith.constant 0 : i32
    %c0_i32_0 = arith.constant 0 : i32
    %c0_i32_1 = arith.constant 0 : i32
    return %arg0, %c0_i32, %c0_i32_0 : i32, i32, i32
  }
}

module attributes {stable_mosaic.version = 11 : i64} {
  func.func @_conv3x3_kernel(%arg0: i32, %arg1: memref<1x1x64x256xf32, #tpu.memory_space<vmem>>, %arg2: memref<64x576xf32, #tpu.memory_space<vmem>>, %arg3: memref<64x1xf32, #tpu.memory_space<vmem>>, %arg4: memref<1x64x128xf32, #tpu.memory_space<vmem>>) attributes {dimension_semantics = [#tpu.dimension_semantics<parallel>], iteration_bounds = array<i64: 2>, scalar_prefetch = 0 : i64, scratch_operands = 0 : i64, tpu.core_type = #tpu.core_type<tc>, window_params = [{transform_indices = @transform_0, window_bounds = array<i64: 1, 1, 64, 256>}, {pipeline_mode = #tpu.pipeline_mode<synchronous>, transform_indices = @transform_1, window_bounds = array<i64: 64, 576>}, {pipeline_mode = #tpu.pipeline_mode<synchronous>, transform_indices = @transform_2, window_bounds = array<i64: 64, 1>}, {transform_indices = @transform_3, window_bounds = array<i64: 1, 64, 128>}]} {
    %c0 = arith.constant 0 : index
    %c0_0 = arith.constant 0 : index
    %0 = vector.load %arg2[%c0, %c0_0] : memref<64x576xf32, #tpu.memory_space<vmem>>, vector<64x576xf32>
    %c0_1 = arith.constant 0 : index
    %c0_2 = arith.constant 0 : index
    %1 = vector.load %arg3[%c0_1, %c0_2] : memref<64x1xf32, #tpu.memory_space<vmem>>, vector<64x1xf32>
    %c0_3 = arith.constant 0 : index
    %c0_4 = arith.constant 0 : index
    %c0_5 = arith.constant 0 : index
    %c0_6 = arith.constant 0 : index
    %2 = vector.load %arg1[%c0_3, %c0_4, %c0_5, %c0_6] : memref<1x1x64x256xf32, #tpu.memory_space<vmem>>, vector<1x1x64x128xf32>
    %3 = vector.shape_cast %2 : vector<1x1x64x128xf32> to vector<64x128xf32>
    %c0_7 = arith.constant 0 : index
    %c0_8 = arith.constant 0 : index
    %c0_9 = arith.constant 0 : index
    %c1 = arith.constant 1 : index
    %4 = vector.load %arg1[%c0_7, %c0_8, %c0_9, %c1] : memref<1x1x64x256xf32, #tpu.memory_space<vmem>>, vector<1x1x64x128xf32>
    %5 = vector.shape_cast %4 : vector<1x1x64x128xf32> to vector<64x128xf32>
    %c0_10 = arith.constant 0 : index
    %c0_11 = arith.constant 0 : index
    %c0_12 = arith.constant 0 : index
    %c2 = arith.constant 2 : index
    %6 = vector.load %arg1[%c0_10, %c0_11, %c0_12, %c2] : memref<1x1x64x256xf32, #tpu.memory_space<vmem>>, vector<1x1x64x128xf32>
    %7 = vector.shape_cast %6 : vector<1x1x64x128xf32> to vector<64x128xf32>
    %c0_13 = arith.constant 0 : index
    %c0_14 = arith.constant 0 : index
    %c0_15 = arith.constant 0 : index
    %c4 = arith.constant 4 : index
    %8 = vector.load %arg1[%c0_13, %c0_14, %c0_15, %c4] : memref<1x1x64x256xf32, #tpu.memory_space<vmem>>, vector<1x1x64x128xf32>
    %9 = vector.shape_cast %8 : vector<1x1x64x128xf32> to vector<64x128xf32>
    %c0_16 = arith.constant 0 : index
    %c0_17 = arith.constant 0 : index
    %c0_18 = arith.constant 0 : index
    %c5 = arith.constant 5 : index
    %10 = vector.load %arg1[%c0_16, %c0_17, %c0_18, %c5] : memref<1x1x64x256xf32, #tpu.memory_space<vmem>>, vector<1x1x64x128xf32>
    %11 = vector.shape_cast %10 : vector<1x1x64x128xf32> to vector<64x128xf32>
    %c0_19 = arith.constant 0 : index
    %c0_20 = arith.constant 0 : index
    %c0_21 = arith.constant 0 : index
    %c6 = arith.constant 6 : index
    %12 = vector.load %arg1[%c0_19, %c0_20, %c0_21, %c6] : memref<1x1x64x256xf32, #tpu.memory_space<vmem>>, vector<1x1x64x128xf32>
    %13 = vector.shape_cast %12 : vector<1x1x64x128xf32> to vector<64x128xf32>
    %c0_22 = arith.constant 0 : index
    %c0_23 = arith.constant 0 : index
    %c0_24 = arith.constant 0 : index
    %c8 = arith.constant 8 : index
    %14 = vector.load %arg1[%c0_22, %c0_23, %c0_24, %c8] : memref<1x1x64x256xf32, #tpu.memory_space<vmem>>, vector<1x1x64x128xf32>
    %15 = vector.shape_cast %14 : vector<1x1x64x128xf32> to vector<64x128xf32>
    %c0_25 = arith.constant 0 : index
    %c0_26 = arith.constant 0 : index
    %c0_27 = arith.constant 0 : index
    %c9 = arith.constant 9 : index
    %16 = vector.load %arg1[%c0_25, %c0_26, %c0_27, %c9] : memref<1x1x64x256xf32, #tpu.memory_space<vmem>>, vector<1x1x64x128xf32>
    %17 = vector.shape_cast %16 : vector<1x1x64x128xf32> to vector<64x128xf32>
    %c0_28 = arith.constant 0 : index
    %c0_29 = arith.constant 0 : index
    %c0_30 = arith.constant 0 : index
    %c10 = arith.constant 10 : index
    %18 = vector.load %arg1[%c0_28, %c0_29, %c0_30, %c10] : memref<1x1x64x256xf32, #tpu.memory_space<vmem>>, vector<1x1x64x128xf32>
    %19 = vector.shape_cast %18 : vector<1x1x64x128xf32> to vector<64x128xf32>
    %20 = tpu.concatenate %3, %5, %7, %9, %11, %13, %15, %17, %19 in 0 : vector<64x128xf32>, vector<64x128xf32>, vector<64x128xf32>, vector<64x128xf32>, vector<64x128xf32>, vector<64x128xf32>, vector<64x128xf32>, vector<64x128xf32>, vector<64x128xf32> -> vector<576x128xf32>
    %cst = arith.constant dense<0.000000e+00> : vector<64x128xf32>
    %21 = tpu.matmul %0, %20, %cst {dimension_numbers = #tpu.dot_dimension_numbers<[1], [0], [0], [1], [0, 0, 1, 1], [], []>} : vector<64x576xf32>, vector<576x128xf32>, vector<64x128xf32> -> vector<64x128xf32>
    %22 = vector.broadcast %1 : vector<64x1xf32> to vector<64x128xf32>
    %23 = arith.addf %21, %22 : vector<64x128xf32>
    %cst_31 = arith.constant 0.000000e+00 : f32
    %24 = vector.broadcast %cst_31 : f32 to vector<64x128xf32>
    %25 = arith.maximumf %23, %24 : vector<64x128xf32>
    %c0_32 = arith.constant 0 : index
    %c0_33 = arith.constant 0 : index
    %c0_34 = arith.constant 0 : index
    %26 = vector.load %arg4[%c0_32, %c0_33, %c0_34] : memref<1x64x128xf32, #tpu.memory_space<vmem>>, vector<1x64x128xf32>
    %27 = vector.shape_cast %26 : vector<1x64x128xf32> to vector<64x128xf32>
    %28 = vector.shape_cast %25 : vector<64x128xf32> to vector<1x64x128xf32>
    tpu.vector_store %arg4[%c0_32, %c0_33, %c0_34], %28 {strides = array<i32>} : memref<1x64x128xf32, #tpu.memory_space<vmem>>, vector<1x64x128xf32>,
    return
  }
  func.func @transform_0(%arg0: i32) -> (i32, i32, i32, i32) {
    %c0_i32 = arith.constant 0 : i32
    %c0_i32_0 = arith.constant 0 : i32
    %c0_i32_1 = arith.constant 0 : i32
    %c0_i32_2 = arith.constant 0 : i32
    return %arg0, %c0_i32, %c0_i32_0, %c0_i32_1 : i32, i32, i32, i32
  }
  func.func @transform_1(%arg0: i32) -> (i32, i32) {
    %c0_i32 = arith.constant 0 : i32
    %c0_i32_0 = arith.constant 0 : i32
    %c0_i32_1 = arith.constant 0 : i32
    return %c0_i32, %c0_i32_0 : i32, i32
  }
  func.func @transform_2(%arg0: i32) -> (i32, i32) {
    %c0_i32 = arith.constant 0 : i32
    %c0_i32_0 = arith.constant 0 : i32
    %c0_i32_1 = arith.constant 0 : i32
    return %c0_i32, %c0_i32_0 : i32, i32
  }
  func.func @transform_3(%arg0: i32) -> (i32, i32, i32) {
    %c0_i32 = arith.constant 0 : i32
    %c0_i32_0 = arith.constant 0 : i32
    %c0_i32_1 = arith.constant 0 : i32
    return %arg0, %c0_i32, %c0_i32_0 : i32, i32, i32
  }
}

module attributes {stable_mosaic.version = 11 : i64} {
  func.func @_linear_kernel(%arg0: i32, %arg1: memref<2x256xf32, #tpu.memory_space<vmem>>, %arg2: memref<256x128xf32, #tpu.memory_space<vmem>>, %arg3: memref<1x128xf32, #tpu.memory_space<vmem>>, %arg4: memref<2x128xf32, #tpu.memory_space<vmem>>) attributes {dimension_semantics = [#tpu.dimension_semantics<parallel>], iteration_bounds = array<i64: 1>, scalar_prefetch = 0 : i64, scratch_operands = 0 : i64, tpu.core_type = #tpu.core_type<tc>, window_params = [{transform_indices = @transform_0, window_bounds = array<i64: 2, 256>}, {pipeline_mode = #tpu.pipeline_mode<synchronous>, transform_indices = @transform_1, window_bounds = array<i64: 256, 128>}, {pipeline_mode = #tpu.pipeline_mode<synchronous>, transform_indices = @transform_2, window_bounds = array<i64: 1, 128>}, {transform_indices = @transform_3, window_bounds = array<i64: 2, 128>}]} {
    %c0 = arith.constant 0 : index
    %c0_0 = arith.constant 0 : index
    %0 = vector.load %arg1[%c0, %c0_0] : memref<2x256xf32, #tpu.memory_space<vmem>>, vector<2x256xf32>
    %c0_1 = arith.constant 0 : index
    %c0_2 = arith.constant 0 : index
    %1 = vector.load %arg2[%c0_1, %c0_2] : memref<256x128xf32, #tpu.memory_space<vmem>>, vector<256x128xf32>
    %cst = arith.constant dense<0.000000e+00> : vector<2x128xf32>
    %2 = tpu.matmul %0, %1, %cst {dimension_numbers = #tpu.dot_dimension_numbers<[1], [0], [0], [1], [0, 0, 1, 1], [], []>} : vector<2x256xf32>, vector<256x128xf32>, vector<2x128xf32> -> vector<2x128xf32>
    %c0_3 = arith.constant 0 : index
    %c0_4 = arith.constant 0 : index
    %3 = vector.load %arg3[%c0_3, %c0_4] : memref<1x128xf32, #tpu.memory_space<vmem>>, vector<1x128xf32>
    %4 = vector.broadcast %3 : vector<1x128xf32> to vector<2x128xf32>
    %5 = arith.addf %2, %4 : vector<2x128xf32>
    %c0_5 = arith.constant 0 : index
    %c0_6 = arith.constant 0 : index
    %6 = vector.load %arg4[%c0_5, %c0_6] : memref<2x128xf32, #tpu.memory_space<vmem>>, vector<2x128xf32>
    tpu.vector_store %arg4[%c0_5, %c0_6], %5 {strides = array<i32>} : memref<2x128xf32, #tpu.memory_space<vmem>>, vector<2x128xf32>,
    return
  }
  func.func @transform_0(%arg0: i32) -> (i32, i32) {
    %c0_i32 = arith.constant 0 : i32
    %c0_i32_0 = arith.constant 0 : i32
    return %arg0, %c0_i32 : i32, i32
  }
  func.func @transform_1(%arg0: i32) -> (i32, i32) {
    %c0_i32 = arith.constant 0 : i32
    %c0_i32_0 = arith.constant 0 : i32
    %c0_i32_1 = arith.constant 0 : i32
    return %c0_i32, %c0_i32_0 : i32, i32
  }
  func.func @transform_2(%arg0: i32) -> (i32, i32) {
    %c0_i32 = arith.constant 0 : i32
    %c0_i32_0 = arith.constant 0 : i32
    %c0_i32_1 = arith.constant 0 : i32
    return %c0_i32, %c0_i32_0 : i32, i32
  }
  func.func @transform_3(%arg0: i32) -> (i32, i32) {
    %c0_i32 = arith.constant 0 : i32
    %c0_i32_0 = arith.constant 0 : i32
    return %arg0, %c0_i32 : i32, i32
  }
}

</mosaic_0001>

<llo_original>
// kernel: barlow_twins_encoder_forward.5
$region0: #{barlow_twins_encoder_forward.5}
  #allocation0 [shape = 'u32[]', space=smem, size = 0x4, offset = 0x4, fixed_abs, tag = 'smem constant byte address 0x4 - core index']
  #allocation1 [shape = 'u32[72,128]{1,0:T(1,128)}', space=vmem, size = 0x9000, scoped, tag = 'internal scratch']
  %s0 = inlined_call_operand.vmem [shape: f32[2,4,4,256], index: 0, kind: input, shape index: {}]
  %s1 = inlined_call_operand.vmem [shape: f32[32,36], index: 1, kind: input, shape index: {}]
  %s2 = inlined_call_operand.vmem [shape: f32[32,1], index: 2, kind: input, shape index: {}]
  %s3 = inlined_call_operand.vmem [shape: f32[2,32,128], index: 3, kind: output, shape index: {}]
  %s4 = sld [smem:[#allocation0]]
  $region45: #{barlow_twins_encoder_forward.5} parent=0
    _
  %s6 = ssub.s32 1, %s4
  %s7 = scalar_select 0, %s6, %s4
  loop: start=0, step=1, limit=4
  $region2: #{barlow_twins_encoder_forward.5} parent=0 // loop_pre_header
    _
  $region3: #{barlow_twins_encoder_forward.5} parent=0 // loop_header
    %s9 = sphi 0, %s13
    %p10 = scmp.ge.s32.totalorder %s9, 4
    %s19 = sphi 0, %s21
    %s22 = sphi 0, %s19
    %s23 = sphi 0, %s22
    %s39 = sphi 0, %s23
    %s43 = sphi 0, %s43
    %s45 = sphi 0, %s43
    %s46 = sphi 0, %s45
    %s60 = sphi 0, %s46
    %s64 = sphi 0, %s64
    %s66 = sphi 0, %s64
    %s67 = sphi 0, %s66
    %s81 = sphi 0, %s67
    %s87 = sphi 0, %s89
    %s90 = sphi 0, %s87
    %s91 = sphi 0, %s90
    %s107 = sphi 0, %s91
  $region4: #{barlow_twins_encoder_forward.5} parent=0 // loop_header_branch
    %12 = sbr.rel (%p10) target = $region8
  $region5: #{barlow_twins_encoder_forward.5} parent=0 // loop_body
    %s14 = ssub.s32 %s9, 1
    %s15 = ssub.s32 %s9, 2
    %s16 = sadd.s32 %s9, 1
    %s17 = ssub.s32 %s9, %s16
    %p18 = scmp.eq.s32.totalorder %s17, 0
    %s20 = sadd.s32 %s19, 1
    %s21 = scalar_select %p18, %s19, %s20
    %p24 = pneg %p18
    %p25 = scmp.eq.s32.totalorder %s9, 1
    %p26 = por %p24, %p25
    %p27 = scmp.ne.s32.totalorder %s19, %s22
    %p28 = scmp.eq.s32.totalorder %s9, 0
    %p29 = por %p27, %p28
    %p30 = scmp.ne.s32.totalorder %s19, %s22
    %p31 = scmp.eq.s32.totalorder %s14, 1
    %p32 = por %p30, %p31
    %p33 = scmp.ne.s32.totalorder %s22, %s23
    %p34 = scmp.eq.s32.totalorder %s14, 0
    %p35 = por %p33, %p34
    %p36 = scmp.ne.s32.totalorder %s22, %s23
    %p37 = scmp.eq.s32.totalorder %s15, 1
    %p38 = por %p36, %p37
    %p40 = scmp.ne.s32.totalorder %s23, %s39
    %p41 = scmp.eq.s32.totalorder %s15, 0
    %p42 = por %p40, %p41
    %s44 = sadd.s32 %s43, 1
    %p47 = scmp.eq.s32.totalorder %s9, 1
    %p48 = scmp.ne.s32.totalorder %s43, %s45
    %p49 = scmp.eq.s32.totalorder %s9, 0
    %p50 = por %p48, %p49
    %p51 = scmp.ne.s32.totalorder %s43, %s45
    %p52 = scmp.eq.s32.totalorder %s14, 1
    %p53 = por %p51, %p52
    %p54 = scmp.ne.s32.totalorder %s45, %s46
    %p55 = scmp.eq.s32.totalorder %s14, 0
    %p56 = por %p54, %p55
    %p57 = scmp.ne.s32.totalorder %s45, %s46
    %p58 = scmp.eq.s32.totalorder %s15, 1
    %p59 = por %p57, %p58
    %p61 = scmp.ne.s32.totalorder %s46, %s60
    %p62 = scmp.eq.s32.totalorder %s15, 0
    %p63 = por %p61, %p62
    %s65 = sadd.s32 %s64, 1
    %p68 = scmp.eq.s32.totalorder %s9, 1
    %p69 = scmp.ne.s32.totalorder %s64, %s66
    %p70 = scmp.eq.s32.totalorder %s9, 0
    %p71 = por %p69, %p70
    %p72 = scmp.ne.s32.totalorder %s64, %s66
    %p73 = scmp.eq.s32.totalorder %s14, 1
    %p74 = por %p72, %p73
    %p75 = scmp.ne.s32.totalorder %s66, %s67
    %p76 = scmp.eq.s32.totalorder %s14, 0
    %p77 = por %p75, %p76
    %p78 = scmp.ne.s32.totalorder %s66, %s67
    %p79 = scmp.eq.s32.totalorder %s15, 1
    %p80 = por %p78, %p79
    %p82 = scmp.ne.s32.totalorder %s67, %s81
    %p83 = scmp.eq.s32.totalorder %s15, 0
    %p84 = por %p82, %p83
    %s85 = ssub.s32 %s9, %s16
    %p86 = scmp.eq.s32.totalorder %s85, 0
    %s88 = sadd.s32 %s87, 1
    %s89 = scalar_select %p86, %s87, %s88
    %p92 = pneg %p86
    %p93 = scmp.eq.s32.totalorder %s9, 1
    %p94 = por %p92, %p93
    %p95 = scmp.ne.s32.totalorder %s87, %s90
    %p96 = scmp.eq.s32.totalorder %s9, 0
    %p97 = por %p95, %p96
    %p98 = scmp.ne.s32.totalorder %s87, %s90
    %p99 = scmp.eq.s32.totalorder %s14, 1
    %p100 = por %p98, %p99
    %p101 = scmp.ne.s32.totalorder %s90, %s91
    %p102 = scmp.eq.s32.totalorder %s14, 0
    %p103 = por %p101, %p102
    %p104 = scmp.ne.s32.totalorder %s90, %s91
    %p105 = scmp.eq.s32.totalorder %s15, 1
    %p106 = por %p104, %p105
    %p108 = scmp.ne.s32.totalorder %s91, %s107
    %p109 = scmp.eq.s32.totalorder %s15, 0
    %p110 = por %p108, %p109
    %p111 = scmp.le.s32.totalorder 1, %s9
    %p112 = scmp.lt.s32.totalorder %s9, 3
    %p113 = pnand %p111, %p112
    %p114 = pneg %p113
    // Predicated region
    $region9: #{barlow_twins_encoder_forward.5} parent=5 // pred_check
      _
    $region10: #{barlow_twins_encoder_forward.5} parent=5 // pred_check_branch
      %116 = sbr.rel (%p113) target = $region12
    $region11: #{barlow_twins_encoder_forward.5} parent=5 // pred_region
      %s117 = ssub.s32 %s9, 1
      // Predicated region
      $region13: #{barlow_twins_encoder_forward.5} parent=11 // pred_check
        %p118 = pneg %p56
      $region14: #{barlow_twins_encoder_forward.5} parent=11 // pred_check_branch
        %120 = sbr.rel (%p118) target = $region16
      $region15: #{barlow_twins_encoder_forward.5} parent=11 // pred_region
        _
      $region16: #{barlow_twins_encoder_forward.5} parent=11 // pred_fallthru
        _
      // Predicated region
      $region17: #{barlow_twins_encoder_forward.5} parent=11 // pred_check
        %p121 = pneg %p77
      $region18: #{barlow_twins_encoder_forward.5} parent=11 // pred_check_branch
        %123 = sbr.rel (%p121) target = $region20
      $region19: #{barlow_twins_encoder_forward.5} parent=11 // pred_region
        _
      $region20: #{barlow_twins_encoder_forward.5} parent=11 // pred_fallthru
        _
    $region12: #{barlow_twins_encoder_forward.5} parent=5 // pred_fallthru
      _
    %p124 = scmp.lt.s32.totalorder %s9, 2
    // Predicated region
    $region21: #{barlow_twins_encoder_forward.5} parent=5 // pred_check
      %p125 = pneg %p124
    $region22: #{barlow_twins_encoder_forward.5} parent=5 // pred_check_branch
      %127 = sbr.rel (%p125) target = $region24
    $region23: #{barlow_twins_encoder_forward.5} parent=5 // pred_region
      // Predicated region
      $region25: #{barlow_twins_encoder_forward.5} parent=23 // pred_check
        %p128 = pneg %p29
      $region26: #{barlow_twins_encoder_forward.5} parent=23 // pred_check_branch
        %130 = sbr.rel (%p128) target = $region28
      $region27: #{barlow_twins_encoder_forward.5} parent=23 // pred_region
        %p131 = scmp.lt.s32.totalorder %s9, 1
        %s132 = scalar_select %p131, %s9, 1
        %s133 = smul.addr %s132, 8
        %s134 = smul.addr %s133, 4
        %s135 = scalar_lea.vmem %s0, %s134
      $region28: #{barlow_twins_encoder_forward.5} parent=23 // pred_fallthru
        _
    $region24: #{barlow_twins_encoder_forward.5} parent=5 // pred_fallthru
      _
    %p136 = scmp.le.s32.totalorder 1, %s9
    %p137 = scmp.lt.s32.totalorder %s9, 3
    %p138 = pnand %p136, %p137
    %p139 = pneg %p138
    // Predicated region
    $region29: #{barlow_twins_encoder_forward.5} parent=5 // pred_check
      _
    $region30: #{barlow_twins_encoder_forward.5} parent=5 // pred_check_branch
      %141 = sbr.rel (%p138) target = $region32
    $region31: #{barlow_twins_encoder_forward.5} parent=5 // pred_region
      %s142 = ssub.s32 %s9, 1
      %p143 = scmp.lt.s32.totalorder %s14, 1
      %s144 = scalar_select %p143, %s14, 1
      %s145 = smul.addr %s144, 8
      %s146 = smul.addr %s145, 4
      %s147 = scalar_lea.vmem %s0, %s146
      %p148 = pneg %p35
      %p149 = pneg %p32
      %p150 = pneg %p56
      %p151 = pneg %p53
      %p152 = pneg %p77
      %p153 = pneg %p74
      %p154 = pneg %p103
      %p155 = pneg %p100
      %p156 = scmp.lt.s32.totalorder %s14, 1
      %s157 = scalar_select %p156, %s14, 1
      %s158 = smul.addr %s157, 4
      %s159 = smul.addr %s158, 8
      %s160 = scalar_lea.vmem %s3, %s159
      %p161 = scmp.lt.s32.totalorder %s14, 1
      %s162 = scalar_select %p161, %s14, 1
      %s163 = smul.addr %s162, 8
      %s164 = smul.addr %s163, 4
      %s165 = scalar_lea.vmem %s0, %s164
      %p166 = scmp.lt.s32.totalorder %s14, 1
      %s167 = scalar_select %p166, %s14, 1
      %s168 = smul.addr %s167, 4
      %s169 = smul.addr %s168, 8
      %s170 = scalar_lea.vmem %s3, %s169
      %v171 = vld [vmem:[%s1] sm:$0xff]
      %v172 = vld [vmem:[%s1 + $0x8] sm:$0xff]
      %v173 = vld [vmem:[%s1 + $0x10] sm:$0xff]
      %v174 = vld [vmem:[%s1 + $0x18] sm:$0xff]
      %v175 = vld [vmem:[%s2] sm:$0xff]
      %v176 = vld [vmem:[%s2 + $0x8] sm:$0xff]
      %v177 = vld [vmem:[%s2 + $0x10] sm:$0xff]
      %v178 = vld [vmem:[%s2 + $0x18] sm:$0xff]
      %v179 = vld [vmem:[%s165] sm:$0xf]
      %s180 = scalar_lea.vmem %s165, 8
      %v181 = vld [vmem:[%s180] sm:$0xf]
      %v182 = vld [vmem:[%s165] sm:$0xff]
      %s183 = scalar_lea.vmem %s165, 16
      %v184 = vld [vmem:[%s183] sm:$0xf]
      %s185 = scalar_lea.vmem %s165, 24
      %v186 = vld [vmem:[%s185] sm:$0xf]
      %v187 = vld [vmem:[%s183] sm:$0xff]
      %v188 = vld [vmem:[%s180] sm:$0xff]
      %s190 = scalar_lea.vmem [#allocation1], 1
      %191 = vst [vmem:[%s190] ss:$2 sm:$0xff] %v181
      %v192 = vld.sshfl [vmem:[#allocation1] sm:$0xff pattern:$0x75316420]
      %195 = vst [vmem:[#allocation1] ss:$2 sm:$0xff] %v182
      %v196 = vld.sshfl [vmem:[#allocation1] sm:$0xff pattern:$0x75316420]
      %v197 = vld.sshfl [vmem:[#allocation1 + $0x8] sm:$0xff pattern:$0x75316420]
      %198 = vrot.lane.b32.xlu0 %v196, 127
      %v199 = vpop.permute.xlu0 %198
      %200 = vrot.lane.b32.xlu0 %v197, 127
      %v201 = vpop.permute.xlu0 %200
      %vm202 = vcmask 1039360
      %v203 = vsel %vm202, %v199, %v201
      %s206 = scalar_lea.vmem [#allocation1], 1
      %207 = vst [vmem:[%s206] ss:$2 sm:$0xff] %v184
      %v208 = vld.sshfl [vmem:[#allocation1] sm:$0xff pattern:$0x75316420]
      %s211 = scalar_lea.vmem [#allocation1], 1
      %212 = vst [vmem:[%s211] ss:$2 sm:$0xff] %v187
      %v213 = vld.sshfl [vmem:[#allocation1] sm:$0xff pattern:$0x75316420]
      %v214 = vld.sshfl [vmem:[#allocation1 + $0x8] sm:$0xff pattern:$0x75316420]
      %215 = vrot.lane.b32.xlu0 %v213, 127
      %v216 = vpop.permute.xlu0 %215
      %217 = vrot.lane.b32.xlu0 %v214, 127
      %v218 = vpop.permute.xlu0 %217
      %v219 = vsel %vm202, %v216, %v218
      %221 = vst [vmem:[#allocation1] ss:$2 sm:$0xff] %v182
      %v222 = vld.sshfl [vmem:[#allocation1] sm:$0xff pattern:$0x75316420]
      %v223 = vld.sshfl [vmem:[#allocation1 + $0x8] sm:$0xff pattern:$0x75316420]
      %224 = vrot.lane.b32.xlu0 %v222, 119
      %v225 = vpop.permute.xlu0 %224
      %226 = vrot.lane.b32.xlu0 %v223, 119
      %v227 = vpop.permute.xlu0 %226
      %vm228 = vcmask 973824
      %v229 = vsel %vm228, %v225, %v227
      %s232 = scalar_lea.vmem [#allocation1], 1
      %233 = vst [vmem:[%s232] ss:$2 sm:$0xff] %v188
      %v234 = vld.sshfl [vmem:[#allocation1] sm:$0xff pattern:$0x75316420]
      %v235 = vld.sshfl [vmem:[#allocation1 + $0x8] sm:$0xff pattern:$0x75316420]
      %236 = vrot.lane.b32.xlu0 %v234, 119
      %v237 = vpop.permute.xlu0 %236
      %238 = vrot.lane.b32.xlu0 %v235, 119
      %v239 = vpop.permute.xlu0 %238
      %v240 = vsel %vm228, %v237, %v239
      %242 = vst [vmem:[#allocation1] ss:$2 sm:$0xff] %v182
      %v243 = vld.sshfl [vmem:[#allocation1] sm:$0xff pattern:$0x75316420]
      %v244 = vld.sshfl [vmem:[#allocation1 + $0x8] sm:$0xff pattern:$0x75316420]
      %245 = vrot.lane.b32.xlu0 %v243, 118
      %v246 = vpop.permute.xlu0 %245
      %247 = vrot.lane.b32.xlu0 %v244, 118
      %v248 = vpop.permute.xlu0 %247
      %vm249 = vcmask 965632
      %v250 = vsel %vm249, %v246, %v248
      %vm251 = vcmask 1043456
      %v252 = vsel %vm251, %v179, %v192
      %v253 = vsel %vm251, %v203, %v208
      %v254 = vsel %vm251, %v186, %v219
      %v255 = vsel %vm251, %v229, %v240
      %257 = vset.pattern.permute.xlu0 0
      %258 = vperm.xlu0 %257, %v175
      %v259 = vpop.permute.xlu0 %258
      %262 = vset.pattern.permute.xlu0 0
      %263 = vperm.xlu0 %262, %v176
      %v264 = vpop.permute.xlu0 %263
      %267 = vset.pattern.permute.xlu0 0
      %268 = vperm.xlu0 %267, %v177
      %v269 = vpop.permute.xlu0 %268
      %272 = vset.pattern.permute.xlu0 0
      %273 = vperm.xlu0 %272, %v178
      %v274 = vpop.permute.xlu0 %273
      %vm276 = vcmask 293888
      %v278 = vsel %vm276, %v171, 0
      %v281 = vsel %vm276, %v172, 0
      %v284 = vsel %vm276, %v173, 0
      %v287 = vsel %vm276, %v174, 0
      %v289 = vsel %vm251, %v250, 0
      %291 = vmatpush.msra.mxu0 0.0
      %292 = vmatpush.msra.mxu0 0.0
      %293 = vmatpush.msra.mxu0 0.0
      %294 = vmatpush.msra.mxu0 0.0
      %295 = vmatpush.msra.mxu0 0.0
      %296 = vmatpush.msra.mxu0 0.0
      %297 = vmatpush.msra.mxu0 0.0
      %298 = vmatpush.msra.mxu0 0.0
      %299 = vmatpush.msra.mxu0 0.0
      %300 = vmatpush.msra.mxu0 0.0
      %301 = vmatpush.msra.mxu0 0.0
      %302 = vmatpush.msra.mxu0 %v289
      %303 = vmatpush.msra.mxu0 %v255
      %304 = vmatpush.msra.mxu0 %v254
      %305 = vmatpush.msra.mxu0 %v253
      %306 = vmatpush.msra.mxu0 %v252
      %307 = vmatmul.f32.gmra.mxu0 %v278
      %v308 = vpop.f32.mrf.mxu0
      %v309 = vadd.f32 %v259, %v308
      %310 = vmatmul.f32.gmra.mxu0 %v281
      %v311 = vpop.f32.mrf.mxu0
      %v312 = vadd.f32 %v264, %v311
      %313 = vmatmul.f32.gmra.mxu0 %v284
      %v314 = vpop.f32.mrf.mxu0
      %v315 = vadd.f32 %v269, %v314
      %316 = vmatmul.f32.gmra.mxu0 %v287
      %v317 = vpop.f32.mrf.mxu0
      %v318 = vadd.f32 %v274, %v317
      %319 = vdwg.mxu0
      %v320 = vmax.f32 %v309, 0.0
      %v321 = vmax.f32 %v312, 0.0
      %v322 = vmax.f32 %v315, 0.0
      %v323 = vmax.f32 %v318, 0.0
      %324 = vst [vmem:[%s170] sm:$0xff] %v320
      %325 = vst [vmem:[%s170 + $0x8] sm:$0xff] %v321
      %326 = vst [vmem:[%s170 + $0x10] sm:$0xff] %v322
      %327 = vst [vmem:[%s170 + $0x18] sm:$0xff] %v323
      %p328 = scmp.lt.s32.totalorder %s14, 1
      %s329 = scalar_select %p328, %s14, 1
      %s330 = smul.addr %s329, 4
      %s331 = smul.addr %s330, 8
      %s332 = scalar_lea.vmem %s3, %s331
      // Predicated region
      $region33: #{barlow_twins_encoder_forward.5} parent=31 // pred_check
        %p333 = pneg %p100
      $region34: #{barlow_twins_encoder_forward.5} parent=31 // pred_check_branch
        %335 = sbr.rel (%p333) target = $region36
      $region35: #{barlow_twins_encoder_forward.5} parent=31 // pred_region
        _
      $region36: #{barlow_twins_encoder_forward.5} parent=31 // pred_fallthru
        _
    $region32: #{barlow_twins_encoder_forward.5} parent=5 // pred_fallthru
      _
    %p336 = scmp.le.s32.totalorder 2, %s9
    // Predicated region
    $region37: #{barlow_twins_encoder_forward.5} parent=5 // pred_check
      %p337 = pneg %p336
    $region38: #{barlow_twins_encoder_forward.5} parent=5 // pred_check_branch
      %339 = sbr.rel (%p337) target = $region40
    $region39: #{barlow_twins_encoder_forward.5} parent=5 // pred_region
      %s340 = ssub.s32 %s9, 2
      // Predicated region
      $region41: #{barlow_twins_encoder_forward.5} parent=39 // pred_check
        %p341 = pneg %p106
      $region42: #{barlow_twins_encoder_forward.5} parent=39 // pred_check_branch
        %343 = sbr.rel (%p341) target = $region44
      $region43: #{barlow_twins_encoder_forward.5} parent=39 // pred_region
        %p344 = scmp.lt.s32.totalorder %s15, 1
        %s345 = scalar_select %p344, %s15, 1
        %s346 = smul.addr %s345, 4
        %s347 = smul.addr %s346, 8
        %s348 = scalar_lea.vmem %s3, %s347
      $region44: #{barlow_twins_encoder_forward.5} parent=39 // pred_fallthru
        _
    $region40: #{barlow_twins_encoder_forward.5} parent=5 // pred_fallthru
      _
  $region6: #{barlow_twins_encoder_forward.5} parent=0 // loop_footer
    %s13 = sadd.s32 1, %s9
  $region7: #{barlow_twins_encoder_forward.5} parent=0 // loop_footer_branch
    %8 = sbr.rel target = $region3
  $region8: #{barlow_twins_encoder_forward.5} parent=0 // loop_exit
    _

// kernel: barlow_twins_encoder_forward.6
$region0: #{barlow_twins_encoder_forward.6}
  #allocation0 [shape = 'u32[]', space=smem, size = 0x4, offset = 0x4, fixed_abs, tag = 'smem constant byte address 0x4 - core index']
  #allocation1 [shape = 'u32[72,128]{1,0:T(1,128)}', space=vmem, size = 0x9000, scoped, tag = 'internal scratch']
  %s0 = inlined_call_operand.vmem [shape: f32[2,4,32,256], index: 0, kind: input, shape index: {}]
  %s1 = inlined_call_operand.vmem [shape: f32[64,288], index: 1, kind: input, shape index: {}]
  %s2 = inlined_call_operand.vmem [shape: f32[64,1], index: 2, kind: input, shape index: {}]
  %s3 = inlined_call_operand.vmem [shape: f32[2,64,128], index: 3, kind: output, shape index: {}]
  %s4 = sld [smem:[#allocation0]]
  $region45: #{barlow_twins_encoder_forward.6} parent=0
    _
  %s6 = ssub.s32 1, %s4
  %s7 = scalar_select 0, %s6, %s4
  loop: start=0, step=1, limit=4
  $region2: #{barlow_twins_encoder_forward.6} parent=0 // loop_pre_header
    _
  $region3: #{barlow_twins_encoder_forward.6} parent=0 // loop_header
    %s9 = sphi 0, %s13
    %p10 = scmp.ge.s32.totalorder %s9, 4
    %s19 = sphi 0, %s21
    %s22 = sphi 0, %s19
    %s23 = sphi 0, %s22
    %s39 = sphi 0, %s23
    %s43 = sphi 0, %s43
    %s45 = sphi 0, %s43
    %s46 = sphi 0, %s45
    %s60 = sphi 0, %s46
    %s64 = sphi 0, %s64
    %s66 = sphi 0, %s64
    %s67 = sphi 0, %s66
    %s81 = sphi 0, %s67
    %s87 = sphi 0, %s89
    %s90 = sphi 0, %s87
    %s91 = sphi 0, %s90
    %s107 = sphi 0, %s91
  $region4: #{barlow_twins_encoder_forward.6} parent=0 // loop_header_branch
    %12 = sbr.rel (%p10) target = $region8
  $region5: #{barlow_twins_encoder_forward.6} parent=0 // loop_body
    %s14 = ssub.s32 %s9, 1
    %s15 = ssub.s32 %s9, 2
    %s16 = sadd.s32 %s9, 1
    %s17 = ssub.s32 %s9, %s16
    %p18 = scmp.eq.s32.totalorder %s17, 0
    %s20 = sadd.s32 %s19, 1
    %s21 = scalar_select %p18, %s19, %s20
    %p24 = pneg %p18
    %p25 = scmp.eq.s32.totalorder %s9, 1
    %p26 = por %p24, %p25
    %p27 = scmp.ne.s32.totalorder %s19, %s22
    %p28 = scmp.eq.s32.totalorder %s9, 0
    %p29 = por %p27, %p28
    %p30 = scmp.ne.s32.totalorder %s19, %s22
    %p31 = scmp.eq.s32.totalorder %s14, 1
    %p32 = por %p30, %p31
    %p33 = scmp.ne.s32.totalorder %s22, %s23
    %p34 = scmp.eq.s32.totalorder %s14, 0
    %p35 = por %p33, %p34
    %p36 = scmp.ne.s32.totalorder %s22, %s23
    %p37 = scmp.eq.s32.totalorder %s15, 1
    %p38 = por %p36, %p37
    %p40 = scmp.ne.s32.totalorder %s23, %s39
    %p41 = scmp.eq.s32.totalorder %s15, 0
    %p42 = por %p40, %p41
    %s44 = sadd.s32 %s43, 1
    %p47 = scmp.eq.s32.totalorder %s9, 1
    %p48 = scmp.ne.s32.totalorder %s43, %s45
    %p49 = scmp.eq.s32.totalorder %s9, 0
    %p50 = por %p48, %p49
    %p51 = scmp.ne.s32.totalorder %s43, %s45
    %p52 = scmp.eq.s32.totalorder %s14, 1
    %p53 = por %p51, %p52
    %p54 = scmp.ne.s32.totalorder %s45, %s46
    %p55 = scmp.eq.s32.totalorder %s14, 0
    %p56 = por %p54, %p55
    %p57 = scmp.ne.s32.totalorder %s45, %s46
    %p58 = scmp.eq.s32.totalorder %s15, 1
    %p59 = por %p57, %p58
    %p61 = scmp.ne.s32.totalorder %s46, %s60
    %p62 = scmp.eq.s32.totalorder %s15, 0
    %p63 = por %p61, %p62
    %s65 = sadd.s32 %s64, 1
    %p68 = scmp.eq.s32.totalorder %s9, 1
    %p69 = scmp.ne.s32.totalorder %s64, %s66
    %p70 = scmp.eq.s32.totalorder %s9, 0
    %p71 = por %p69, %p70
    %p72 = scmp.ne.s32.totalorder %s64, %s66
    %p73 = scmp.eq.s32.totalorder %s14, 1
    %p74 = por %p72, %p73
    %p75 = scmp.ne.s32.totalorder %s66, %s67
    %p76 = scmp.eq.s32.totalorder %s14, 0
    %p77 = por %p75, %p76
    %p78 = scmp.ne.s32.totalorder %s66, %s67
    %p79 = scmp.eq.s32.totalorder %s15, 1
    %p80 = por %p78, %p79
    %p82 = scmp.ne.s32.totalorder %s67, %s81
    %p83 = scmp.eq.s32.totalorder %s15, 0
    %p84 = por %p82, %p83
    %s85 = ssub.s32 %s9, %s16
    %p86 = scmp.eq.s32.totalorder %s85, 0
    %s88 = sadd.s32 %s87, 1
    %s89 = scalar_select %p86, %s87, %s88
    %p92 = pneg %p86
    %p93 = scmp.eq.s32.totalorder %s9, 1
    %p94 = por %p92, %p93
    %p95 = scmp.ne.s32.totalorder %s87, %s90
    %p96 = scmp.eq.s32.totalorder %s9, 0
    %p97 = por %p95, %p96
    %p98 = scmp.ne.s32.totalorder %s87, %s90
    %p99 = scmp.eq.s32.totalorder %s14, 1
    %p100 = por %p98, %p99
    %p101 = scmp.ne.s32.totalorder %s90, %s91
    %p102 = scmp.eq.s32.totalorder %s14, 0
    %p103 = por %p101, %p102
    %p104 = scmp.ne.s32.totalorder %s90, %s91
    %p105 = scmp.eq.s32.totalorder %s15, 1
    %p106 = por %p104, %p105
    %p108 = scmp.ne.s32.totalorder %s91, %s107
    %p109 = scmp.eq.s32.totalorder %s15, 0
    %p110 = por %p108, %p109
    %p111 = scmp.le.s32.totalorder 1, %s9
    %p112 = scmp.lt.s32.totalorder %s9, 3
    %p113 = pnand %p111, %p112
    %p114 = pneg %p113
    // Predicated region
    $region9: #{barlow_twins_encoder_forward.6} parent=5 // pred_check
      _
    $region10: #{barlow_twins_encoder_forward.6} parent=5 // pred_check_branch
      %116 = sbr.rel (%p113) target = $region12
    $region11: #{barlow_twins_encoder_forward.6} parent=5 // pred_region
      %s117 = ssub.s32 %s9, 1
      // Predicated region
      $region13: #{barlow_twins_encoder_forward.6} parent=11 // pred_check
        %p118 = pneg %p56
      $region14: #{barlow_twins_encoder_forward.6} parent=11 // pred_check_branch
        %120 = sbr.rel (%p118) target = $region16
      $region15: #{barlow_twins_encoder_forward.6} parent=11 // pred_region
        _
      $region16: #{barlow_twins_encoder_forward.6} parent=11 // pred_fallthru
        _
      // Predicated region
      $region17: #{barlow_twins_encoder_forward.6} parent=11 // pred_check
        %p121 = pneg %p77
      $region18: #{barlow_twins_encoder_forward.6} parent=11 // pred_check_branch
        %123 = sbr.rel (%p121) target = $region20
      $region19: #{barlow_twins_encoder_forward.6} parent=11 // pred_region
        _
      $region20: #{barlow_twins_encoder_forward.6} parent=11 // pred_fallthru
        _
    $region12: #{barlow_twins_encoder_forward.6} parent=5 // pred_fallthru
      _
    %p124 = scmp.lt.s32.totalorder %s9, 2
    // Predicated region
    $region21: #{barlow_twins_encoder_forward.6} parent=5 // pred_check
      %p125 = pneg %p124
    $region22: #{barlow_twins_encoder_forward.6} parent=5 // pred_check_branch
      %127 = sbr.rel (%p125) target = $region24
    $region23: #{barlow_twins_encoder_forward.6} parent=5 // pred_region
      // Predicated region
      $region25: #{barlow_twins_encoder_forward.6} parent=23 // pred_check
        %p128 = pneg %p29
      $region26: #{barlow_twins_encoder_forward.6} parent=23 // pred_check_branch
        %130 = sbr.rel (%p128) target = $region28
      $region27: #{barlow_twins_encoder_forward.6} parent=23 // pred_region
        %p131 = scmp.lt.s32.totalorder %s9, 1
        %s132 = scalar_select %p131, %s9, 1
        %s133 = smul.addr %s132, 32
        %s134 = smul.addr %s133, 8
        %s135 = scalar_lea.vmem %s0, %s134
      $region28: #{barlow_twins_encoder_forward.6} parent=23 // pred_fallthru
        _
    $region24: #{barlow_twins_encoder_forward.6} parent=5 // pred_fallthru
      _
    %p136 = scmp.le.s32.totalorder 1, %s9
    %p137 = scmp.lt.s32.totalorder %s9, 3
    %p138 = pnand %p136, %p137
    %p139 = pneg %p138
    // Predicated region
    $region29: #{barlow_twins_encoder_forward.6} parent=5 // pred_check
      _
    $region30: #{barlow_twins_encoder_forward.6} parent=5 // pred_check_branch
      %141 = sbr.rel (%p138) target = $region32
    $region31: #{barlow_twins_encoder_forward.6} parent=5 // pred_region
      %s142 = ssub.s32 %s9, 1
      %p143 = scmp.lt.s32.totalorder %s14, 1
      %s144 = scalar_select %p143, %s14, 1
      %s145 = smul.addr %s144, 32
      %s146 = smul.addr %s145, 8
      %s147 = scalar_lea.vmem %s0, %s146
      %p148 = pneg %p35
      %p149 = pneg %p32
      %p150 = pneg %p56
      %p151 = pneg %p53
      %p152 = pneg %p77
      %p153 = pneg %p74
      %p154 = pneg %p103
      %p155 = pneg %p100
      %p156 = scmp.lt.s32.totalorder %s14, 1
      %s157 = scalar_select %p156, %s14, 1
      %s158 = smul.addr %s157, 8
      %s159 = smul.addr %s158, 8
      %s160 = scalar_lea.vmem %s3, %s159
      %p161 = scmp.lt.s32.totalorder %s14, 1
      %s162 = scalar_select %p161, %s14, 1
      %s163 = smul.addr %s162, 32
      %s164 = smul.addr %s163, 8
      %s165 = scalar_lea.vmem %s0, %s164
      %p166 = scmp.lt.s32.totalorder %s14, 1
      %s167 = scalar_select %p166, %s14, 1
      %s168 = smul.addr %s167, 8
      %s169 = smul.addr %s168, 8
      %s170 = scalar_lea.vmem %s3, %s169
      %v171 = vld [vmem:[%s1] sm:$0xff]
      %v172 = vld [vmem:[%s1 + $0x8] sm:$0xff]
      %v173 = vld [vmem:[%s1 + $0x10] sm:$0xff]
      %v174 = vld [vmem:[%s1 + $0x18] sm:$0xff]
      %v175 = vld [vmem:[%s1 + $0x20] sm:$0xff]
      %v176 = vld [vmem:[%s1 + $0x28] sm:$0xff]
      %v177 = vld [vmem:[%s1 + $0x30] sm:$0xff]
      %v178 = vld [vmem:[%s1 + $0x38] sm:$0xff]
      %v179 = vld [vmem:[%s1 + $0x40] sm:$0xff]
      %v180 = vld [vmem:[%s1 + $0x48] sm:$0xff]
      %v181 = vld [vmem:[%s1 + $0x50] sm:$0xff]
      %v182 = vld [vmem:[%s1 + $0x58] sm:$0xff]
      %v183 = vld [vmem:[%s1 + $0x60] sm:$0xff]
      %v184 = vld [vmem:[%s1 + $0x68] sm:$0xff]
      %v185 = vld [vmem:[%s1 + $0x70] sm:$0xff]
      %v186 = vld [vmem:[%s1 + $0x78] sm:$0xff]
      %v187 = vld [vmem:[%s1 + $0x80] sm:$0xff]
      %v188 = vld [vmem:[%s1 + $0x88] sm:$0xff]
      %v189 = vld [vmem:[%s1 + $0x90] sm:$0xff]
      %v190 = vld [vmem:[%s1 + $0x98] sm:$0xff]
      %v191 = vld [vmem:[%s1 + $0xa0] sm:$0xff]
      %v192 = vld [vmem:[%s1 + $0xa8] sm:$0xff]
      %v193 = vld [vmem:[%s1 + $0xb0] sm:$0xff]
      %v194 = vld [vmem:[%s1 + $0xb8] sm:$0xff]
      %v195 = vld [vmem:[%s2] sm:$0xff]
      %v196 = vld [vmem:[%s2 + $0x8] sm:$0xff]
      %v197 = vld [vmem:[%s2 + $0x10] sm:$0xff]
      %v198 = vld [vmem:[%s2 + $0x18] sm:$0xff]
      %v199 = vld [vmem:[%s2 + $0x20] sm:$0xff]
      %v200 = vld [vmem:[%s2 + $0x28] sm:$0xff]
      %v201 = vld [vmem:[%s2 + $0x30] sm:$0xff]
      %v202 = vld [vmem:[%s2 + $0x38] sm:$0xff]
      %v203 = vld [vmem:[%s165] sm:$0xff]
      %v204 = vld [vmem:[%s165 + $0x10] sm:$0xff]
      %v205 = vld [vmem:[%s165 + $0x20] sm:$0xff]
      %v206 = vld [vmem:[%s165 + $0x30] sm:$0xff]
      %s207 = scalar_lea.vmem %s165, 64
      %v208 = vld [vmem:[%s207] sm:$0xff]
      %v209 = vld [vmem:[%s207 + $0x10] sm:$0xff]
      %v210 = vld [vmem:[%s207 + $0x20] sm:$0xff]
      %v211 = vld [vmem:[%s207 + $0x30] sm:$0xff]
      %v212 = vld [vmem:[%s165 + $0x8] sm:$0xff]
      %v213 = vld [vmem:[%s165 + $0x18] sm:$0xff]
      %v214 = vld [vmem:[%s165 + $0x28] sm:$0xff]
      %v215 = vld [vmem:[%s165 + $0x38] sm:$0xff]
      %s216 = scalar_lea.vmem %s165, 128
      %v217 = vld [vmem:[%s216] sm:$0xff]
      %v218 = vld [vmem:[%s216 + $0x10] sm:$0xff]
      %v219 = vld [vmem:[%s216 + $0x20] sm:$0xff]
      %v220 = vld [vmem:[%s216 + $0x30] sm:$0xff]
      %s221 = scalar_lea.vmem %s165, 192
      %v222 = vld [vmem:[%s221] sm:$0xff]
      %v223 = vld [vmem:[%s221 + $0x10] sm:$0xff]
      %v224 = vld [vmem:[%s221 + $0x20] sm:$0xff]
      %v225 = vld [vmem:[%s221 + $0x30] sm:$0xff]
      %v226 = vld [vmem:[%s216 + $0x8] sm:$0xff]
      %v227 = vld [vmem:[%s216 + $0x18] sm:$0xff]
      %v228 = vld [vmem:[%s216 + $0x28] sm:$0xff]
      %v229 = vld [vmem:[%s216 + $0x38] sm:$0xff]
      %v230 = vld [vmem:[%s207 + $0x8] sm:$0xff]
      %v231 = vld [vmem:[%s207 + $0x18] sm:$0xff]
      %v232 = vld [vmem:[%s207 + $0x28] sm:$0xff]
      %v233 = vld [vmem:[%s207 + $0x38] sm:$0xff]
      %242 = vrot.lane.b32.xlu0 %v203, 127
      %v243 = vpop.permute.xlu0 %242
      %244 = vrot.lane.b32.xlu0 %v212, 127
      %v245 = vpop.permute.xlu0 %244
      %246 = vrot.lane.b32.xlu0 %v204, 127
      %v247 = vpop.permute.xlu0 %246
      %248 = vrot.lane.b32.xlu0 %v213, 127
      %v249 = vpop.permute.xlu0 %248
      %250 = vrot.lane.b32.xlu0 %v205, 127
      %v251 = vpop.permute.xlu0 %250
      %252 = vrot.lane.b32.xlu0 %v214, 127
      %v253 = vpop.permute.xlu0 %252
      %254 = vrot.lane.b32.xlu0 %v206, 127
      %v255 = vpop.permute.xlu0 %254
      %256 = vrot.lane.b32.xlu0 %v215, 127
      %v257 = vpop.permute.xlu0 %256
      %vm258 = vcmask 1039360
      %v259 = vsel %vm258, %v243, %v245
      %v260 = vsel %vm258, %v247, %v249
      %v261 = vsel %vm258, %v251, %v253
      %v262 = vsel %vm258, %v255, %v257
      %275 = vrot.lane.b32.xlu0 %v217, 127
      %v276 = vpop.permute.xlu0 %275
      %277 = vrot.lane.b32.xlu0 %v226, 127
      %v278 = vpop.permute.xlu0 %277
      %279 = vrot.lane.b32.xlu0 %v218, 127
      %v280 = vpop.permute.xlu0 %279
      %281 = vrot.lane.b32.xlu0 %v227, 127
      %v282 = vpop.permute.xlu0 %281
      %283 = vrot.lane.b32.xlu0 %v219, 127
      %v284 = vpop.permute.xlu0 %283
      %285 = vrot.lane.b32.xlu0 %v228, 127
      %v286 = vpop.permute.xlu0 %285
      %287 = vrot.lane.b32.xlu0 %v220, 127
      %v288 = vpop.permute.xlu0 %287
      %289 = vrot.lane.b32.xlu0 %v229, 127
      %v290 = vpop.permute.xlu0 %289
      %v291 = vsel %vm258, %v276, %v278
      %v292 = vsel %vm258, %v280, %v282
      %v293 = vsel %vm258, %v284, %v286
      %v294 = vsel %vm258, %v288, %v290
      %299 = vrot.lane.b32.xlu0 %v203, 123
      %v300 = vpop.permute.xlu0 %299
      %301 = vrot.lane.b32.xlu0 %v212, 123
      %v302 = vpop.permute.xlu0 %301
      %303 = vrot.lane.b32.xlu0 %v204, 123
      %v304 = vpop.permute.xlu0 %303
      %305 = vrot.lane.b32.xlu0 %v213, 123
      %v306 = vpop.permute.xlu0 %305
      %307 = vrot.lane.b32.xlu0 %v205, 123
      %v308 = vpop.permute.xlu0 %307
      %309 = vrot.lane.b32.xlu0 %v214, 123
      %v310 = vpop.permute.xlu0 %309
      %311 = vrot.lane.b32.xlu0 %v206, 123
      %v312 = vpop.permute.xlu0 %311
      %313 = vrot.lane.b32.xlu0 %v215, 123
      %v314 = vpop.permute.xlu0 %313
      %vm315 = vcmask 1006592
      %v316 = vsel %vm315, %v300, %v302
      %v317 = vsel %vm315, %v304, %v306
      %v318 = vsel %vm315, %v308, %v310
      %v319 = vsel %vm315, %v312, %v314
      %332 = vrot.lane.b32.xlu0 %v208, 123
      %v333 = vpop.permute.xlu0 %332
      %334 = vrot.lane.b32.xlu0 %v230, 123
      %v335 = vpop.permute.xlu0 %334
      %336 = vrot.lane.b32.xlu0 %v209, 123
      %v337 = vpop.permute.xlu0 %336
      %338 = vrot.lane.b32.xlu0 %v231, 123
      %v339 = vpop.permute.xlu0 %338
      %340 = vrot.lane.b32.xlu0 %v210, 123
      %v341 = vpop.permute.xlu0 %340
      %342 = vrot.lane.b32.xlu0 %v232, 123
      %v343 = vpop.permute.xlu0 %342
      %344 = vrot.lane.b32.xlu0 %v211, 123
      %v345 = vpop.permute.xlu0 %344
      %346 = vrot.lane.b32.xlu0 %v233, 123
      %v347 = vpop.permute.xlu0 %346
      %v348 = vsel %vm315, %v333, %v335
      %v349 = vsel %vm315, %v337, %v339
      %v350 = vsel %vm315, %v341, %v343
      %v351 = vsel %vm315, %v345, %v347
      %356 = vrot.lane.b32.xlu0 %v203, 122
      %v357 = vpop.permute.xlu0 %356
      %358 = vrot.lane.b32.xlu0 %v212, 122
      %v359 = vpop.permute.xlu0 %358
      %360 = vrot.lane.b32.xlu0 %v204, 122
      %v361 = vpop.permute.xlu0 %360
      %362 = vrot.lane.b32.xlu0 %v213, 122
      %v363 = vpop.permute.xlu0 %362
      %364 = vrot.lane.b32.xlu0 %v205, 122
      %v365 = vpop.permute.xlu0 %364
      %366 = vrot.lane.b32.xlu0 %v214, 122
      %v367 = vpop.permute.xlu0 %366
      %368 = vrot.lane.b32.xlu0 %v206, 122
      %v369 = vpop.permute.xlu0 %368
      %370 = vrot.lane.b32.xlu0 %v215, 122
      %v371 = vpop.permute.xlu0 %370
      %vm372 = vcmask 998400
      %v373 = vsel %vm372, %v357, %v359
      %v374 = vsel %vm372, %v361, %v363
      %v375 = vsel %vm372, %v365, %v367
      %v376 = vsel %vm372, %v369, %v371
      %382 = vset.pattern.permute.xlu0 0
      %383 = vperm.xlu0 %382, %v195
      %v384 = vpop.permute.xlu0 %383
      %387 = vset.pattern.permute.xlu0 0
      %388 = vperm.xlu0 %387, %v196
      %v389 = vpop.permute.xlu0 %388
      %392 = vset.pattern.permute.xlu0 0
      %393 = vperm.xlu0 %392, %v197
      %v394 = vpop.permute.xlu0 %393
      %397 = vset.pattern.permute.xlu0 0
      %398 = vperm.xlu0 %397, %v198
      %v399 = vpop.permute.xlu0 %398
      %402 = vset.pattern.permute.xlu0 0
      %403 = vperm.xlu0 %402, %v199
      %v404 = vpop.permute.xlu0 %403
      %407 = vset.pattern.permute.xlu0 0
      %408 = vperm.xlu0 %407, %v200
      %v409 = vpop.permute.xlu0 %408
      %412 = vset.pattern.permute.xlu0 0
      %413 = vperm.xlu0 %412, %v201
      %v414 = vpop.permute.xlu0 %413
      %417 = vset.pattern.permute.xlu0 0
      %418 = vperm.xlu0 %417, %v202
      %v419 = vpop.permute.xlu0 %418
      %vm421 = vcmask 261120
      %v423 = vsel %vm421, %v173, 0
      %v426 = vsel %vm421, %v176, 0
      %v429 = vsel %vm421, %v179, 0
      %v432 = vsel %vm421, %v182, 0
      %v435 = vsel %vm421, %v185, 0
      %v438 = vsel %vm421, %v188, 0
      %v441 = vsel %vm421, %v191, 0
      %v444 = vsel %vm421, %v194, 0
      %446 = vmatpush.msra.mxu0 %v220
      %447 = vmatpush.msra.mxu0 %v219
      %448 = vmatpush.msra.mxu0 %v218
      %449 = vmatpush.msra.mxu0 %v217
      %450 = vmatpush.msra.mxu0 %v262
      %451 = vmatpush.msra.mxu0 %v261
      %452 = vmatpush.msra.mxu0 %v260
      %453 = vmatpush.msra.mxu0 %v259
      %454 = vmatpush.msra.mxu0 %v211
      %455 = vmatpush.msra.mxu0 %v210
      %456 = vmatpush.msra.mxu0 %v209
      %457 = vmatpush.msra.mxu0 %v208
      %458 = vmatpush.msra.mxu0 %v206
      %459 = vmatpush.msra.mxu0 %v205
      %460 = vmatpush.msra.mxu0 %v204
      %461 = vmatpush.msra.mxu0 %v203
      %462 = vmatmul.f32.gmra.mxu0 %v171
      %v463 = vpop.f32.mrf.mxu0
      %v464 = vadd.f32 %v384, %v463
      %465 = vmatmul.f32.gmra.mxu0 %v174
      %v466 = vpop.f32.mrf.mxu0
      %v467 = vadd.f32 %v389, %v466
      %468 = vmatmul.f32.gmra.mxu0 %v177
      %v469 = vpop.f32.mrf.mxu0
      %v470 = vadd.f32 %v394, %v469
      %471 = vmatmul.f32.gmra.mxu0 %v180
      %v472 = vpop.f32.mrf.mxu0
      %v473 = vadd.f32 %v399, %v472
      %474 = vmatmul.f32.gmra.mxu0 %v183
      %v475 = vpop.f32.mrf.mxu0
      %v476 = vadd.f32 %v404, %v475
      %477 = vmatmul.f32.gmra.mxu0 %v186
      %v478 = vpop.f32.mrf.mxu0
      %v479 = vadd.f32 %v409, %v478
      %480 = vmatmul.f32.gmra.mxu0 %v189
      %v481 = vpop.f32.mrf.mxu0
      %v482 = vadd.f32 %v414, %v481
      %483 = vmatmul.f32.gmra.mxu0 %v192
      %v484 = vpop.f32.mrf.mxu0
      %v485 = vadd.f32 %v419, %v484
      %486 = vdwg.mxu0
      %487 = vmatpush.msra.mxu0 %v351
      %488 = vmatpush.msra.mxu0 %v350
      %489 = vmatpush.msra.mxu0 %v349
      %490 = vmatpush.msra.mxu0 %v348
      %491 = vmatpush.msra.mxu0 %v319
      %492 = vmatpush.msra.mxu0 %v318
      %493 = vmatpush.msra.mxu0 %v317
      %494 = vmatpush.msra.mxu0 %v316
      %495 = vmatpush.msra.mxu0 %v294
      %496 = vmatpush.msra.mxu0 %v293
      %497 = vmatpush.msra.mxu0 %v292
      %498 = vmatpush.msra.mxu0 %v291
      %499 = vmatpush.msra.mxu0 %v225
      %500 = vmatpush.msra.mxu0 %v224
      %501 = vmatpush.msra.mxu0 %v223
      %502 = vmatpush.msra.mxu0 %v222
      %503 = vmatmul.f32.gmra.mxu0 %v172
      %v504 = vpop.f32.mrf.mxu0
      %v505 = vadd.f32 %v464, %v504
      %506 = vmatmul.f32.gmra.mxu0 %v175
      %v507 = vpop.f32.mrf.mxu0
      %v508 = vadd.f32 %v467, %v507
      %509 = vmatmul.f32.gmra.mxu0 %v178
      %v510 = vpop.f32.mrf.mxu0
      %v511 = vadd.f32 %v470, %v510
      %512 = vmatmul.f32.gmra.mxu0 %v181
      %v513 = vpop.f32.mrf.mxu0
      %v514 = vadd.f32 %v473, %v513
      %515 = vmatmul.f32.gmra.mxu0 %v184
      %v516 = vpop.f32.mrf.mxu0
      %v517 = vadd.f32 %v476, %v516
      %518 = vmatmul.f32.gmra.mxu0 %v187
      %v519 = vpop.f32.mrf.mxu0
      %v520 = vadd.f32 %v479, %v519
      %521 = vmatmul.f32.gmra.mxu0 %v190
      %v522 = vpop.f32.mrf.mxu0
      %v523 = vadd.f32 %v482, %v522
      %524 = vmatmul.f32.gmra.mxu0 %v193
      %v525 = vpop.f32.mrf.mxu0
      %v526 = vadd.f32 %v485, %v525
      %527 = vdwg.mxu0
      %528 = vmatpush.msra.mxu0 0.0
      %529 = vmatpush.msra.mxu0 0.0
      %530 = vmatpush.msra.mxu0 0.0
      %531 = vmatpush.msra.mxu0 0.0
      %532 = vmatpush.msra.mxu0 0.0
      %533 = vmatpush.msra.mxu0 0.0
      %534 = vmatpush.msra.mxu0 0.0
      %535 = vmatpush.msra.mxu0 0.0
      %536 = vmatpush.msra.mxu0 0.0
      %537 = vmatpush.msra.mxu0 0.0
      %538 = vmatpush.msra.mxu0 0.0
      %539 = vmatpush.msra.mxu0 0.0
      %540 = vmatpush.msra.mxu0 %v376
      %541 = vmatpush.msra.mxu0 %v375
      %542 = vmatpush.msra.mxu0 %v374
      %543 = vmatpush.msra.mxu0 %v373
      %544 = vmatmul.f32.gmra.mxu0 %v423
      %v545 = vpop.f32.mrf.mxu0
      %v546 = vadd.f32 %v505, %v545
      %547 = vmatmul.f32.gmra.mxu0 %v426
      %v548 = vpop.f32.mrf.mxu0
      %v549 = vadd.f32 %v508, %v548
      %550 = vmatmul.f32.gmra.mxu0 %v429
      %v551 = vpop.f32.mrf.mxu0
      %v552 = vadd.f32 %v511, %v551
      %553 = vmatmul.f32.gmra.mxu0 %v432
      %v554 = vpop.f32.mrf.mxu0
      %v555 = vadd.f32 %v514, %v554
      %556 = vmatmul.f32.gmra.mxu0 %v435
      %v557 = vpop.f32.mrf.mxu0
      %v558 = vadd.f32 %v517, %v557
      %559 = vmatmul.f32.gmra.mxu0 %v438
      %v560 = vpop.f32.mrf.mxu0
      %v561 = vadd.f32 %v520, %v560
      %562 = vmatmul.f32.gmra.mxu0 %v441
      %v563 = vpop.f32.mrf.mxu0
      %v564 = vadd.f32 %v523, %v563
      %565 = vmatmul.f32.gmra.mxu0 %v444
      %v566 = vpop.f32.mrf.mxu0
      %v567 = vadd.f32 %v526, %v566
      %568 = vdwg.mxu0
      %v569 = vmax.f32 %v546, 0.0
      %v570 = vmax.f32 %v549, 0.0
      %v571 = vmax.f32 %v552, 0.0
      %v572 = vmax.f32 %v555, 0.0
      %v573 = vmax.f32 %v558, 0.0
      %v574 = vmax.f32 %v561, 0.0
      %v575 = vmax.f32 %v564, 0.0
      %v576 = vmax.f32 %v567, 0.0
      %577 = vst [vmem:[%s170] sm:$0xff] %v569
      %578 = vst [vmem:[%s170 + $0x8] sm:$0xff] %v570
      %579 = vst [vmem:[%s170 + $0x10] sm:$0xff] %v571
      %580 = vst [vmem:[%s170 + $0x18] sm:$0xff] %v572
      %581 = vst [vmem:[%s170 + $0x20] sm:$0xff] %v573
      %582 = vst [vmem:[%s170 + $0x28] sm:$0xff] %v574
      %583 = vst [vmem:[%s170 + $0x30] sm:$0xff] %v575
      %584 = vst [vmem:[%s170 + $0x38] sm:$0xff] %v576
      %p585 = scmp.lt.s32.totalorder %s14, 1
      %s586 = scalar_select %p585, %s14, 1
      %s587 = smul.addr %s586, 8
      %s588 = smul.addr %s587, 8
      %s589 = scalar_lea.vmem %s3, %s588
      // Predicated region
      $region33: #{barlow_twins_encoder_forward.6} parent=31 // pred_check
        %p590 = pneg %p100
      $region34: #{barlow_twins_encoder_forward.6} parent=31 // pred_check_branch
        %592 = sbr.rel (%p590) target = $region36
      $region35: #{barlow_twins_encoder_forward.6} parent=31 // pred_region
        _
      $region36: #{barlow_twins_encoder_forward.6} parent=31 // pred_fallthru
        _
    $region32: #{barlow_twins_encoder_forward.6} parent=5 // pred_fallthru
      _
    %p593 = scmp.le.s32.totalorder 2, %s9
    // Predicated region
    $region37: #{barlow_twins_encoder_forward.6} parent=5 // pred_check
      %p594 = pneg %p593
    $region38: #{barlow_twins_encoder_forward.6} parent=5 // pred_check_branch
      %596 = sbr.rel (%p594) target = $region40
    $region39: #{barlow_twins_encoder_forward.6} parent=5 // pred_region
      %s597 = ssub.s32 %s9, 2
      // Predicated region
      $region41: #{barlow_twins_encoder_forward.6} parent=39 // pred_check
        %p598 = pneg %p106
      $region42: #{barlow_twins_encoder_forward.6} parent=39 // pred_check_branch
        %600 = sbr.rel (%p598) target = $region44
      $region43: #{barlow_twins_encoder_forward.6} parent=39 // pred_region
        %p601 = scmp.lt.s32.totalorder %s15, 1
        %s602 = scalar_select %p601, %s15, 1
        %s603 = smul.addr %s602, 8
        %s604 = smul.addr %s603, 8
        %s605 = scalar_lea.vmem %s3, %s604
      $region44: #{barlow_twins_encoder_forward.6} parent=39 // pred_fallthru
        _
    $region40: #{barlow_twins_encoder_forward.6} parent=5 // pred_fallthru
      _
  $region6: #{barlow_twins_encoder_forward.6} parent=0 // loop_footer
    %s13 = sadd.s32 1, %s9
  $region7: #{barlow_twins_encoder_forward.6} parent=0 // loop_footer_branch
    %8 = sbr.rel target = $region3
  $region8: #{barlow_twins_encoder_forward.6} parent=0 // loop_exit
    _

// kernel: barlow_twins_encoder_forward.7
$region0: #{barlow_twins_encoder_forward.7}
  #allocation0 [shape = 'u32[]', space=smem, size = 0x4, offset = 0x4, fixed_abs, tag = 'smem constant byte address 0x4 - core index']
  #allocation1 [shape = 'u32[72,128]{1,0:T(1,128)}', space=vmem, size = 0x9000, scoped, tag = 'internal scratch']
  %s0 = inlined_call_operand.vmem [shape: f32[2,4,64,256], index: 0, kind: input, shape index: {}]
  %s1 = inlined_call_operand.vmem [shape: f32[64,576], index: 1, kind: input, shape index: {}]
  %s2 = inlined_call_operand.vmem [shape: f32[64,1], index: 2, kind: input, shape index: {}]
  %s3 = inlined_call_operand.vmem [shape: f32[2,64,128], index: 3, kind: output, shape index: {}]
  %s4 = sld [smem:[#allocation0]]
  $region45: #{barlow_twins_encoder_forward.7} parent=0
    _
  %s6 = ssub.s32 1, %s4
  %s7 = scalar_select 0, %s6, %s4
  loop: start=0, step=1, limit=4
  $region2: #{barlow_twins_encoder_forward.7} parent=0 // loop_pre_header
    _
  $region3: #{barlow_twins_encoder_forward.7} parent=0 // loop_header
    %s9 = sphi 0, %s13
    %p10 = scmp.ge.s32.totalorder %s9, 4
    %s19 = sphi 0, %s21
    %s22 = sphi 0, %s19
    %s23 = sphi 0, %s22
    %s39 = sphi 0, %s23
    %s43 = sphi 0, %s43
    %s45 = sphi 0, %s43
    %s46 = sphi 0, %s45
    %s60 = sphi 0, %s46
    %s64 = sphi 0, %s64
    %s66 = sphi 0, %s64
    %s67 = sphi 0, %s66
    %s81 = sphi 0, %s67
    %s87 = sphi 0, %s89
    %s90 = sphi 0, %s87
    %s91 = sphi 0, %s90
    %s107 = sphi 0, %s91
  $region4: #{barlow_twins_encoder_forward.7} parent=0 // loop_header_branch
    %12 = sbr.rel (%p10) target = $region8
  $region5: #{barlow_twins_encoder_forward.7} parent=0 // loop_body
    %s14 = ssub.s32 %s9, 1
    %s15 = ssub.s32 %s9, 2
    %s16 = sadd.s32 %s9, 1
    %s17 = ssub.s32 %s9, %s16
    %p18 = scmp.eq.s32.totalorder %s17, 0
    %s20 = sadd.s32 %s19, 1
    %s21 = scalar_select %p18, %s19, %s20
    %p24 = pneg %p18
    %p25 = scmp.eq.s32.totalorder %s9, 1
    %p26 = por %p24, %p25
    %p27 = scmp.ne.s32.totalorder %s19, %s22
    %p28 = scmp.eq.s32.totalorder %s9, 0
    %p29 = por %p27, %p28
    %p30 = scmp.ne.s32.totalorder %s19, %s22
    %p31 = scmp.eq.s32.totalorder %s14, 1
    %p32 = por %p30, %p31
    %p33 = scmp.ne.s32.totalorder %s22, %s23
    %p34 = scmp.eq.s32.totalorder %s14, 0
    %p35 = por %p33, %p34
    %p36 = scmp.ne.s32.totalorder %s22, %s23
    %p37 = scmp.eq.s32.totalorder %s15, 1
    %p38 = por %p36, %p37
    %p40 = scmp.ne.s32.totalorder %s23, %s39
    %p41 = scmp.eq.s32.totalorder %s15, 0
    %p42 = por %p40, %p41
    %s44 = sadd.s32 %s43, 1
    %p47 = scmp.eq.s32.totalorder %s9, 1
    %p48 = scmp.ne.s32.totalorder %s43, %s45
    %p49 = scmp.eq.s32.totalorder %s9, 0
    %p50 = por %p48, %p49
    %p51 = scmp.ne.s32.totalorder %s43, %s45
    %p52 = scmp.eq.s32.totalorder %s14, 1
    %p53 = por %p51, %p52
    %p54 = scmp.ne.s32.totalorder %s45, %s46
    %p55 = scmp.eq.s32.totalorder %s14, 0
    %p56 = por %p54, %p55
    %p57 = scmp.ne.s32.totalorder %s45, %s46
    %p58 = scmp.eq.s32.totalorder %s15, 1
    %p59 = por %p57, %p58
    %p61 = scmp.ne.s32.totalorder %s46, %s60
    %p62 = scmp.eq.s32.totalorder %s15, 0
    %p63 = por %p61, %p62
    %s65 = sadd.s32 %s64, 1
    %p68 = scmp.eq.s32.totalorder %s9, 1
    %p69 = scmp.ne.s32.totalorder %s64, %s66
    %p70 = scmp.eq.s32.totalorder %s9, 0
    %p71 = por %p69, %p70
    %p72 = scmp.ne.s32.totalorder %s64, %s66
    %p73 = scmp.eq.s32.totalorder %s14, 1
    %p74 = por %p72, %p73
    %p75 = scmp.ne.s32.totalorder %s66, %s67
    %p76 = scmp.eq.s32.totalorder %s14, 0
    %p77 = por %p75, %p76
    %p78 = scmp.ne.s32.totalorder %s66, %s67
    %p79 = scmp.eq.s32.totalorder %s15, 1
    %p80 = por %p78, %p79
    %p82 = scmp.ne.s32.totalorder %s67, %s81
    %p83 = scmp.eq.s32.totalorder %s15, 0
    %p84 = por %p82, %p83
    %s85 = ssub.s32 %s9, %s16
    %p86 = scmp.eq.s32.totalorder %s85, 0
    %s88 = sadd.s32 %s87, 1
    %s89 = scalar_select %p86, %s87, %s88
    %p92 = pneg %p86
    %p93 = scmp.eq.s32.totalorder %s9, 1
    %p94 = por %p92, %p93
    %p95 = scmp.ne.s32.totalorder %s87, %s90
    %p96 = scmp.eq.s32.totalorder %s9, 0
    %p97 = por %p95, %p96
    %p98 = scmp.ne.s32.totalorder %s87, %s90
    %p99 = scmp.eq.s32.totalorder %s14, 1
    %p100 = por %p98, %p99
    %p101 = scmp.ne.s32.totalorder %s90, %s91
    %p102 = scmp.eq.s32.totalorder %s14, 0
    %p103 = por %p101, %p102
    %p104 = scmp.ne.s32.totalorder %s90, %s91
    %p105 = scmp.eq.s32.totalorder %s15, 1
    %p106 = por %p104, %p105
    %p108 = scmp.ne.s32.totalorder %s91, %s107
    %p109 = scmp.eq.s32.totalorder %s15, 0
    %p110 = por %p108, %p109
    %p111 = scmp.le.s32.totalorder 1, %s9
    %p112 = scmp.lt.s32.totalorder %s9, 3
    %p113 = pnand %p111, %p112
    %p114 = pneg %p113
    // Predicated region
    $region9: #{barlow_twins_encoder_forward.7} parent=5 // pred_check
      _
    $region10: #{barlow_twins_encoder_forward.7} parent=5 // pred_check_branch
      %116 = sbr.rel (%p113) target = $region12
    $region11: #{barlow_twins_encoder_forward.7} parent=5 // pred_region
      %s117 = ssub.s32 %s9, 1
      // Predicated region
      $region13: #{barlow_twins_encoder_forward.7} parent=11 // pred_check
        %p118 = pneg %p56
      $region14: #{barlow_twins_encoder_forward.7} parent=11 // pred_check_branch
        %120 = sbr.rel (%p118) target = $region16
      $region15: #{barlow_twins_encoder_forward.7} parent=11 // pred_region
        _
      $region16: #{barlow_twins_encoder_forward.7} parent=11 // pred_fallthru
        _
      // Predicated region
      $region17: #{barlow_twins_encoder_forward.7} parent=11 // pred_check
        %p121 = pneg %p77
      $region18: #{barlow_twins_encoder_forward.7} parent=11 // pred_check_branch
        %123 = sbr.rel (%p121) target = $region20
      $region19: #{barlow_twins_encoder_forward.7} parent=11 // pred_region
        _
      $region20: #{barlow_twins_encoder_forward.7} parent=11 // pred_fallthru
        _
    $region12: #{barlow_twins_encoder_forward.7} parent=5 // pred_fallthru
      _
    %p124 = scmp.lt.s32.totalorder %s9, 2
    // Predicated region
    $region21: #{barlow_twins_encoder_forward.7} parent=5 // pred_check
      %p125 = pneg %p124
    $region22: #{barlow_twins_encoder_forward.7} parent=5 // pred_check_branch
      %127 = sbr.rel (%p125) target = $region24
    $region23: #{barlow_twins_encoder_forward.7} parent=5 // pred_region
      // Predicated region
      $region25: #{barlow_twins_encoder_forward.7} parent=23 // pred_check
        %p128 = pneg %p29
      $region26: #{barlow_twins_encoder_forward.7} parent=23 // pred_check_branch
        %130 = sbr.rel (%p128) target = $region28
      $region27: #{barlow_twins_encoder_forward.7} parent=23 // pred_region
        %p131 = scmp.lt.s32.totalorder %s9, 1
        %s132 = scalar_select %p131, %s9, 1
        %s133 = smul.addr %s132, 64
        %s134 = smul.addr %s133, 8
        %s135 = scalar_lea.vmem %s0, %s134
      $region28: #{barlow_twins_encoder_forward.7} parent=23 // pred_fallthru
        _
    $region24: #{barlow_twins_encoder_forward.7} parent=5 // pred_fallthru
      _
    %p136 = scmp.le.s32.totalorder 1, %s9
    %p137 = scmp.lt.s32.totalorder %s9, 3
    %p138 = pnand %p136, %p137
    %p139 = pneg %p138
    // Predicated region
    $region29: #{barlow_twins_encoder_forward.7} parent=5 // pred_check
      _
    $region30: #{barlow_twins_encoder_forward.7} parent=5 // pred_check_branch
      %141 = sbr.rel (%p138) target = $region32
    $region31: #{barlow_twins_encoder_forward.7} parent=5 // pred_region
      %s142 = ssub.s32 %s9, 1
      %p143 = scmp.lt.s32.totalorder %s14, 1
      %s144 = scalar_select %p143, %s14, 1
      %s145 = smul.addr %s144, 64
      %s146 = smul.addr %s145, 8
      %s147 = scalar_lea.vmem %s0, %s146
      %p148 = pneg %p35
      %p149 = pneg %p32
      %p150 = pneg %p56
      %p151 = pneg %p53
      %p152 = pneg %p77
      %p153 = pneg %p74
      %p154 = pneg %p103
      %p155 = pneg %p100
      %p156 = scmp.lt.s32.totalorder %s14, 1
      %s157 = scalar_select %p156, %s14, 1
      %s158 = smul.addr %s157, 8
      %s159 = smul.addr %s158, 8
      %s160 = scalar_lea.vmem %s3, %s159
      %p161 = scmp.lt.s32.totalorder %s14, 1
      %s162 = scalar_select %p161, %s14, 1
      %s163 = smul.addr %s162, 64
      %s164 = smul.addr %s163, 8
      %s165 = scalar_lea.vmem %s0, %s164
      %p166 = scmp.lt.s32.totalorder %s14, 1
      %s167 = scalar_select %p166, %s14, 1
      %s168 = smul.addr %s167, 8
      %s169 = smul.addr %s168, 8
      %s170 = scalar_lea.vmem %s3, %s169
      %v171 = vld [vmem:[%s1] sm:$0xff]
      %v172 = vld [vmem:[%s1 + $0x8] sm:$0xff]
      %v173 = vld [vmem:[%s1 + $0x10] sm:$0xff]
      %v174 = vld [vmem:[%s1 + $0x18] sm:$0xff]
      %v175 = vld [vmem:[%s1 + $0x20] sm:$0xff]
      %v176 = vld [vmem:[%s1 + $0x28] sm:$0xff]
      %v177 = vld [vmem:[%s1 + $0x30] sm:$0xff]
      %v178 = vld [vmem:[%s1 + $0x38] sm:$0xff]
      %v179 = vld [vmem:[%s1 + $0x40] sm:$0xff]
      %v180 = vld [vmem:[%s1 + $0x48] sm:$0xff]
      %v181 = vld [vmem:[%s1 + $0x50] sm:$0xff]
      %v182 = vld [vmem:[%s1 + $0x58] sm:$0xff]
      %v183 = vld [vmem:[%s1 + $0x60] sm:$0xff]
      %v184 = vld [vmem:[%s1 + $0x68] sm:$0xff]
      %v185 = vld [vmem:[%s1 + $0x70] sm:$0xff]
      %v186 = vld [vmem:[%s1 + $0x78] sm:$0xff]
      %v187 = vld [vmem:[%s1 + $0x80] sm:$0xff]
      %v188 = vld [vmem:[%s1 + $0x88] sm:$0xff]
      %v189 = vld [vmem:[%s1 + $0x90] sm:$0xff]
      %v190 = vld [vmem:[%s1 + $0x98] sm:$0xff]
      %v191 = vld [vmem:[%s1 + $0xa0] sm:$0xff]
      %v192 = vld [vmem:[%s1 + $0xa8] sm:$0xff]
      %v193 = vld [vmem:[%s1 + $0xb0] sm:$0xff]
      %v194 = vld [vmem:[%s1 + $0xb8] sm:$0xff]
      %v195 = vld [vmem:[%s1 + $0xc0] sm:$0xff]
      %v196 = vld [vmem:[%s1 + $0xc8] sm:$0xff]
      %v197 = vld [vmem:[%s1 + $0xd0] sm:$0xff]
      %v198 = vld [vmem:[%s1 + $0xd8] sm:$0xff]
      %v199 = vld [vmem:[%s1 + $0xe0] sm:$0xff]
      %v200 = vld [vmem:[%s1 + $0xe8] sm:$0xff]
      %v201 = vld [vmem:[%s1 + $0xf0] sm:$0xff]
      %v202 = vld [vmem:[%s1 + $0xf8] sm:$0xff]
      %v203 = vld [vmem:[%s1 + $0x100] sm:$0xff]
      %v204 = vld [vmem:[%s1 + $0x108] sm:$0xff]
      %v205 = vld [vmem:[%s1 + $0x110] sm:$0xff]
      %v206 = vld [vmem:[%s1 + $0x118] sm:$0xff]
      %v207 = vld [vmem:[%s1 + $0x120] sm:$0xff]
      %v208 = vld [vmem:[%s1 + $0x128] sm:$0xff]
      %v209 = vld [vmem:[%s1 + $0x130] sm:$0xff]
      %v210 = vld [vmem:[%s1 + $0x138] sm:$0xff]
      %v211 = vld [vmem:[%s2] sm:$0xff]
      %v212 = vld [vmem:[%s2 + $0x8] sm:$0xff]
      %v213 = vld [vmem:[%s2 + $0x10] sm:$0xff]
      %v214 = vld [vmem:[%s2 + $0x18] sm:$0xff]
      %v215 = vld [vmem:[%s2 + $0x20] sm:$0xff]
      %v216 = vld [vmem:[%s2 + $0x28] sm:$0xff]
      %v217 = vld [vmem:[%s2 + $0x30] sm:$0xff]
      %v218 = vld [vmem:[%s2 + $0x38] sm:$0xff]
      %v219 = vld [vmem:[%s165] sm:$0xff]
      %v220 = vld [vmem:[%s165 + $0x10] sm:$0xff]
      %v221 = vld [vmem:[%s165 + $0x20] sm:$0xff]
      %v222 = vld [vmem:[%s165 + $0x30] sm:$0xff]
      %v223 = vld [vmem:[%s165 + $0x40] sm:$0xff]
      %v224 = vld [vmem:[%s165 + $0x50] sm:$0xff]
      %v225 = vld [vmem:[%s165 + $0x60] sm:$0xff]
      %v226 = vld [vmem:[%s165 + $0x70] sm:$0xff]
      %s227 = scalar_lea.vmem %s165, 128
      %v228 = vld [vmem:[%s227] sm:$0xff]
      %v229 = vld [vmem:[%s227 + $0x10] sm:$0xff]
      %v230 = vld [vmem:[%s227 + $0x20] sm:$0xff]
      %v231 = vld [vmem:[%s227 + $0x30] sm:$0xff]
      %v232 = vld [vmem:[%s227 + $0x40] sm:$0xff]
      %v233 = vld [vmem:[%s227 + $0x50] sm:$0xff]
      %v234 = vld [vmem:[%s227 + $0x60] sm:$0xff]
      %v235 = vld [vmem:[%s227 + $0x70] sm:$0xff]
      %v236 = vld [vmem:[%s165 + $0x8] sm:$0xff]
      %v237 = vld [vmem:[%s165 + $0x18] sm:$0xff]
      %v238 = vld [vmem:[%s165 + $0x28] sm:$0xff]
      %v239 = vld [vmem:[%s165 + $0x38] sm:$0xff]
      %v240 = vld [vmem:[%s165 + $0x48] sm:$0xff]
      %v241 = vld [vmem:[%s165 + $0x58] sm:$0xff]
      %v242 = vld [vmem:[%s165 + $0x68] sm:$0xff]
      %v243 = vld [vmem:[%s165 + $0x78] sm:$0xff]
      %s244 = scalar_lea.vmem %s165, 256
      %v245 = vld [vmem:[%s244] sm:$0xff]
      %v246 = vld [vmem:[%s244 + $0x10] sm:$0xff]
      %v247 = vld [vmem:[%s244 + $0x20] sm:$0xff]
      %v248 = vld [vmem:[%s244 + $0x30] sm:$0xff]
      %v249 = vld [vmem:[%s244 + $0x40] sm:$0xff]
      %v250 = vld [vmem:[%s244 + $0x50] sm:$0xff]
      %v251 = vld [vmem:[%s244 + $0x60] sm:$0xff]
      %v252 = vld [vmem:[%s244 + $0x70] sm:$0xff]
      %s253 = scalar_lea.vmem %s165, 384
      %v254 = vld [vmem:[%s253] sm:$0xff]
      %v255 = vld [vmem:[%s253 + $0x10] sm:$0xff]
      %v256 = vld [vmem:[%s253 + $0x20] sm:$0xff]
      %v257 = vld [vmem:[%s253 + $0x30] sm:$0xff]
      %v258 = vld [vmem:[%s253 + $0x40] sm:$0xff]
      %v259 = vld [vmem:[%s253 + $0x50] sm:$0xff]
      %v260 = vld [vmem:[%s253 + $0x60] sm:$0xff]
      %v261 = vld [vmem:[%s253 + $0x70] sm:$0xff]
      %v262 = vld [vmem:[%s244 + $0x8] sm:$0xff]
      %v263 = vld [vmem:[%s244 + $0x18] sm:$0xff]
      %v264 = vld [vmem:[%s244 + $0x28] sm:$0xff]
      %v265 = vld [vmem:[%s244 + $0x38] sm:$0xff]
      %v266 = vld [vmem:[%s244 + $0x48] sm:$0xff]
      %v267 = vld [vmem:[%s244 + $0x58] sm:$0xff]
      %v268 = vld [vmem:[%s244 + $0x68] sm:$0xff]
      %v269 = vld [vmem:[%s244 + $0x78] sm:$0xff]
      %v270 = vld [vmem:[%s227 + $0x8] sm:$0xff]
      %v271 = vld [vmem:[%s227 + $0x18] sm:$0xff]
      %v272 = vld [vmem:[%s227 + $0x28] sm:$0xff]
      %v273 = vld [vmem:[%s227 + $0x38] sm:$0xff]
      %v274 = vld [vmem:[%s227 + $0x48] sm:$0xff]
      %v275 = vld [vmem:[%s227 + $0x58] sm:$0xff]
      %v276 = vld [vmem:[%s227 + $0x68] sm:$0xff]
      %v277 = vld [vmem:[%s227 + $0x78] sm:$0xff]
      %294 = vrot.lane.b32.xlu0 %v219, 127
      %v295 = vpop.permute.xlu0 %294
      %296 = vrot.lane.b32.xlu0 %v236, 127
      %v297 = vpop.permute.xlu0 %296
      %298 = vrot.lane.b32.xlu0 %v220, 127
      %v299 = vpop.permute.xlu0 %298
      %300 = vrot.lane.b32.xlu0 %v237, 127
      %v301 = vpop.permute.xlu0 %300
      %302 = vrot.lane.b32.xlu0 %v221, 127
      %v303 = vpop.permute.xlu0 %302
      %304 = vrot.lane.b32.xlu0 %v238, 127
      %v305 = vpop.permute.xlu0 %304
      %306 = vrot.lane.b32.xlu0 %v222, 127
      %v307 = vpop.permute.xlu0 %306
      %308 = vrot.lane.b32.xlu0 %v239, 127
      %v309 = vpop.permute.xlu0 %308
      %310 = vrot.lane.b32.xlu0 %v223, 127
      %v311 = vpop.permute.xlu0 %310
      %312 = vrot.lane.b32.xlu0 %v240, 127
      %v313 = vpop.permute.xlu0 %312
      %314 = vrot.lane.b32.xlu0 %v224, 127
      %v315 = vpop.permute.xlu0 %314
      %316 = vrot.lane.b32.xlu0 %v241, 127
      %v317 = vpop.permute.xlu0 %316
      %318 = vrot.lane.b32.xlu0 %v225, 127
      %v319 = vpop.permute.xlu0 %318
      %320 = vrot.lane.b32.xlu0 %v242, 127
      %v321 = vpop.permute.xlu0 %320
      %322 = vrot.lane.b32.xlu0 %v226, 127
      %v323 = vpop.permute.xlu0 %322
      %324 = vrot.lane.b32.xlu0 %v243, 127
      %v325 = vpop.permute.xlu0 %324
      %vm326 = vcmask 1039360
      %v327 = vsel %vm326, %v295, %v297
      %v328 = vsel %vm326, %v299, %v301
      %v329 = vsel %vm326, %v303, %v305
      %v330 = vsel %vm326, %v307, %v309
      %v331 = vsel %vm326, %v311, %v313
      %v332 = vsel %vm326, %v315, %v317
      %v333 = vsel %vm326, %v319, %v321
      %v334 = vsel %vm326, %v323, %v325
      %359 = vrot.lane.b32.xlu0 %v245, 127
      %v360 = vpop.permute.xlu0 %359
      %361 = vrot.lane.b32.xlu0 %v262, 127
      %v362 = vpop.permute.xlu0 %361
      %363 = vrot.lane.b32.xlu0 %v246, 127
      %v364 = vpop.permute.xlu0 %363
      %365 = vrot.lane.b32.xlu0 %v263, 127
      %v366 = vpop.permute.xlu0 %365
      %367 = vrot.lane.b32.xlu0 %v247, 127
      %v368 = vpop.permute.xlu0 %367
      %369 = vrot.lane.b32.xlu0 %v264, 127
      %v370 = vpop.permute.xlu0 %369
      %371 = vrot.lane.b32.xlu0 %v248, 127
      %v372 = vpop.permute.xlu0 %371
      %373 = vrot.lane.b32.xlu0 %v265, 127
      %v374 = vpop.permute.xlu0 %373
      %375 = vrot.lane.b32.xlu0 %v249, 127
      %v376 = vpop.permute.xlu0 %375
      %377 = vrot.lane.b32.xlu0 %v266, 127
      %v378 = vpop.permute.xlu0 %377
      %379 = vrot.lane.b32.xlu0 %v250, 127
      %v380 = vpop.permute.xlu0 %379
      %381 = vrot.lane.b32.xlu0 %v267, 127
      %v382 = vpop.permute.xlu0 %381
      %383 = vrot.lane.b32.xlu0 %v251, 127
      %v384 = vpop.permute.xlu0 %383
      %385 = vrot.lane.b32.xlu0 %v268, 127
      %v386 = vpop.permute.xlu0 %385
      %387 = vrot.lane.b32.xlu0 %v252, 127
      %v388 = vpop.permute.xlu0 %387
      %389 = vrot.lane.b32.xlu0 %v269, 127
      %v390 = vpop.permute.xlu0 %389
      %v391 = vsel %vm326, %v360, %v362
      %v392 = vsel %vm326, %v364, %v366
      %v393 = vsel %vm326, %v368, %v370
      %v394 = vsel %vm326, %v372, %v374
      %v395 = vsel %vm326, %v376, %v378
      %v396 = vsel %vm326, %v380, %v382
      %v397 = vsel %vm326, %v384, %v386
      %v398 = vsel %vm326, %v388, %v390
      %407 = vrot.lane.b32.xlu0 %v219, 125
      %v408 = vpop.permute.xlu0 %407
      %409 = vrot.lane.b32.xlu0 %v236, 125
      %v410 = vpop.permute.xlu0 %409
      %411 = vrot.lane.b32.xlu0 %v220, 125
      %v412 = vpop.permute.xlu0 %411
      %413 = vrot.lane.b32.xlu0 %v237, 125
      %v414 = vpop.permute.xlu0 %413
      %415 = vrot.lane.b32.xlu0 %v221, 125
      %v416 = vpop.permute.xlu0 %415
      %417 = vrot.lane.b32.xlu0 %v238, 125
      %v418 = vpop.permute.xlu0 %417
      %419 = vrot.lane.b32.xlu0 %v222, 125
      %v420 = vpop.permute.xlu0 %419
      %421 = vrot.lane.b32.xlu0 %v239, 125
      %v422 = vpop.permute.xlu0 %421
      %423 = vrot.lane.b32.xlu0 %v223, 125
      %v424 = vpop.permute.xlu0 %423
      %425 = vrot.lane.b32.xlu0 %v240, 125
      %v426 = vpop.permute.xlu0 %425
      %427 = vrot.lane.b32.xlu0 %v224, 125
      %v428 = vpop.permute.xlu0 %427
      %429 = vrot.lane.b32.xlu0 %v241, 125
      %v430 = vpop.permute.xlu0 %429
      %431 = vrot.lane.b32.xlu0 %v225, 125
      %v432 = vpop.permute.xlu0 %431
      %433 = vrot.lane.b32.xlu0 %v242, 125
      %v434 = vpop.permute.xlu0 %433
      %435 = vrot.lane.b32.xlu0 %v226, 125
      %v436 = vpop.permute.xlu0 %435
      %437 = vrot.lane.b32.xlu0 %v243, 125
      %v438 = vpop.permute.xlu0 %437
      %vm439 = vcmask 1022976
      %v440 = vsel %vm439, %v408, %v410
      %v441 = vsel %vm439, %v412, %v414
      %v442 = vsel %vm439, %v416, %v418
      %v443 = vsel %vm439, %v420, %v422
      %v444 = vsel %vm439, %v424, %v426
      %v445 = vsel %vm439, %v428, %v430
      %v446 = vsel %vm439, %v432, %v434
      %v447 = vsel %vm439, %v436, %v438
      %472 = vrot.lane.b32.xlu0 %v228, 125
      %v473 = vpop.permute.xlu0 %472
      %474 = vrot.lane.b32.xlu0 %v270, 125
      %v475 = vpop.permute.xlu0 %474
      %476 = vrot.lane.b32.xlu0 %v229, 125
      %v477 = vpop.permute.xlu0 %476
      %478 = vrot.lane.b32.xlu0 %v271, 125
      %v479 = vpop.permute.xlu0 %478
      %480 = vrot.lane.b32.xlu0 %v230, 125
      %v481 = vpop.permute.xlu0 %480
      %482 = vrot.lane.b32.xlu0 %v272, 125
      %v483 = vpop.permute.xlu0 %482
      %484 = vrot.lane.b32.xlu0 %v231, 125
      %v485 = vpop.permute.xlu0 %484
      %486 = vrot.lane.b32.xlu0 %v273, 125
      %v487 = vpop.permute.xlu0 %486
      %488 = vrot.lane.b32.xlu0 %v232, 125
      %v489 = vpop.permute.xlu0 %488
      %490 = vrot.lane.b32.xlu0 %v274, 125
      %v491 = vpop.permute.xlu0 %490
      %492 = vrot.lane.b32.xlu0 %v233, 125
      %v493 = vpop.permute.xlu0 %492
      %494 = vrot.lane.b32.xlu0 %v275, 125
      %v495 = vpop.permute.xlu0 %494
      %496 = vrot.lane.b32.xlu0 %v234, 125
      %v497 = vpop.permute.xlu0 %496
      %498 = vrot.lane.b32.xlu0 %v276, 125
      %v499 = vpop.permute.xlu0 %498
      %500 = vrot.lane.b32.xlu0 %v235, 125
      %v501 = vpop.permute.xlu0 %500
      %502 = vrot.lane.b32.xlu0 %v277, 125
      %v503 = vpop.permute.xlu0 %502
      %v504 = vsel %vm439, %v473, %v475
      %v505 = vsel %vm439, %v477, %v479
      %v506 = vsel %vm439, %v481, %v483
      %v507 = vsel %vm439, %v485, %v487
      %v508 = vsel %vm439, %v489, %v491
      %v509 = vsel %vm439, %v493, %v495
      %v510 = vsel %vm439, %v497, %v499
      %v511 = vsel %vm439, %v501, %v503
      %520 = vrot.lane.b32.xlu0 %v219, 124
      %v521 = vpop.permute.xlu0 %520
      %522 = vrot.lane.b32.xlu0 %v236, 124
      %v523 = vpop.permute.xlu0 %522
      %524 = vrot.lane.b32.xlu0 %v220, 124
      %v525 = vpop.permute.xlu0 %524
      %526 = vrot.lane.b32.xlu0 %v237, 124
      %v527 = vpop.permute.xlu0 %526
      %528 = vrot.lane.b32.xlu0 %v221, 124
      %v529 = vpop.permute.xlu0 %528
      %530 = vrot.lane.b32.xlu0 %v238, 124
      %v531 = vpop.permute.xlu0 %530
      %532 = vrot.lane.b32.xlu0 %v222, 124
      %v533 = vpop.permute.xlu0 %532
      %534 = vrot.lane.b32.xlu0 %v239, 124
      %v535 = vpop.permute.xlu0 %534
      %536 = vrot.lane.b32.xlu0 %v223, 124
      %v537 = vpop.permute.xlu0 %536
      %538 = vrot.lane.b32.xlu0 %v240, 124
      %v539 = vpop.permute.xlu0 %538
      %540 = vrot.lane.b32.xlu0 %v224, 124
      %v541 = vpop.permute.xlu0 %540
      %542 = vrot.lane.b32.xlu0 %v241, 124
      %v543 = vpop.permute.xlu0 %542
      %544 = vrot.lane.b32.xlu0 %v225, 124
      %v545 = vpop.permute.xlu0 %544
      %546 = vrot.lane.b32.xlu0 %v242, 124
      %v547 = vpop.permute.xlu0 %546
      %548 = vrot.lane.b32.xlu0 %v226, 124
      %v549 = vpop.permute.xlu0 %548
      %550 = vrot.lane.b32.xlu0 %v243, 124
      %v551 = vpop.permute.xlu0 %550
      %vm552 = vcmask 1014784
      %v553 = vsel %vm552, %v521, %v523
      %v554 = vsel %vm552, %v525, %v527
      %v555 = vsel %vm552, %v529, %v531
      %v556 = vsel %vm552, %v533, %v535
      %v557 = vsel %vm552, %v537, %v539
      %v558 = vsel %vm552, %v541, %v543
      %v559 = vsel %vm552, %v545, %v547
      %v560 = vsel %vm552, %v549, %v551
      %570 = vset.pattern.permute.xlu0 0
      %571 = vperm.xlu0 %570, %v211
      %v572 = vpop.permute.xlu0 %571
      %575 = vset.pattern.permute.xlu0 0
      %576 = vperm.xlu0 %575, %v212
      %v577 = vpop.permute.xlu0 %576
      %580 = vset.pattern.permute.xlu0 0
      %581 = vperm.xlu0 %580, %v213
      %v582 = vpop.permute.xlu0 %581
      %585 = vset.pattern.permute.xlu0 0
      %586 = vperm.xlu0 %585, %v214
      %v587 = vpop.permute.xlu0 %586
      %590 = vset.pattern.permute.xlu0 0
      %591 = vperm.xlu0 %590, %v215
      %v592 = vpop.permute.xlu0 %591
      %595 = vset.pattern.permute.xlu0 0
      %596 = vperm.xlu0 %595, %v216
      %v597 = vpop.permute.xlu0 %596
      %600 = vset.pattern.permute.xlu0 0
      %601 = vperm.xlu0 %600, %v217
      %v602 = vpop.permute.xlu0 %601
      %605 = vset.pattern.permute.xlu0 0
      %606 = vperm.xlu0 %605, %v218
      %v607 = vpop.permute.xlu0 %606
      %vm609 = vcmask 523264
      %v611 = vsel %vm609, %v175, 0
      %v614 = vsel %vm609, %v180, 0
      %v617 = vsel %vm609, %v185, 0
      %v620 = vsel %vm609, %v190, 0
      %v623 = vsel %vm609, %v195, 0
      %v626 = vsel %vm609, %v200, 0
      %v629 = vsel %vm609, %v205, 0
      %v632 = vsel %vm609, %v210, 0
      %634 = vmatpush.msra.mxu0 %v235
      %635 = vmatpush.msra.mxu0 %v234
      %636 = vmatpush.msra.mxu0 %v233
      %637 = vmatpush.msra.mxu0 %v232
      %638 = vmatpush.msra.mxu0 %v231
      %639 = vmatpush.msra.mxu0 %v230
      %640 = vmatpush.msra.mxu0 %v229
      %641 = vmatpush.msra.mxu0 %v228
      %642 = vmatpush.msra.mxu0 %v226
      %643 = vmatpush.msra.mxu0 %v225
      %644 = vmatpush.msra.mxu0 %v224
      %645 = vmatpush.msra.mxu0 %v223
      %646 = vmatpush.msra.mxu0 %v222
      %647 = vmatpush.msra.mxu0 %v221
      %648 = vmatpush.msra.mxu0 %v220
      %649 = vmatpush.msra.mxu0 %v219
      %650 = vmatmul.f32.gmra.mxu0 %v171
      %v651 = vpop.f32.mrf.mxu0
      %v652 = vadd.f32 %v572, %v651
      %653 = vmatmul.f32.gmra.mxu0 %v176
      %v654 = vpop.f32.mrf.mxu0
      %v655 = vadd.f32 %v577, %v654
      %656 = vmatmul.f32.gmra.mxu0 %v181
      %v657 = vpop.f32.mrf.mxu0
      %v658 = vadd.f32 %v582, %v657
      %659 = vmatmul.f32.gmra.mxu0 %v186
      %v660 = vpop.f32.mrf.mxu0
      %v661 = vadd.f32 %v587, %v660
      %662 = vmatmul.f32.gmra.mxu0 %v191
      %v663 = vpop.f32.mrf.mxu0
      %v664 = vadd.f32 %v592, %v663
      %665 = vmatmul.f32.gmra.mxu0 %v196
      %v666 = vpop.f32.mrf.mxu0
      %v667 = vadd.f32 %v597, %v666
      %668 = vmatmul.f32.gmra.mxu0 %v201
      %v669 = vpop.f32.mrf.mxu0
      %v670 = vadd.f32 %v602, %v669
      %671 = vmatmul.f32.gmra.mxu0 %v206
      %v672 = vpop.f32.mrf.mxu0
      %v673 = vadd.f32 %v607, %v672
      %674 = vdwg.mxu0
      %675 = vmatpush.msra.mxu0 %v252
      %676 = vmatpush.msra.mxu0 %v251
      %677 = vmatpush.msra.mxu0 %v250
      %678 = vmatpush.msra.mxu0 %v249
      %679 = vmatpush.msra.mxu0 %v248
      %680 = vmatpush.msra.mxu0 %v247
      %681 = vmatpush.msra.mxu0 %v246
      %682 = vmatpush.msra.mxu0 %v245
      %683 = vmatpush.msra.mxu0 %v334
      %684 = vmatpush.msra.mxu0 %v333
      %685 = vmatpush.msra.mxu0 %v332
      %686 = vmatpush.msra.mxu0 %v331
      %687 = vmatpush.msra.mxu0 %v330
      %688 = vmatpush.msra.mxu0 %v329
      %689 = vmatpush.msra.mxu0 %v328
      %690 = vmatpush.msra.mxu0 %v327
      %691 = vmatmul.f32.gmra.mxu0 %v172
      %v692 = vpop.f32.mrf.mxu0
      %v693 = vadd.f32 %v652, %v692
      %694 = vmatmul.f32.gmra.mxu0 %v177
      %v695 = vpop.f32.mrf.mxu0
      %v696 = vadd.f32 %v655, %v695
      %697 = vmatmul.f32.gmra.mxu0 %v182
      %v698 = vpop.f32.mrf.mxu0
      %v699 = vadd.f32 %v658, %v698
      %700 = vmatmul.f32.gmra.mxu0 %v187
      %v701 = vpop.f32.mrf.mxu0
      %v702 = vadd.f32 %v661, %v701
      %703 = vmatmul.f32.gmra.mxu0 %v192
      %v704 = vpop.f32.mrf.mxu0
      %v705 = vadd.f32 %v664, %v704
      %706 = vmatmul.f32.gmra.mxu0 %v197
      %v707 = vpop.f32.mrf.mxu0
      %v708 = vadd.f32 %v667, %v707
      %709 = vmatmul.f32.gmra.mxu0 %v202
      %v710 = vpop.f32.mrf.mxu0
      %v711 = vadd.f32 %v670, %v710
      %712 = vmatmul.f32.gmra.mxu0 %v207
      %v713 = vpop.f32.mrf.mxu0
      %v714 = vadd.f32 %v673, %v713
      %715 = vdwg.mxu0
      %716 = vmatpush.msra.mxu0 %v398
      %717 = vmatpush.msra.mxu0 %v397
      %718 = vmatpush.msra.mxu0 %v396
      %719 = vmatpush.msra.mxu0 %v395
      %720 = vmatpush.msra.mxu0 %v394
      %721 = vmatpush.msra.mxu0 %v393
      %722 = vmatpush.msra.mxu0 %v392
      %723 = vmatpush.msra.mxu0 %v391
      %724 = vmatpush.msra.mxu0 %v261
      %725 = vmatpush.msra.mxu0 %v260
      %726 = vmatpush.msra.mxu0 %v259
      %727 = vmatpush.msra.mxu0 %v258
      %728 = vmatpush.msra.mxu0 %v257
      %729 = vmatpush.msra.mxu0 %v256
      %730 = vmatpush.msra.mxu0 %v255
      %731 = vmatpush.msra.mxu0 %v254
      %732 = vmatmul.f32.gmra.mxu0 %v173
      %v733 = vpop.f32.mrf.mxu0
      %v734 = vadd.f32 %v693, %v733
      %735 = vmatmul.f32.gmra.mxu0 %v178
      %v736 = vpop.f32.mrf.mxu0
      %v737 = vadd.f32 %v696, %v736
      %738 = vmatmul.f32.gmra.mxu0 %v183
      %v739 = vpop.f32.mrf.mxu0
      %v740 = vadd.f32 %v699, %v739
      %741 = vmatmul.f32.gmra.mxu0 %v188
      %v742 = vpop.f32.mrf.mxu0
      %v743 = vadd.f32 %v702, %v742
      %744 = vmatmul.f32.gmra.mxu0 %v193
      %v745 = vpop.f32.mrf.mxu0
      %v746 = vadd.f32 %v705, %v745
      %747 = vmatmul.f32.gmra.mxu0 %v198
      %v748 = vpop.f32.mrf.mxu0
      %v749 = vadd.f32 %v708, %v748
      %750 = vmatmul.f32.gmra.mxu0 %v203
      %v751 = vpop.f32.mrf.mxu0
      %v752 = vadd.f32 %v711, %v751
      %753 = vmatmul.f32.gmra.mxu0 %v208
      %v754 = vpop.f32.mrf.mxu0
      %v755 = vadd.f32 %v714, %v754
      %756 = vdwg.mxu0
      %757 = vmatpush.msra.mxu0 %v511
      %758 = vmatpush.msra.mxu0 %v510
      %759 = vmatpush.msra.mxu0 %v509
      %760 = vmatpush.msra.mxu0 %v508
      %761 = vmatpush.msra.mxu0 %v507
      %762 = vmatpush.msra.mxu0 %v506
      %763 = vmatpush.msra.mxu0 %v505
      %764 = vmatpush.msra.mxu0 %v504
      %765 = vmatpush.msra.mxu0 %v447
      %766 = vmatpush.msra.mxu0 %v446
      %767 = vmatpush.msra.mxu0 %v445
      %768 = vmatpush.msra.mxu0 %v444
      %769 = vmatpush.msra.mxu0 %v443
      %770 = vmatpush.msra.mxu0 %v442
      %771 = vmatpush.msra.mxu0 %v441
      %772 = vmatpush.msra.mxu0 %v440
      %773 = vmatmul.f32.gmra.mxu0 %v174
      %v774 = vpop.f32.mrf.mxu0
      %v775 = vadd.f32 %v734, %v774
      %776 = vmatmul.f32.gmra.mxu0 %v179
      %v777 = vpop.f32.mrf.mxu0
      %v778 = vadd.f32 %v737, %v777
      %779 = vmatmul.f32.gmra.mxu0 %v184
      %v780 = vpop.f32.mrf.mxu0
      %v781 = vadd.f32 %v740, %v780
      %782 = vmatmul.f32.gmra.mxu0 %v189
      %v783 = vpop.f32.mrf.mxu0
      %v784 = vadd.f32 %v743, %v783
      %785 = vmatmul.f32.gmra.mxu0 %v194
      %v786 = vpop.f32.mrf.mxu0
      %v787 = vadd.f32 %v746, %v786
      %788 = vmatmul.f32.gmra.mxu0 %v199
      %v789 = vpop.f32.mrf.mxu0
      %v790 = vadd.f32 %v749, %v789
      %791 = vmatmul.f32.gmra.mxu0 %v204
      %v792 = vpop.f32.mrf.mxu0
      %v793 = vadd.f32 %v752, %v792
      %794 = vmatmul.f32.gmra.mxu0 %v209
      %v795 = vpop.f32.mrf.mxu0
      %v796 = vadd.f32 %v755, %v795
      %797 = vdwg.mxu0
      %798 = vmatpush.msra.mxu0 0.0
      %799 = vmatpush.msra.mxu0 0.0
      %800 = vmatpush.msra.mxu0 0.0
      %801 = vmatpush.msra.mxu0 0.0
      %802 = vmatpush.msra.mxu0 0.0
      %803 = vmatpush.msra.mxu0 0.0
      %804 = vmatpush.msra.mxu0 0.0
      %805 = vmatpush.msra.mxu0 0.0
      %806 = vmatpush.msra.mxu0 %v560
      %807 = vmatpush.msra.mxu0 %v559
      %808 = vmatpush.msra.mxu0 %v558
      %809 = vmatpush.msra.mxu0 %v557
      %810 = vmatpush.msra.mxu0 %v556
      %811 = vmatpush.msra.mxu0 %v555
      %812 = vmatpush.msra.mxu0 %v554
      %813 = vmatpush.msra.mxu0 %v553
      %814 = vmatmul.f32.gmra.mxu0 %v611
      %v815 = vpop.f32.mrf.mxu0
      %v816 = vadd.f32 %v775, %v815
      %817 = vmatmul.f32.gmra.mxu0 %v614
      %v818 = vpop.f32.mrf.mxu0
      %v819 = vadd.f32 %v778, %v818
      %820 = vmatmul.f32.gmra.mxu0 %v617
      %v821 = vpop.f32.mrf.mxu0
      %v822 = vadd.f32 %v781, %v821
      %823 = vmatmul.f32.gmra.mxu0 %v620
      %v824 = vpop.f32.mrf.mxu0
      %v825 = vadd.f32 %v784, %v824
      %826 = vmatmul.f32.gmra.mxu0 %v623
      %v827 = vpop.f32.mrf.mxu0
      %v828 = vadd.f32 %v787, %v827
      %829 = vmatmul.f32.gmra.mxu0 %v626
      %v830 = vpop.f32.mrf.mxu0
      %v831 = vadd.f32 %v790, %v830
      %832 = vmatmul.f32.gmra.mxu0 %v629
      %v833 = vpop.f32.mrf.mxu0
      %v834 = vadd.f32 %v793, %v833
      %835 = vmatmul.f32.gmra.mxu0 %v632
      %v836 = vpop.f32.mrf.mxu0
      %v837 = vadd.f32 %v796, %v836
      %838 = vdwg.mxu0
      %v839 = vmax.f32 %v816, 0.0
      %v840 = vmax.f32 %v819, 0.0
      %v841 = vmax.f32 %v822, 0.0
      %v842 = vmax.f32 %v825, 0.0
      %v843 = vmax.f32 %v828, 0.0
      %v844 = vmax.f32 %v831, 0.0
      %v845 = vmax.f32 %v834, 0.0
      %v846 = vmax.f32 %v837, 0.0
      %847 = vst [vmem:[%s170] sm:$0xff] %v839
      %848 = vst [vmem:[%s170 + $0x8] sm:$0xff] %v840
      %849 = vst [vmem:[%s170 + $0x10] sm:$0xff] %v841
      %850 = vst [vmem:[%s170 + $0x18] sm:$0xff] %v842
      %851 = vst [vmem:[%s170 + $0x20] sm:$0xff] %v843
      %852 = vst [vmem:[%s170 + $0x28] sm:$0xff] %v844
      %853 = vst [vmem:[%s170 + $0x30] sm:$0xff] %v845
      %854 = vst [vmem:[%s170 + $0x38] sm:$0xff] %v846
      %p855 = scmp.lt.s32.totalorder %s14, 1
      %s856 = scalar_select %p855, %s14, 1
      %s857 = smul.addr %s856, 8
      %s858 = smul.addr %s857, 8
      %s859 = scalar_lea.vmem %s3, %s858
      // Predicated region
      $region33: #{barlow_twins_encoder_forward.7} parent=31 // pred_check
        %p860 = pneg %p100
      $region34: #{barlow_twins_encoder_forward.7} parent=31 // pred_check_branch
        %862 = sbr.rel (%p860) target = $region36
      $region35: #{barlow_twins_encoder_forward.7} parent=31 // pred_region
        _
      $region36: #{barlow_twins_encoder_forward.7} parent=31 // pred_fallthru
        _
    $region32: #{barlow_twins_encoder_forward.7} parent=5 // pred_fallthru
      _
    %p863 = scmp.le.s32.totalorder 2, %s9
    // Predicated region
    $region37: #{barlow_twins_encoder_forward.7} parent=5 // pred_check
      %p864 = pneg %p863
    $region38: #{barlow_twins_encoder_forward.7} parent=5 // pred_check_branch
      %866 = sbr.rel (%p864) target = $region40
    $region39: #{barlow_twins_encoder_forward.7} parent=5 // pred_region
      %s867 = ssub.s32 %s9, 2
      // Predicated region
      $region41: #{barlow_twins_encoder_forward.7} parent=39 // pred_check
        %p868 = pneg %p106
      $region42: #{barlow_twins_encoder_forward.7} parent=39 // pred_check_branch
        %870 = sbr.rel (%p868) target = $region44
      $region43: #{barlow_twins_encoder_forward.7} parent=39 // pred_region
        %p871 = scmp.lt.s32.totalorder %s15, 1
        %s872 = scalar_select %p871, %s15, 1
        %s873 = smul.addr %s872, 8
        %s874 = smul.addr %s873, 8
        %s875 = scalar_lea.vmem %s3, %s874
      $region44: #{barlow_twins_encoder_forward.7} parent=39 // pred_fallthru
        _
    $region40: #{barlow_twins_encoder_forward.7} parent=5 // pred_fallthru
      _
  $region6: #{barlow_twins_encoder_forward.7} parent=0 // loop_footer
    %s13 = sadd.s32 1, %s9
  $region7: #{barlow_twins_encoder_forward.7} parent=0 // loop_footer_branch
    %8 = sbr.rel target = $region3
  $region8: #{barlow_twins_encoder_forward.7} parent=0 // loop_exit
    _

// kernel: barlow_twins_encoder_forward.8
$region0: #{barlow_twins_encoder_forward.8}
  #allocation0 [shape = 'u32[]', space=smem, size = 0x4, offset = 0x4, fixed_abs, tag = 'smem constant byte address 0x4 - core index']
  #allocation1 [shape = 'u32[72,128]{1,0:T(1,128)}', space=vmem, size = 0x9000, scoped, tag = 'internal scratch']
  %s0 = inlined_call_operand.vmem [shape: f32[2,1,64,256], index: 0, kind: input, shape index: {}]
  %s1 = inlined_call_operand.vmem [shape: f32[64,576], index: 1, kind: input, shape index: {}]
  %s2 = inlined_call_operand.vmem [shape: f32[64,1], index: 2, kind: input, shape index: {}]
  %s3 = inlined_call_operand.vmem [shape: f32[2,64,128], index: 3, kind: output, shape index: {}]
  %s4 = sld [smem:[#allocation0]]
  $region45: #{barlow_twins_encoder_forward.8} parent=0
    _
  %s6 = ssub.s32 1, %s4
  %s7 = scalar_select 0, %s6, %s4
  loop: start=0, step=1, limit=4
  $region2: #{barlow_twins_encoder_forward.8} parent=0 // loop_pre_header
    _
  $region3: #{barlow_twins_encoder_forward.8} parent=0 // loop_header
    %s9 = sphi 0, %s13
    %p10 = scmp.ge.s32.totalorder %s9, 4
    %s19 = sphi 0, %s21
    %s22 = sphi 0, %s19
    %s23 = sphi 0, %s22
    %s39 = sphi 0, %s23
    %s43 = sphi 0, %s43
    %s45 = sphi 0, %s43
    %s46 = sphi 0, %s45
    %s60 = sphi 0, %s46
    %s64 = sphi 0, %s64
    %s66 = sphi 0, %s64
    %s67 = sphi 0, %s66
    %s81 = sphi 0, %s67
    %s87 = sphi 0, %s89
    %s90 = sphi 0, %s87
    %s91 = sphi 0, %s90
    %s107 = sphi 0, %s91
  $region4: #{barlow_twins_encoder_forward.8} parent=0 // loop_header_branch
    %12 = sbr.rel (%p10) target = $region8
  $region5: #{barlow_twins_encoder_forward.8} parent=0 // loop_body
    %s14 = ssub.s32 %s9, 1
    %s15 = ssub.s32 %s9, 2
    %s16 = sadd.s32 %s9, 1
    %s17 = ssub.s32 %s9, %s16
    %p18 = scmp.eq.s32.totalorder %s17, 0
    %s20 = sadd.s32 %s19, 1
    %s21 = scalar_select %p18, %s19, %s20
    %p24 = pneg %p18
    %p25 = scmp.eq.s32.totalorder %s9, 1
    %p26 = por %p24, %p25
    %p27 = scmp.ne.s32.totalorder %s19, %s22
    %p28 = scmp.eq.s32.totalorder %s9, 0
    %p29 = por %p27, %p28
    %p30 = scmp.ne.s32.totalorder %s19, %s22
    %p31 = scmp.eq.s32.totalorder %s14, 1
    %p32 = por %p30, %p31
    %p33 = scmp.ne.s32.totalorder %s22, %s23
    %p34 = scmp.eq.s32.totalorder %s14, 0
    %p35 = por %p33, %p34
    %p36 = scmp.ne.s32.totalorder %s22, %s23
    %p37 = scmp.eq.s32.totalorder %s15, 1
    %p38 = por %p36, %p37
    %p40 = scmp.ne.s32.totalorder %s23, %s39
    %p41 = scmp.eq.s32.totalorder %s15, 0
    %p42 = por %p40, %p41
    %s44 = sadd.s32 %s43, 1
    %p47 = scmp.eq.s32.totalorder %s9, 1
    %p48 = scmp.ne.s32.totalorder %s43, %s45
    %p49 = scmp.eq.s32.totalorder %s9, 0
    %p50 = por %p48, %p49
    %p51 = scmp.ne.s32.totalorder %s43, %s45
    %p52 = scmp.eq.s32.totalorder %s14, 1
    %p53 = por %p51, %p52
    %p54 = scmp.ne.s32.totalorder %s45, %s46
    %p55 = scmp.eq.s32.totalorder %s14, 0
    %p56 = por %p54, %p55
    %p57 = scmp.ne.s32.totalorder %s45, %s46
    %p58 = scmp.eq.s32.totalorder %s15, 1
    %p59 = por %p57, %p58
    %p61 = scmp.ne.s32.totalorder %s46, %s60
    %p62 = scmp.eq.s32.totalorder %s15, 0
    %p63 = por %p61, %p62
    %s65 = sadd.s32 %s64, 1
    %p68 = scmp.eq.s32.totalorder %s9, 1
    %p69 = scmp.ne.s32.totalorder %s64, %s66
    %p70 = scmp.eq.s32.totalorder %s9, 0
    %p71 = por %p69, %p70
    %p72 = scmp.ne.s32.totalorder %s64, %s66
    %p73 = scmp.eq.s32.totalorder %s14, 1
    %p74 = por %p72, %p73
    %p75 = scmp.ne.s32.totalorder %s66, %s67
    %p76 = scmp.eq.s32.totalorder %s14, 0
    %p77 = por %p75, %p76
    %p78 = scmp.ne.s32.totalorder %s66, %s67
    %p79 = scmp.eq.s32.totalorder %s15, 1
    %p80 = por %p78, %p79
    %p82 = scmp.ne.s32.totalorder %s67, %s81
    %p83 = scmp.eq.s32.totalorder %s15, 0
    %p84 = por %p82, %p83
    %s85 = ssub.s32 %s9, %s16
    %p86 = scmp.eq.s32.totalorder %s85, 0
    %s88 = sadd.s32 %s87, 1
    %s89 = scalar_select %p86, %s87, %s88
    %p92 = pneg %p86
    %p93 = scmp.eq.s32.totalorder %s9, 1
    %p94 = por %p92, %p93
    %p95 = scmp.ne.s32.totalorder %s87, %s90
    %p96 = scmp.eq.s32.totalorder %s9, 0
    %p97 = por %p95, %p96
    %p98 = scmp.ne.s32.totalorder %s87, %s90
    %p99 = scmp.eq.s32.totalorder %s14, 1
    %p100 = por %p98, %p99
    %p101 = scmp.ne.s32.totalorder %s90, %s91
    %p102 = scmp.eq.s32.totalorder %s14, 0
    %p103 = por %p101, %p102
    %p104 = scmp.ne.s32.totalorder %s90, %s91
    %p105 = scmp.eq.s32.totalorder %s15, 1
    %p106 = por %p104, %p105
    %p108 = scmp.ne.s32.totalorder %s91, %s107
    %p109 = scmp.eq.s32.totalorder %s15, 0
    %p110 = por %p108, %p109
    %p111 = scmp.le.s32.totalorder 1, %s9
    %p112 = scmp.lt.s32.totalorder %s9, 3
    %p113 = pnand %p111, %p112
    %p114 = pneg %p113
    // Predicated region
    $region9: #{barlow_twins_encoder_forward.8} parent=5 // pred_check
      _
    $region10: #{barlow_twins_encoder_forward.8} parent=5 // pred_check_branch
      %116 = sbr.rel (%p113) target = $region12
    $region11: #{barlow_twins_encoder_forward.8} parent=5 // pred_region
      %s117 = ssub.s32 %s9, 1
      // Predicated region
      $region13: #{barlow_twins_encoder_forward.8} parent=11 // pred_check
        %p118 = pneg %p56
      $region14: #{barlow_twins_encoder_forward.8} parent=11 // pred_check_branch
        %120 = sbr.rel (%p118) target = $region16
      $region15: #{barlow_twins_encoder_forward.8} parent=11 // pred_region
        _
      $region16: #{barlow_twins_encoder_forward.8} parent=11 // pred_fallthru
        _
      // Predicated region
      $region17: #{barlow_twins_encoder_forward.8} parent=11 // pred_check
        %p121 = pneg %p77
      $region18: #{barlow_twins_encoder_forward.8} parent=11 // pred_check_branch
        %123 = sbr.rel (%p121) target = $region20
      $region19: #{barlow_twins_encoder_forward.8} parent=11 // pred_region
        _
      $region20: #{barlow_twins_encoder_forward.8} parent=11 // pred_fallthru
        _
    $region12: #{barlow_twins_encoder_forward.8} parent=5 // pred_fallthru
      _
    %p124 = scmp.lt.s32.totalorder %s9, 2
    // Predicated region
    $region21: #{barlow_twins_encoder_forward.8} parent=5 // pred_check
      %p125 = pneg %p124
    $region22: #{barlow_twins_encoder_forward.8} parent=5 // pred_check_branch
      %127 = sbr.rel (%p125) target = $region24
    $region23: #{barlow_twins_encoder_forward.8} parent=5 // pred_region
      // Predicated region
      $region25: #{barlow_twins_encoder_forward.8} parent=23 // pred_check
        %p128 = pneg %p29
      $region26: #{barlow_twins_encoder_forward.8} parent=23 // pred_check_branch
        %130 = sbr.rel (%p128) target = $region28
      $region27: #{barlow_twins_encoder_forward.8} parent=23 // pred_region
        %p131 = scmp.lt.s32.totalorder %s9, 1
        %s132 = scalar_select %p131, %s9, 1
        %s133 = smul.addr %s132, 16
        %s134 = smul.addr %s133, 8
        %s135 = scalar_lea.vmem %s0, %s134
      $region28: #{barlow_twins_encoder_forward.8} parent=23 // pred_fallthru
        _
    $region24: #{barlow_twins_encoder_forward.8} parent=5 // pred_fallthru
      _
    %p136 = scmp.le.s32.totalorder 1, %s9
    %p137 = scmp.lt.s32.totalorder %s9, 3
    %p138 = pnand %p136, %p137
    %p139 = pneg %p138
    // Predicated region
    $region29: #{barlow_twins_encoder_forward.8} parent=5 // pred_check
      _
    $region30: #{barlow_twins_encoder_forward.8} parent=5 // pred_check_branch
      %141 = sbr.rel (%p138) target = $region32
    $region31: #{barlow_twins_encoder_forward.8} parent=5 // pred_region
      %s142 = ssub.s32 %s9, 1
      %p143 = scmp.lt.s32.totalorder %s14, 1
      %s144 = scalar_select %p143, %s14, 1
      %s145 = smul.addr %s144, 16
      %s146 = smul.addr %s145, 8
      %s147 = scalar_lea.vmem %s0, %s146
      %p148 = pneg %p35
      %p149 = pneg %p32
      %p150 = pneg %p56
      %p151 = pneg %p53
      %p152 = pneg %p77
      %p153 = pneg %p74
      %p154 = pneg %p103
      %p155 = pneg %p100
      %p156 = scmp.lt.s32.totalorder %s14, 1
      %s157 = scalar_select %p156, %s14, 1
      %s158 = smul.addr %s157, 8
      %s159 = smul.addr %s158, 8
      %s160 = scalar_lea.vmem %s3, %s159
      %p161 = scmp.lt.s32.totalorder %s14, 1
      %s162 = scalar_select %p161, %s14, 1
      %s163 = smul.addr %s162, 16
      %s164 = smul.addr %s163, 8
      %s165 = scalar_lea.vmem %s0, %s164
      %p166 = scmp.lt.s32.totalorder %s14, 1
      %s167 = scalar_select %p166, %s14, 1
      %s168 = smul.addr %s167, 8
      %s169 = smul.addr %s168, 8
      %s170 = scalar_lea.vmem %s3, %s169
      %v171 = vld [vmem:[%s1] sm:$0xff]
      %v172 = vld [vmem:[%s1 + $0x8] sm:$0xff]
      %v173 = vld [vmem:[%s1 + $0x10] sm:$0xff]
      %v174 = vld [vmem:[%s1 + $0x18] sm:$0xff]
      %v175 = vld [vmem:[%s1 + $0x20] sm:$0xff]
      %v176 = vld [vmem:[%s1 + $0x28] sm:$0xff]
      %v177 = vld [vmem:[%s1 + $0x30] sm:$0xff]
      %v178 = vld [vmem:[%s1 + $0x38] sm:$0xff]
      %v179 = vld [vmem:[%s1 + $0x40] sm:$0xff]
      %v180 = vld [vmem:[%s1 + $0x48] sm:$0xff]
      %v181 = vld [vmem:[%s1 + $0x50] sm:$0xff]
      %v182 = vld [vmem:[%s1 + $0x58] sm:$0xff]
      %v183 = vld [vmem:[%s1 + $0x60] sm:$0xff]
      %v184 = vld [vmem:[%s1 + $0x68] sm:$0xff]
      %v185 = vld [vmem:[%s1 + $0x70] sm:$0xff]
      %v186 = vld [vmem:[%s1 + $0x78] sm:$0xff]
      %v187 = vld [vmem:[%s1 + $0x80] sm:$0xff]
      %v188 = vld [vmem:[%s1 + $0x88] sm:$0xff]
      %v189 = vld [vmem:[%s1 + $0x90] sm:$0xff]
      %v190 = vld [vmem:[%s1 + $0x98] sm:$0xff]
      %v191 = vld [vmem:[%s1 + $0xa0] sm:$0xff]
      %v192 = vld [vmem:[%s1 + $0xa8] sm:$0xff]
      %v193 = vld [vmem:[%s1 + $0xb0] sm:$0xff]
      %v194 = vld [vmem:[%s1 + $0xb8] sm:$0xff]
      %v195 = vld [vmem:[%s1 + $0xc0] sm:$0xff]
      %v196 = vld [vmem:[%s1 + $0xc8] sm:$0xff]
      %v197 = vld [vmem:[%s1 + $0xd0] sm:$0xff]
      %v198 = vld [vmem:[%s1 + $0xd8] sm:$0xff]
      %v199 = vld [vmem:[%s1 + $0xe0] sm:$0xff]
      %v200 = vld [vmem:[%s1 + $0xe8] sm:$0xff]
      %v201 = vld [vmem:[%s1 + $0xf0] sm:$0xff]
      %v202 = vld [vmem:[%s1 + $0xf8] sm:$0xff]
      %v203 = vld [vmem:[%s1 + $0x100] sm:$0xff]
      %v204 = vld [vmem:[%s1 + $0x108] sm:$0xff]
      %v205 = vld [vmem:[%s1 + $0x110] sm:$0xff]
      %v206 = vld [vmem:[%s1 + $0x118] sm:$0xff]
      %v207 = vld [vmem:[%s1 + $0x120] sm:$0xff]
      %v208 = vld [vmem:[%s1 + $0x128] sm:$0xff]
      %v209 = vld [vmem:[%s1 + $0x130] sm:$0xff]
      %v210 = vld [vmem:[%s1 + $0x138] sm:$0xff]
      %v211 = vld [vmem:[%s2] sm:$0xff]
      %v212 = vld [vmem:[%s2 + $0x8] sm:$0xff]
      %v213 = vld [vmem:[%s2 + $0x10] sm:$0xff]
      %v214 = vld [vmem:[%s2 + $0x18] sm:$0xff]
      %v215 = vld [vmem:[%s2 + $0x20] sm:$0xff]
      %v216 = vld [vmem:[%s2 + $0x28] sm:$0xff]
      %v217 = vld [vmem:[%s2 + $0x30] sm:$0xff]
      %v218 = vld [vmem:[%s2 + $0x38] sm:$0xff]
      %v219 = vld [vmem:[%s165] sm:$0xff]
      %v220 = vld [vmem:[%s165 + $0x10] sm:$0xff]
      %v221 = vld [vmem:[%s165 + $0x20] sm:$0xff]
      %v222 = vld [vmem:[%s165 + $0x30] sm:$0xff]
      %v223 = vld [vmem:[%s165 + $0x40] sm:$0xff]
      %v224 = vld [vmem:[%s165 + $0x50] sm:$0xff]
      %v225 = vld [vmem:[%s165 + $0x60] sm:$0xff]
      %v226 = vld [vmem:[%s165 + $0x70] sm:$0xff]
      %v227 = vld [vmem:[%s165] sm:$0xff]
      %v228 = vld [vmem:[%s165 + $0x8] sm:$0xff]
      %v229 = vld [vmem:[%s165 + $0x10] sm:$0xff]
      %v230 = vld [vmem:[%s165 + $0x18] sm:$0xff]
      %v231 = vld [vmem:[%s165 + $0x20] sm:$0xff]
      %v232 = vld [vmem:[%s165 + $0x28] sm:$0xff]
      %v233 = vld [vmem:[%s165 + $0x30] sm:$0xff]
      %v234 = vld [vmem:[%s165 + $0x38] sm:$0xff]
      %v235 = vld [vmem:[%s165 + $0x40] sm:$0xff]
      %v236 = vld [vmem:[%s165 + $0x48] sm:$0xff]
      %v237 = vld [vmem:[%s165 + $0x50] sm:$0xff]
      %v238 = vld [vmem:[%s165 + $0x58] sm:$0xff]
      %v239 = vld [vmem:[%s165 + $0x60] sm:$0xff]
      %v240 = vld [vmem:[%s165 + $0x68] sm:$0xff]
      %v241 = vld [vmem:[%s165 + $0x70] sm:$0xff]
      %v242 = vld [vmem:[%s165 + $0x78] sm:$0xff]
      %259 = vrot.lane.b32.xlu0 %v227, 127
      %v260 = vpop.permute.xlu0 %259
      %261 = vrot.lane.b32.xlu0 %v228, 127
      %v262 = vpop.permute.xlu0 %261
      %263 = vrot.lane.b32.xlu0 %v229, 127
      %v264 = vpop.permute.xlu0 %263
      %265 = vrot.lane.b32.xlu0 %v230, 127
      %v266 = vpop.permute.xlu0 %265
      %267 = vrot.lane.b32.xlu0 %v231, 127
      %v268 = vpop.permute.xlu0 %267
      %269 = vrot.lane.b32.xlu0 %v232, 127
      %v270 = vpop.permute.xlu0 %269
      %271 = vrot.lane.b32.xlu0 %v233, 127
      %v272 = vpop.permute.xlu0 %271
      %273 = vrot.lane.b32.xlu0 %v234, 127
      %v274 = vpop.permute.xlu0 %273
      %275 = vrot.lane.b32.xlu0 %v235, 127
      %v276 = vpop.permute.xlu0 %275
      %277 = vrot.lane.b32.xlu0 %v236, 127
      %v278 = vpop.permute.xlu0 %277
      %279 = vrot.lane.b32.xlu0 %v237, 127
      %v280 = vpop.permute.xlu0 %279
      %281 = vrot.lane.b32.xlu0 %v238, 127
      %v282 = vpop.permute.xlu0 %281
      %283 = vrot.lane.b32.xlu0 %v239, 127
      %v284 = vpop.permute.xlu0 %283
      %285 = vrot.lane.b32.xlu0 %v240, 127
      %v286 = vpop.permute.xlu0 %285
      %287 = vrot.lane.b32.xlu0 %v241, 127
      %v288 = vpop.permute.xlu0 %287
      %289 = vrot.lane.b32.xlu0 %v242, 127
      %v290 = vpop.permute.xlu0 %289
      %vm291 = vcmask 1039360
      %v292 = vsel %vm291, %v260, %v262
      %v293 = vsel %vm291, %v264, %v266
      %v294 = vsel %vm291, %v268, %v270
      %v295 = vsel %vm291, %v272, %v274
      %v296 = vsel %vm291, %v276, %v278
      %v297 = vsel %vm291, %v280, %v282
      %v298 = vsel %vm291, %v284, %v286
      %v299 = vsel %vm291, %v288, %v290
      %308 = vrot.lane.b32.xlu0 %v227, 126
      %v309 = vpop.permute.xlu0 %308
      %310 = vrot.lane.b32.xlu0 %v228, 126
      %v311 = vpop.permute.xlu0 %310
      %312 = vrot.lane.b32.xlu0 %v229, 126
      %v313 = vpop.permute.xlu0 %312
      %314 = vrot.lane.b32.xlu0 %v230, 126
      %v315 = vpop.permute.xlu0 %314
      %316 = vrot.lane.b32.xlu0 %v231, 126
      %v317 = vpop.permute.xlu0 %316
      %318 = vrot.lane.b32.xlu0 %v232, 126
      %v319 = vpop.permute.xlu0 %318
      %320 = vrot.lane.b32.xlu0 %v233, 126
      %v321 = vpop.permute.xlu0 %320
      %322 = vrot.lane.b32.xlu0 %v234, 126
      %v323 = vpop.permute.xlu0 %322
      %324 = vrot.lane.b32.xlu0 %v235, 126
      %v325 = vpop.permute.xlu0 %324
      %326 = vrot.lane.b32.xlu0 %v236, 126
      %v327 = vpop.permute.xlu0 %326
      %328 = vrot.lane.b32.xlu0 %v237, 126
      %v329 = vpop.permute.xlu0 %328
      %330 = vrot.lane.b32.xlu0 %v238, 126
      %v331 = vpop.permute.xlu0 %330
      %332 = vrot.lane.b32.xlu0 %v239, 126
      %v333 = vpop.permute.xlu0 %332
      %334 = vrot.lane.b32.xlu0 %v240, 126
      %v335 = vpop.permute.xlu0 %334
      %336 = vrot.lane.b32.xlu0 %v241, 126
      %v337 = vpop.permute.xlu0 %336
      %338 = vrot.lane.b32.xlu0 %v242, 126
      %v339 = vpop.permute.xlu0 %338
      %vm340 = vcmask 1031168
      %v341 = vsel %vm340, %v309, %v311
      %v342 = vsel %vm340, %v313, %v315
      %v343 = vsel %vm340, %v317, %v319
      %v344 = vsel %vm340, %v321, %v323
      %v345 = vsel %vm340, %v325, %v327
      %v346 = vsel %vm340, %v329, %v331
      %v347 = vsel %vm340, %v333, %v335
      %v348 = vsel %vm340, %v337, %v339
      %357 = vrot.lane.b32.xlu0 %v227, 124
      %v358 = vpop.permute.xlu0 %357
      %359 = vrot.lane.b32.xlu0 %v228, 124
      %v360 = vpop.permute.xlu0 %359
      %361 = vrot.lane.b32.xlu0 %v229, 124
      %v362 = vpop.permute.xlu0 %361
      %363 = vrot.lane.b32.xlu0 %v230, 124
      %v364 = vpop.permute.xlu0 %363
      %365 = vrot.lane.b32.xlu0 %v231, 124
      %v366 = vpop.permute.xlu0 %365
      %367 = vrot.lane.b32.xlu0 %v232, 124
      %v368 = vpop.permute.xlu0 %367
      %369 = vrot.lane.b32.xlu0 %v233, 124
      %v370 = vpop.permute.xlu0 %369
      %371 = vrot.lane.b32.xlu0 %v234, 124
      %v372 = vpop.permute.xlu0 %371
      %373 = vrot.lane.b32.xlu0 %v235, 124
      %v374 = vpop.permute.xlu0 %373
      %375 = vrot.lane.b32.xlu0 %v236, 124
      %v376 = vpop.permute.xlu0 %375
      %377 = vrot.lane.b32.xlu0 %v237, 124
      %v378 = vpop.permute.xlu0 %377
      %379 = vrot.lane.b32.xlu0 %v238, 124
      %v380 = vpop.permute.xlu0 %379
      %381 = vrot.lane.b32.xlu0 %v239, 124
      %v382 = vpop.permute.xlu0 %381
      %383 = vrot.lane.b32.xlu0 %v240, 124
      %v384 = vpop.permute.xlu0 %383
      %385 = vrot.lane.b32.xlu0 %v241, 124
      %v386 = vpop.permute.xlu0 %385
      %387 = vrot.lane.b32.xlu0 %v242, 124
      %v388 = vpop.permute.xlu0 %387
      %vm389 = vcmask 1014784
      %v390 = vsel %vm389, %v358, %v360
      %v391 = vsel %vm389, %v362, %v364
      %v392 = vsel %vm389, %v366, %v368
      %v393 = vsel %vm389, %v370, %v372
      %v394 = vsel %vm389, %v374, %v376
      %v395 = vsel %vm389, %v378, %v380
      %v396 = vsel %vm389, %v382, %v384
      %v397 = vsel %vm389, %v386, %v388
      %406 = vrot.lane.b32.xlu0 %v227, 123
      %v407 = vpop.permute.xlu0 %406
      %408 = vrot.lane.b32.xlu0 %v228, 123
      %v409 = vpop.permute.xlu0 %408
      %410 = vrot.lane.b32.xlu0 %v229, 123
      %v411 = vpop.permute.xlu0 %410
      %412 = vrot.lane.b32.xlu0 %v230, 123
      %v413 = vpop.permute.xlu0 %412
      %414 = vrot.lane.b32.xlu0 %v231, 123
      %v415 = vpop.permute.xlu0 %414
      %416 = vrot.lane.b32.xlu0 %v232, 123
      %v417 = vpop.permute.xlu0 %416
      %418 = vrot.lane.b32.xlu0 %v233, 123
      %v419 = vpop.permute.xlu0 %418
      %420 = vrot.lane.b32.xlu0 %v234, 123
      %v421 = vpop.permute.xlu0 %420
      %422 = vrot.lane.b32.xlu0 %v235, 123
      %v423 = vpop.permute.xlu0 %422
      %424 = vrot.lane.b32.xlu0 %v236, 123
      %v425 = vpop.permute.xlu0 %424
      %426 = vrot.lane.b32.xlu0 %v237, 123
      %v427 = vpop.permute.xlu0 %426
      %428 = vrot.lane.b32.xlu0 %v238, 123
      %v429 = vpop.permute.xlu0 %428
      %430 = vrot.lane.b32.xlu0 %v239, 123
      %v431 = vpop.permute.xlu0 %430
      %432 = vrot.lane.b32.xlu0 %v240, 123
      %v433 = vpop.permute.xlu0 %432
      %434 = vrot.lane.b32.xlu0 %v241, 123
      %v435 = vpop.permute.xlu0 %434
      %436 = vrot.lane.b32.xlu0 %v242, 123
      %v437 = vpop.permute.xlu0 %436
      %vm438 = vcmask 1006592
      %v439 = vsel %vm438, %v407, %v409
      %v440 = vsel %vm438, %v411, %v413
      %v441 = vsel %vm438, %v415, %v417
      %v442 = vsel %vm438, %v419, %v421
      %v443 = vsel %vm438, %v423, %v425
      %v444 = vsel %vm438, %v427, %v429
      %v445 = vsel %vm438, %v431, %v433
      %v446 = vsel %vm438, %v435, %v437
      %455 = vrot.lane.b32.xlu0 %v227, 122
      %v456 = vpop.permute.xlu0 %455
      %457 = vrot.lane.b32.xlu0 %v228, 122
      %v458 = vpop.permute.xlu0 %457
      %459 = vrot.lane.b32.xlu0 %v229, 122
      %v460 = vpop.permute.xlu0 %459
      %461 = vrot.lane.b32.xlu0 %v230, 122
      %v462 = vpop.permute.xlu0 %461
      %463 = vrot.lane.b32.xlu0 %v231, 122
      %v464 = vpop.permute.xlu0 %463
      %465 = vrot.lane.b32.xlu0 %v232, 122
      %v466 = vpop.permute.xlu0 %465
      %467 = vrot.lane.b32.xlu0 %v233, 122
      %v468 = vpop.permute.xlu0 %467
      %469 = vrot.lane.b32.xlu0 %v234, 122
      %v470 = vpop.permute.xlu0 %469
      %471 = vrot.lane.b32.xlu0 %v235, 122
      %v472 = vpop.permute.xlu0 %471
      %473 = vrot.lane.b32.xlu0 %v236, 122
      %v474 = vpop.permute.xlu0 %473
      %475 = vrot.lane.b32.xlu0 %v237, 122
      %v476 = vpop.permute.xlu0 %475
      %477 = vrot.lane.b32.xlu0 %v238, 122
      %v478 = vpop.permute.xlu0 %477
      %479 = vrot.lane.b32.xlu0 %v239, 122
      %v480 = vpop.permute.xlu0 %479
      %481 = vrot.lane.b32.xlu0 %v240, 122
      %v482 = vpop.permute.xlu0 %481
      %483 = vrot.lane.b32.xlu0 %v241, 122
      %v484 = vpop.permute.xlu0 %483
      %485 = vrot.lane.b32.xlu0 %v242, 122
      %v486 = vpop.permute.xlu0 %485
      %vm487 = vcmask 998400
      %v488 = vsel %vm487, %v456, %v458
      %v489 = vsel %vm487, %v460, %v462
      %v490 = vsel %vm487, %v464, %v466
      %v491 = vsel %vm487, %v468, %v470
      %v492 = vsel %vm487, %v472, %v474
      %v493 = vsel %vm487, %v476, %v478
      %v494 = vsel %vm487, %v480, %v482
      %v495 = vsel %vm487, %v484, %v486
      %504 = vrot.lane.b32.xlu0 %v227, 120
      %v505 = vpop.permute.xlu0 %504
      %506 = vrot.lane.b32.xlu0 %v228, 120
      %v507 = vpop.permute.xlu0 %506
      %508 = vrot.lane.b32.xlu0 %v229, 120
      %v509 = vpop.permute.xlu0 %508
      %510 = vrot.lane.b32.xlu0 %v230, 120
      %v511 = vpop.permute.xlu0 %510
      %512 = vrot.lane.b32.xlu0 %v231, 120
      %v513 = vpop.permute.xlu0 %512
      %514 = vrot.lane.b32.xlu0 %v232, 120
      %v515 = vpop.permute.xlu0 %514
      %516 = vrot.lane.b32.xlu0 %v233, 120
      %v517 = vpop.permute.xlu0 %516
      %518 = vrot.lane.b32.xlu0 %v234, 120
      %v519 = vpop.permute.xlu0 %518
      %520 = vrot.lane.b32.xlu0 %v235, 120
      %v521 = vpop.permute.xlu0 %520
      %522 = vrot.lane.b32.xlu0 %v236, 120
      %v523 = vpop.permute.xlu0 %522
      %524 = vrot.lane.b32.xlu0 %v237, 120
      %v525 = vpop.permute.xlu0 %524
      %526 = vrot.lane.b32.xlu0 %v238, 120
      %v527 = vpop.permute.xlu0 %526
      %528 = vrot.lane.b32.xlu0 %v239, 120
      %v529 = vpop.permute.xlu0 %528
      %530 = vrot.lane.b32.xlu0 %v240, 120
      %v531 = vpop.permute.xlu0 %530
      %532 = vrot.lane.b32.xlu0 %v241, 120
      %v533 = vpop.permute.xlu0 %532
      %534 = vrot.lane.b32.xlu0 %v242, 120
      %v535 = vpop.permute.xlu0 %534
      %vm536 = vcmask 982016
      %v537 = vsel %vm536, %v505, %v507
      %v538 = vsel %vm536, %v509, %v511
      %v539 = vsel %vm536, %v513, %v515
      %v540 = vsel %vm536, %v517, %v519
      %v541 = vsel %vm536, %v521, %v523
      %v542 = vsel %vm536, %v525, %v527
      %v543 = vsel %vm536, %v529, %v531
      %v544 = vsel %vm536, %v533, %v535
      %553 = vrot.lane.b32.xlu0 %v227, 119
      %v554 = vpop.permute.xlu0 %553
      %555 = vrot.lane.b32.xlu0 %v228, 119
      %v556 = vpop.permute.xlu0 %555
      %557 = vrot.lane.b32.xlu0 %v229, 119
      %v558 = vpop.permute.xlu0 %557
      %559 = vrot.lane.b32.xlu0 %v230, 119
      %v560 = vpop.permute.xlu0 %559
      %561 = vrot.lane.b32.xlu0 %v231, 119
      %v562 = vpop.permute.xlu0 %561
      %563 = vrot.lane.b32.xlu0 %v232, 119
      %v564 = vpop.permute.xlu0 %563
      %565 = vrot.lane.b32.xlu0 %v233, 119
      %v566 = vpop.permute.xlu0 %565
      %567 = vrot.lane.b32.xlu0 %v234, 119
      %v568 = vpop.permute.xlu0 %567
      %569 = vrot.lane.b32.xlu0 %v235, 119
      %v570 = vpop.permute.xlu0 %569
      %571 = vrot.lane.b32.xlu0 %v236, 119
      %v572 = vpop.permute.xlu0 %571
      %573 = vrot.lane.b32.xlu0 %v237, 119
      %v574 = vpop.permute.xlu0 %573
      %575 = vrot.lane.b32.xlu0 %v238, 119
      %v576 = vpop.permute.xlu0 %575
      %577 = vrot.lane.b32.xlu0 %v239, 119
      %v578 = vpop.permute.xlu0 %577
      %579 = vrot.lane.b32.xlu0 %v240, 119
      %v580 = vpop.permute.xlu0 %579
      %581 = vrot.lane.b32.xlu0 %v241, 119
      %v582 = vpop.permute.xlu0 %581
      %583 = vrot.lane.b32.xlu0 %v242, 119
      %v584 = vpop.permute.xlu0 %583
      %vm585 = vcmask 973824
      %v586 = vsel %vm585, %v554, %v556
      %v587 = vsel %vm585, %v558, %v560
      %v588 = vsel %vm585, %v562, %v564
      %v589 = vsel %vm585, %v566, %v568
      %v590 = vsel %vm585, %v570, %v572
      %v591 = vsel %vm585, %v574, %v576
      %v592 = vsel %vm585, %v578, %v580
      %v593 = vsel %vm585, %v582, %v584
      %602 = vrot.lane.b32.xlu0 %v227, 118
      %v603 = vpop.permute.xlu0 %602
      %604 = vrot.lane.b32.xlu0 %v228, 118
      %v605 = vpop.permute.xlu0 %604
      %606 = vrot.lane.b32.xlu0 %v229, 118
      %v607 = vpop.permute.xlu0 %606
      %608 = vrot.lane.b32.xlu0 %v230, 118
      %v609 = vpop.permute.xlu0 %608
      %610 = vrot.lane.b32.xlu0 %v231, 118
      %v611 = vpop.permute.xlu0 %610
      %612 = vrot.lane.b32.xlu0 %v232, 118
      %v613 = vpop.permute.xlu0 %612
      %614 = vrot.lane.b32.xlu0 %v233, 118
      %v615 = vpop.permute.xlu0 %614
      %616 = vrot.lane.b32.xlu0 %v234, 118
      %v617 = vpop.permute.xlu0 %616
      %618 = vrot.lane.b32.xlu0 %v235, 118
      %v619 = vpop.permute.xlu0 %618
      %620 = vrot.lane.b32.xlu0 %v236, 118
      %v621 = vpop.permute.xlu0 %620
      %622 = vrot.lane.b32.xlu0 %v237, 118
      %v623 = vpop.permute.xlu0 %622
      %624 = vrot.lane.b32.xlu0 %v238, 118
      %v625 = vpop.permute.xlu0 %624
      %626 = vrot.lane.b32.xlu0 %v239, 118
      %v627 = vpop.permute.xlu0 %626
      %628 = vrot.lane.b32.xlu0 %v240, 118
      %v629 = vpop.permute.xlu0 %628
      %630 = vrot.lane.b32.xlu0 %v241, 118
      %v631 = vpop.permute.xlu0 %630
      %632 = vrot.lane.b32.xlu0 %v242, 118
      %v633 = vpop.permute.xlu0 %632
      %vm634 = vcmask 965632
      %v635 = vsel %vm634, %v603, %v605
      %v636 = vsel %vm634, %v607, %v609
      %v637 = vsel %vm634, %v611, %v613
      %v638 = vsel %vm634, %v615, %v617
      %v639 = vsel %vm634, %v619, %v621
      %v640 = vsel %vm634, %v623, %v625
      %v641 = vsel %vm634, %v627, %v629
      %v642 = vsel %vm634, %v631, %v633
      %652 = vset.pattern.permute.xlu0 0
      %653 = vperm.xlu0 %652, %v211
      %v654 = vpop.permute.xlu0 %653
      %657 = vset.pattern.permute.xlu0 0
      %658 = vperm.xlu0 %657, %v212
      %v659 = vpop.permute.xlu0 %658
      %662 = vset.pattern.permute.xlu0 0
      %663 = vperm.xlu0 %662, %v213
      %v664 = vpop.permute.xlu0 %663
      %667 = vset.pattern.permute.xlu0 0
      %668 = vperm.xlu0 %667, %v214
      %v669 = vpop.permute.xlu0 %668
      %672 = vset.pattern.permute.xlu0 0
      %673 = vperm.xlu0 %672, %v215
      %v674 = vpop.permute.xlu0 %673
      %677 = vset.pattern.permute.xlu0 0
      %678 = vperm.xlu0 %677, %v216
      %v679 = vpop.permute.xlu0 %678
      %682 = vset.pattern.permute.xlu0 0
      %683 = vperm.xlu0 %682, %v217
      %v684 = vpop.permute.xlu0 %683
      %687 = vset.pattern.permute.xlu0 0
      %688 = vperm.xlu0 %687, %v218
      %v689 = vpop.permute.xlu0 %688
      %vm691 = vcmask 523264
      %v693 = vsel %vm691, %v175, 0
      %v696 = vsel %vm691, %v180, 0
      %v699 = vsel %vm691, %v185, 0
      %v702 = vsel %vm691, %v190, 0
      %v705 = vsel %vm691, %v195, 0
      %v708 = vsel %vm691, %v200, 0
      %v711 = vsel %vm691, %v205, 0
      %v714 = vsel %vm691, %v210, 0
      %716 = vmatpush.msra.mxu0 %v299
      %717 = vmatpush.msra.mxu0 %v298
      %718 = vmatpush.msra.mxu0 %v297
      %719 = vmatpush.msra.mxu0 %v296
      %720 = vmatpush.msra.mxu0 %v295
      %721 = vmatpush.msra.mxu0 %v294
      %722 = vmatpush.msra.mxu0 %v293
      %723 = vmatpush.msra.mxu0 %v292
      %724 = vmatpush.msra.mxu0 %v226
      %725 = vmatpush.msra.mxu0 %v225
      %726 = vmatpush.msra.mxu0 %v224
      %727 = vmatpush.msra.mxu0 %v223
      %728 = vmatpush.msra.mxu0 %v222
      %729 = vmatpush.msra.mxu0 %v221
      %730 = vmatpush.msra.mxu0 %v220
      %731 = vmatpush.msra.mxu0 %v219
      %732 = vmatmul.f32.gmra.mxu0 %v171
      %v733 = vpop.f32.mrf.mxu0
      %v734 = vadd.f32 %v654, %v733
      %735 = vmatmul.f32.gmra.mxu0 %v176
      %v736 = vpop.f32.mrf.mxu0
      %v737 = vadd.f32 %v659, %v736
      %738 = vmatmul.f32.gmra.mxu0 %v181
      %v739 = vpop.f32.mrf.mxu0
      %v740 = vadd.f32 %v664, %v739
      %741 = vmatmul.f32.gmra.mxu0 %v186
      %v742 = vpop.f32.mrf.mxu0
      %v743 = vadd.f32 %v669, %v742
      %744 = vmatmul.f32.gmra.mxu0 %v191
      %v745 = vpop.f32.mrf.mxu0
      %v746 = vadd.f32 %v674, %v745
      %747 = vmatmul.f32.gmra.mxu0 %v196
      %v748 = vpop.f32.mrf.mxu0
      %v749 = vadd.f32 %v679, %v748
      %750 = vmatmul.f32.gmra.mxu0 %v201
      %v751 = vpop.f32.mrf.mxu0
      %v752 = vadd.f32 %v684, %v751
      %753 = vmatmul.f32.gmra.mxu0 %v206
      %v754 = vpop.f32.mrf.mxu0
      %v755 = vadd.f32 %v689, %v754
      %756 = vdwg.mxu0
      %757 = vmatpush.msra.mxu0 %v397
      %758 = vmatpush.msra.mxu0 %v396
      %759 = vmatpush.msra.mxu0 %v395
      %760 = vmatpush.msra.mxu0 %v394
      %761 = vmatpush.msra.mxu0 %v393
      %762 = vmatpush.msra.mxu0 %v392
      %763 = vmatpush.msra.mxu0 %v391
      %764 = vmatpush.msra.mxu0 %v390
      %765 = vmatpush.msra.mxu0 %v348
      %766 = vmatpush.msra.mxu0 %v347
      %767 = vmatpush.msra.mxu0 %v346
      %768 = vmatpush.msra.mxu0 %v345
      %769 = vmatpush.msra.mxu0 %v344
      %770 = vmatpush.msra.mxu0 %v343
      %771 = vmatpush.msra.mxu0 %v342
      %772 = vmatpush.msra.mxu0 %v341
      %773 = vmatmul.f32.gmra.mxu0 %v172
      %v774 = vpop.f32.mrf.mxu0
      %v775 = vadd.f32 %v734, %v774
      %776 = vmatmul.f32.gmra.mxu0 %v177
      %v777 = vpop.f32.mrf.mxu0
      %v778 = vadd.f32 %v737, %v777
      %779 = vmatmul.f32.gmra.mxu0 %v182
      %v780 = vpop.f32.mrf.mxu0
      %v781 = vadd.f32 %v740, %v780
      %782 = vmatmul.f32.gmra.mxu0 %v187
      %v783 = vpop.f32.mrf.mxu0
      %v784 = vadd.f32 %v743, %v783
      %785 = vmatmul.f32.gmra.mxu0 %v192
      %v786 = vpop.f32.mrf.mxu0
      %v787 = vadd.f32 %v746, %v786
      %788 = vmatmul.f32.gmra.mxu0 %v197
      %v789 = vpop.f32.mrf.mxu0
      %v790 = vadd.f32 %v749, %v789
      %791 = vmatmul.f32.gmra.mxu0 %v202
      %v792 = vpop.f32.mrf.mxu0
      %v793 = vadd.f32 %v752, %v792
      %794 = vmatmul.f32.gmra.mxu0 %v207
      %v795 = vpop.f32.mrf.mxu0
      %v796 = vadd.f32 %v755, %v795
      %797 = vdwg.mxu0
      %798 = vmatpush.msra.mxu0 %v495
      %799 = vmatpush.msra.mxu0 %v494
      %800 = vmatpush.msra.mxu0 %v493
      %801 = vmatpush.msra.mxu0 %v492
      %802 = vmatpush.msra.mxu0 %v491
      %803 = vmatpush.msra.mxu0 %v490
      %804 = vmatpush.msra.mxu0 %v489
      %805 = vmatpush.msra.mxu0 %v488
      %806 = vmatpush.msra.mxu0 %v446
      %807 = vmatpush.msra.mxu0 %v445
      %808 = vmatpush.msra.mxu0 %v444
      %809 = vmatpush.msra.mxu0 %v443
      %810 = vmatpush.msra.mxu0 %v442
      %811 = vmatpush.msra.mxu0 %v441
      %812 = vmatpush.msra.mxu0 %v440
      %813 = vmatpush.msra.mxu0 %v439
      %814 = vmatmul.f32.gmra.mxu0 %v173
      %v815 = vpop.f32.mrf.mxu0
      %v816 = vadd.f32 %v775, %v815
      %817 = vmatmul.f32.gmra.mxu0 %v178
      %v818 = vpop.f32.mrf.mxu0
      %v819 = vadd.f32 %v778, %v818
      %820 = vmatmul.f32.gmra.mxu0 %v183
      %v821 = vpop.f32.mrf.mxu0
      %v822 = vadd.f32 %v781, %v821
      %823 = vmatmul.f32.gmra.mxu0 %v188
      %v824 = vpop.f32.mrf.mxu0
      %v825 = vadd.f32 %v784, %v824
      %826 = vmatmul.f32.gmra.mxu0 %v193
      %v827 = vpop.f32.mrf.mxu0
      %v828 = vadd.f32 %v787, %v827
      %829 = vmatmul.f32.gmra.mxu0 %v198
      %v830 = vpop.f32.mrf.mxu0
      %v831 = vadd.f32 %v790, %v830
      %832 = vmatmul.f32.gmra.mxu0 %v203
      %v833 = vpop.f32.mrf.mxu0
      %v834 = vadd.f32 %v793, %v833
      %835 = vmatmul.f32.gmra.mxu0 %v208
      %v836 = vpop.f32.mrf.mxu0
      %v837 = vadd.f32 %v796, %v836
      %838 = vdwg.mxu0
      %839 = vmatpush.msra.mxu0 %v593
      %840 = vmatpush.msra.mxu0 %v592
      %841 = vmatpush.msra.mxu0 %v591
      %842 = vmatpush.msra.mxu0 %v590
      %843 = vmatpush.msra.mxu0 %v589
      %844 = vmatpush.msra.mxu0 %v588
      %845 = vmatpush.msra.mxu0 %v587
      %846 = vmatpush.msra.mxu0 %v586
      %847 = vmatpush.msra.mxu0 %v544
      %848 = vmatpush.msra.mxu0 %v543
      %849 = vmatpush.msra.mxu0 %v542
      %850 = vmatpush.msra.mxu0 %v541
      %851 = vmatpush.msra.mxu0 %v540
      %852 = vmatpush.msra.mxu0 %v539
      %853 = vmatpush.msra.mxu0 %v538
      %854 = vmatpush.msra.mxu0 %v537
      %855 = vmatmul.f32.gmra.mxu0 %v174
      %v856 = vpop.f32.mrf.mxu0
      %v857 = vadd.f32 %v816, %v856
      %858 = vmatmul.f32.gmra.mxu0 %v179
      %v859 = vpop.f32.mrf.mxu0
      %v860 = vadd.f32 %v819, %v859
      %861 = vmatmul.f32.gmra.mxu0 %v184
      %v862 = vpop.f32.mrf.mxu0
      %v863 = vadd.f32 %v822, %v862
      %864 = vmatmul.f32.gmra.mxu0 %v189
      %v865 = vpop.f32.mrf.mxu0
      %v866 = vadd.f32 %v825, %v865
      %867 = vmatmul.f32.gmra.mxu0 %v194
      %v868 = vpop.f32.mrf.mxu0
      %v869 = vadd.f32 %v828, %v868
      %870 = vmatmul.f32.gmra.mxu0 %v199
      %v871 = vpop.f32.mrf.mxu0
      %v872 = vadd.f32 %v831, %v871
      %873 = vmatmul.f32.gmra.mxu0 %v204
      %v874 = vpop.f32.mrf.mxu0
      %v875 = vadd.f32 %v834, %v874
      %876 = vmatmul.f32.gmra.mxu0 %v209
      %v877 = vpop.f32.mrf.mxu0
      %v878 = vadd.f32 %v837, %v877
      %879 = vdwg.mxu0
      %880 = vmatpush.msra.mxu0 0.0
      %881 = vmatpush.msra.mxu0 0.0
      %882 = vmatpush.msra.mxu0 0.0
      %883 = vmatpush.msra.mxu0 0.0
      %884 = vmatpush.msra.mxu0 0.0
      %885 = vmatpush.msra.mxu0 0.0
      %886 = vmatpush.msra.mxu0 0.0
      %887 = vmatpush.msra.mxu0 0.0
      %888 = vmatpush.msra.mxu0 %v642
      %889 = vmatpush.msra.mxu0 %v641
      %890 = vmatpush.msra.mxu0 %v640
      %891 = vmatpush.msra.mxu0 %v639
      %892 = vmatpush.msra.mxu0 %v638
      %893 = vmatpush.msra.mxu0 %v637
      %894 = vmatpush.msra.mxu0 %v636
      %895 = vmatpush.msra.mxu0 %v635
      %896 = vmatmul.f32.gmra.mxu0 %v693
      %v897 = vpop.f32.mrf.mxu0
      %v898 = vadd.f32 %v857, %v897
      %899 = vmatmul.f32.gmra.mxu0 %v696
      %v900 = vpop.f32.mrf.mxu0
      %v901 = vadd.f32 %v860, %v900
      %902 = vmatmul.f32.gmra.mxu0 %v699
      %v903 = vpop.f32.mrf.mxu0
      %v904 = vadd.f32 %v863, %v903
      %905 = vmatmul.f32.gmra.mxu0 %v702
      %v906 = vpop.f32.mrf.mxu0
      %v907 = vadd.f32 %v866, %v906
      %908 = vmatmul.f32.gmra.mxu0 %v705
      %v909 = vpop.f32.mrf.mxu0
      %v910 = vadd.f32 %v869, %v909
      %911 = vmatmul.f32.gmra.mxu0 %v708
      %v912 = vpop.f32.mrf.mxu0
      %v913 = vadd.f32 %v872, %v912
      %914 = vmatmul.f32.gmra.mxu0 %v711
      %v915 = vpop.f32.mrf.mxu0
      %v916 = vadd.f32 %v875, %v915
      %917 = vmatmul.f32.gmra.mxu0 %v714
      %v918 = vpop.f32.mrf.mxu0
      %v919 = vadd.f32 %v878, %v918
      %920 = vdwg.mxu0
      %v921 = vmax.f32 %v898, 0.0
      %v922 = vmax.f32 %v901, 0.0
      %v923 = vmax.f32 %v904, 0.0
      %v924 = vmax.f32 %v907, 0.0
      %v925 = vmax.f32 %v910, 0.0
      %v926 = vmax.f32 %v913, 0.0
      %v927 = vmax.f32 %v916, 0.0
      %v928 = vmax.f32 %v919, 0.0
      %929 = vst [vmem:[%s170] sm:$0xff] %v921
      %930 = vst [vmem:[%s170 + $0x8] sm:$0xff] %v922
      %931 = vst [vmem:[%s170 + $0x10] sm:$0xff] %v923
      %932 = vst [vmem:[%s170 + $0x18] sm:$0xff] %v924
      %933 = vst [vmem:[%s170 + $0x20] sm:$0xff] %v925
      %934 = vst [vmem:[%s170 + $0x28] sm:$0xff] %v926
      %935 = vst [vmem:[%s170 + $0x30] sm:$0xff] %v927
      %936 = vst [vmem:[%s170 + $0x38] sm:$0xff] %v928
      %p937 = scmp.lt.s32.totalorder %s14, 1
      %s938 = scalar_select %p937, %s14, 1
      %s939 = smul.addr %s938, 8
      %s940 = smul.addr %s939, 8
      %s941 = scalar_lea.vmem %s3, %s940
      // Predicated region
      $region33: #{barlow_twins_encoder_forward.8} parent=31 // pred_check
        %p942 = pneg %p100
      $region34: #{barlow_twins_encoder_forward.8} parent=31 // pred_check_branch
        %944 = sbr.rel (%p942) target = $region36
      $region35: #{barlow_twins_encoder_forward.8} parent=31 // pred_region
        _
      $region36: #{barlow_twins_encoder_forward.8} parent=31 // pred_fallthru
        _
    $region32: #{barlow_twins_encoder_forward.8} parent=5 // pred_fallthru
      _
    %p945 = scmp.le.s32.totalorder 2, %s9
    // Predicated region
    $region37: #{barlow_twins_encoder_forward.8} parent=5 // pred_check
      %p946 = pneg %p945
    $region38: #{barlow_twins_encoder_forward.8} parent=5 // pred_check_branch
      %948 = sbr.rel (%p946) target = $region40
    $region39: #{barlow_twins_encoder_forward.8} parent=5 // pred_region
      %s949 = ssub.s32 %s9, 2
      // Predicated region
      $region41: #{barlow_twins_encoder_forward.8} parent=39 // pred_check
        %p950 = pneg %p106
      $region42: #{barlow_twins_encoder_forward.8} parent=39 // pred_check_branch
        %952 = sbr.rel (%p950) target = $region44
      $region43: #{barlow_twins_encoder_forward.8} parent=39 // pred_region
        %p953 = scmp.lt.s32.totalorder %s15, 1
        %s954 = scalar_select %p953, %s15, 1
        %s955 = smul.addr %s954, 8
        %s956 = smul.addr %s955, 8
        %s957 = scalar_lea.vmem %s3, %s956
      $region44: #{barlow_twins_encoder_forward.8} parent=39 // pred_fallthru
        _
    $region40: #{barlow_twins_encoder_forward.8} parent=5 // pred_fallthru
      _
  $region6: #{barlow_twins_encoder_forward.8} parent=0 // loop_footer
    %s13 = sadd.s32 1, %s9
  $region7: #{barlow_twins_encoder_forward.8} parent=0 // loop_footer_branch
    %8 = sbr.rel target = $region3
  $region8: #{barlow_twins_encoder_forward.8} parent=0 // loop_exit
    _

// kernel: barlow_twins_encoder_forward.9
$region0: #{barlow_twins_encoder_forward.9}
  #allocation0 [shape = 'u32[]', space=smem, size = 0x4, offset = 0x4, fixed_abs, tag = 'smem constant byte address 0x4 - core index']
  #allocation1 [shape = 'u32[72,128]{1,0:T(1,128)}', space=vmem, size = 0x9000, scoped, tag = 'internal scratch']
  %s0 = inlined_call_operand.vmem [shape: f32[2,256], index: 0, kind: input, shape index: {}]
  %s1 = inlined_call_operand.vmem [shape: f32[256,128], index: 1, kind: input, shape index: {}]
  %s2 = inlined_call_operand.vmem [shape: f32[1,128], index: 2, kind: input, shape index: {}]
  %s3 = inlined_call_operand.hbm [shape: f32[2,128], index: 3, kind: output, shape index: {}]
  %s4 = sld [smem:[#allocation0]]
  $region22: #{barlow_twins_encoder_forward.9} parent=0
    _
  %s6 = ssub.s32 1, %s4
  %s7 = scalar_select 0, %s6, %s4
  $region1: #{barlow_twins_encoder_forward.9} parent=0
    #allocation2 [shape = 'u8[1024]{0}', space=vmem, size = 0x400, scoped, tag = 'output window, operand 0, single buffered']
    #allocation3 [shape = 's32[1]{0}', space=sflag, size = 0x4, scoped, tag = 'scoped memory for barlow_twins_encoder_forward.9']
    %8 = vsyncpa [#allocation3], 0
    // Predicated region
    $region2: #{barlow_twins_encoder_forward.9} parent=1 // pred_check
      _
    $region3: #{barlow_twins_encoder_forward.9} parent=1 // pred_check_branch
      %10 = sbr.rel (0) target = $region5
    $region4: #{barlow_twins_encoder_forward.9} parent=1 // pred_region
      _
    $region5: #{barlow_twins_encoder_forward.9} parent=1 // pred_fallthru
      _
    // Predicated region
    $region6: #{barlow_twins_encoder_forward.9} parent=1 // pred_check
      _
    $region7: #{barlow_twins_encoder_forward.9} parent=1 // pred_check_branch
      %12 = sbr.rel (0) target = $region9
    $region8: #{barlow_twins_encoder_forward.9} parent=1 // pred_region
      _
    $region9: #{barlow_twins_encoder_forward.9} parent=1 // pred_fallthru
      _
    // Predicated region
    $region10: #{barlow_twins_encoder_forward.9} parent=1 // pred_check
      _
    $region11: #{barlow_twins_encoder_forward.9} parent=1 // pred_check_branch
      %14 = sbr.rel (0) target = $region13
    $region12: #{barlow_twins_encoder_forward.9} parent=1 // pred_region
      _
    $region13: #{barlow_twins_encoder_forward.9} parent=1 // pred_fallthru
      _
    %v15 = vld [vmem:[%s0] sm:$0xf]
    %v16 = vld [vmem:[%s1] sm:$0xff]
    %v17 = vld [vmem:[%s1 + $0x8] sm:$0xff]
    %v18 = vld [vmem:[%s1 + $0x10] sm:$0xff]
    %v19 = vld [vmem:[%s1 + $0x18] sm:$0xff]
    %v20 = vld [vmem:[%s1 + $0x20] sm:$0xff]
    %v21 = vld [vmem:[%s1 + $0x28] sm:$0xff]
    %v22 = vld [vmem:[%s1 + $0x30] sm:$0xff]
    %v23 = vld [vmem:[%s1 + $0x38] sm:$0xff]
    %v24 = vld [vmem:[%s1 + $0x40] sm:$0xff]
    %v25 = vld [vmem:[%s1 + $0x48] sm:$0xff]
    %v26 = vld [vmem:[%s1 + $0x50] sm:$0xff]
    %v27 = vld [vmem:[%s1 + $0x58] sm:$0xff]
    %v28 = vld [vmem:[%s1 + $0x60] sm:$0xff]
    %v29 = vld [vmem:[%s1 + $0x68] sm:$0xff]
    %v30 = vld [vmem:[%s1 + $0x70] sm:$0xff]
    %v31 = vld [vmem:[%s1 + $0x78] sm:$0xff]
    %v32 = vld [vmem:[%s1 + $0x80] sm:$0xff]
    %v33 = vld [vmem:[%s1 + $0x88] sm:$0xff]
    %v34 = vld [vmem:[%s1 + $0x90] sm:$0xff]
    %v35 = vld [vmem:[%s1 + $0x98] sm:$0xff]
    %v36 = vld [vmem:[%s1 + $0xa0] sm:$0xff]
    %v37 = vld [vmem:[%s1 + $0xa8] sm:$0xff]
    %v38 = vld [vmem:[%s1 + $0xb0] sm:$0xff]
    %v39 = vld [vmem:[%s1 + $0xb8] sm:$0xff]
    %v40 = vld [vmem:[%s1 + $0xc0] sm:$0xff]
    %v41 = vld [vmem:[%s1 + $0xc8] sm:$0xff]
    %v42 = vld [vmem:[%s1 + $0xd0] sm:$0xff]
    %v43 = vld [vmem:[%s1 + $0xd8] sm:$0xff]
    %v44 = vld [vmem:[%s1 + $0xe0] sm:$0xff]
    %v45 = vld [vmem:[%s1 + $0xe8] sm:$0xff]
    %v46 = vld [vmem:[%s1 + $0xf0] sm:$0xff]
    %v47 = vld [vmem:[%s1 + $0xf8] sm:$0xff]
    %v48 = vld [vmem:[%s2] sm:$0x1]
    %v50 = vperm.slane %v48, 0
    %53 = vst [vmem:[#allocation1] ss:$4 sm:$0xff] %v15
    %v54 = vld.sshfl [vmem:[#allocation1] sm:$0xff pattern:$0x73625140]
    %v55 = vld.sshfl [vmem:[#allocation1 + $0x8] sm:$0xff pattern:$0x73625140]
    %58 = vmatpush.msra.mxu0 %v31
    %59 = vmatpush.msra.mxu0 %v30
    %60 = vmatpush.msra.mxu0 %v29
    %61 = vmatpush.msra.mxu0 %v28
    %62 = vmatpush.msra.mxu0 %v27
    %63 = vmatpush.msra.mxu0 %v26
    %64 = vmatpush.msra.mxu0 %v25
    %65 = vmatpush.msra.mxu0 %v24
    %66 = vmatpush.msra.mxu0 %v23
    %67 = vmatpush.msra.mxu0 %v22
    %68 = vmatpush.msra.mxu0 %v21
    %69 = vmatpush.msra.mxu0 %v20
    %70 = vmatpush.msra.mxu0 %v19
    %71 = vmatpush.msra.mxu0 %v18
    %72 = vmatpush.msra.mxu0 %v17
    %73 = vmatpush.msra.mxu0 %v16
    %74 = vmatmul.f32.gmra.mxu0 %v54
    %v75 = vpop.f32.mrf.mxu0
    %v76 = vadd.f32 %v50, %v75
    %77 = vdwg.mxu0
    %78 = vmatpush.msra.mxu0 %v47
    %79 = vmatpush.msra.mxu0 %v46
    %80 = vmatpush.msra.mxu0 %v45
    %81 = vmatpush.msra.mxu0 %v44
    %82 = vmatpush.msra.mxu0 %v43
    %83 = vmatpush.msra.mxu0 %v42
    %84 = vmatpush.msra.mxu0 %v41
    %85 = vmatpush.msra.mxu0 %v40
    %86 = vmatpush.msra.mxu0 %v39
    %87 = vmatpush.msra.mxu0 %v38
    %88 = vmatpush.msra.mxu0 %v37
    %89 = vmatpush.msra.mxu0 %v36
    %90 = vmatpush.msra.mxu0 %v35
    %91 = vmatpush.msra.mxu0 %v34
    %92 = vmatpush.msra.mxu0 %v33
    %93 = vmatpush.msra.mxu0 %v32
    %94 = vmatmul.f32.gmra.mxu0 %v55
    %v95 = vpop.f32.mrf.mxu0
    %v96 = vadd.f32 %v76, %v95
    %97 = vdwg.mxu0
    %98 = vst [vmem:[#allocation2] sm:$0x3] %v96
    // Predicated region
    $region14: #{barlow_twins_encoder_forward.9} parent=1 // pred_check
      _
    $region15: #{barlow_twins_encoder_forward.9} parent=1 // pred_check_branch
      %100 = sbr.rel (0) target = $region17
    $region16: #{barlow_twins_encoder_forward.9} parent=1 // pred_region
      %102 = vsyncadd [#allocation3], 0
      %s104 = sshll.u32 [#allocation2], 4
      %s105 = int_to_ptr.vmem [resolvable:$true] %s104
      %s106 = sshll.u32 %s3, 4
      %s107 = int_to_ptr.hbm [resolvable:$true] %s106
      %109 = dma.vmem_to_hbm [thread:$0]  %s105, 32, %s107, [#allocation3]
    $region17: #{barlow_twins_encoder_forward.9} parent=1 // pred_fallthru
      _
    // Predicated region
    $region18: #{barlow_twins_encoder_forward.9} parent=1 // pred_check
      _
    $region19: #{barlow_twins_encoder_forward.9} parent=1 // pred_check_branch
      %111 = sbr.rel (0) target = $region21
    $region20: #{barlow_twins_encoder_forward.9} parent=1 // pred_region
      %113 = dma.done [#allocation3], 32
    $region21: #{barlow_twins_encoder_forward.9} parent=1 // pred_fallthru
      _
    %114 = vsyncpa [#allocation3], 1

</llo_original>
